<compile_context>
chip_gen: v7x
topology: tpu7x:2x2x1
jax: 0.10.0
libtpu: 0.0.40
codegen_flags: <defaults>
</compile_context>

<pallas_src>
import functools

import jax
import jax.numpy as jnp
import numpy as np
from jax import lax
from jax.experimental import pallas as pl
from jax.experimental.pallas import tpu as pltpu

NEG_INF = -1e30
NEG_SLOPE = 0.2  # GATConv default leaky_relu slope


def _gat_encoder_kernel(x_ref, mask_ref, w_ref, b_ref, hm_ref, o_ref,
                        *, n_layers, n_heads, d_head, n_nodes, n_graphs):
    d = n_heads * d_head
    n = n_nodes

    h = x_ref[...].astype(jnp.float32)     # (B*N, D), resident in vregs/VMEM across layers
    mask_add = mask_ref[...]               # (B, N, N) additive mask, [b, c, r]: 0 / -1e30
    head_mask = hm_ref[...]                # (H, 1, D)  1.0 on head h's lane block

    for layer in range(n_layers):
        w_ext = w_ref[layer]               # (D, D+2H): [ W | W@S_src | W@S_dst ]
        bias = b_ref[layer]                # (1, D)

        # One MXU pass for the whole batch: features + per-head src/dst attention scalars.
        proj = jnp.dot(h, w_ext, preferred_element_type=jnp.float32)   # (B*N, D+2H)
        feat = proj[:, :d]                                             # (B*N, D)
        a_t = proj[:, d:].T                                            # (2H, B*N) node idx on lanes

        outs = []
        for g in range(n_graphs):          # static unroll, B is small
            rows = slice(g * n, (g + 1) * n)
            feat_g = feat[rows, :]                                     # (N, D)
            feat_h = head_mask * feat_g                                # (H, N, D) per-head lane-masked

            a_src_g = a_t[:n_heads, g * n:(g + 1) * n]                 # (H, N) varies over src r
            a_dst_g = a_t[n_heads:, g * n:(g + 1) * n]                 # (H, N) varies over dst c

            # logits[h, c, r] = a_dst[c, h] + a_src[r, h]
            logits = (lax.broadcast_in_dim(a_dst_g, (n_heads, n, n), (0, 1)) +
                      lax.broadcast_in_dim(a_src_g, (n_heads, n, n), (0, 2)))
            logits = jnp.where(logits > 0, logits, NEG_SLOPE * logits)  # leaky_relu(0.2)
            logits = logits + mask_add[g]                               # off-edge -> -1e30

            # softmax over source nodes r (lane axis); self-loops keep denom > 0
            m = jnp.max(logits, axis=-1, keepdims=True)                 # (H, N, 1)
            e = jnp.exp(logits - m)                                     # masked entries underflow to 0
            denom = jnp.sum(e, axis=-1, keepdims=True)                  # (H, N, 1)
            attn = e * pl.reciprocal(denom, approx=True)

            # TODO(synk): attention-weight dropout (training mode) intentionally omitted (eval semantics).

            # out[c, l] = sum_r attn[head(l), c, r] * feat[r, l]
            agg = jnp.einsum('hcr,hrd->hcd', attn, feat_h,
                             preferred_element_type=jnp.float32)        # (H, N, D)
            outs.append(jnp.sum(agg, axis=0))                           # (N, D) heads on disjoint lanes

        out = outs[0] if n_graphs == 1 else jnp.concatenate(outs, axis=0)  # (B*N, D)
        h = jnp.maximum(out + bias, 0.0)                                   # bias + F.relu

    o_ref[...] = h.astype(o_ref.dtype)                                     # lane-dense (B*N, D) store


def expand_att(att):
    """(H, dk) attention vector -> (H*dk, H) block-diagonal matrix so that
    (x @ W) @ expand_att(att) == ((x @ W).reshape(N, H, dk) * att).sum(-1)."""
    n_heads, d_head = att.shape
    m = jnp.zeros((n_heads * d_head, n_heads), att.dtype)
    for h in range(n_heads):
        m = m.at[h * d_head:(h + 1) * d_head, h].set(att[h])
    return m


def gat_encoder(n_feat, adj, params, *, n_heads, d_head):
    """GATEncoder.forward: n_blocks of (GATConv -> ReLU), one fused Pallas call."""
    b, n, d = n_feat.shape
    assert d == n_heads * d_head
    n_layers = len(params)

    # Per-layer fused weights (built once, outside the kernel).
    w_ext_l, bias_l = [], []
    for (w, att_src, att_dst, bias) in params:
        s_src = expand_att(att_src)                                     # (D, H)
        s_dst = expand_att(att_dst)                                     # (D, H)
        w_ext_l.append(jnp.concatenate([w, w @ s_src, w @ s_dst], axis=1))  # (D, D+2H)
        bias_l.append(bias.reshape(1, d))
    w_ext = jnp.stack(w_ext_l)          # (L, D, D+2H)
    bias = jnp.stack(bias_l)            # (L, 1, D)

    # Additive edge mask in [dst, src] orientation, with self-loops (GATConv default).
    eye = jnp.eye(n, dtype=bool)
    allowed = jnp.logical_or(jnp.swapaxes(adj, 1, 2) != 0, eye[None])   # (B, N_c, N_r)
    mask_add = jnp.where(allowed, 0.0, NEG_INF).astype(jnp.float32)

    # Per-head lane mask (H, 1, D).
    head_mask = (jnp.arange(d)[None, :] // d_head ==
                 jnp.arange(n_heads)[:, None]).astype(jnp.float32)[:, None, :]

    x2d = n_feat.reshape(b * n, d)

    kern = functools.partial(_gat_encoder_kernel, n_layers=n_layers,
                             n_heads=n_heads, d_head=d_head,
                             n_nodes=n, n_graphs=b)
    vmem = lambda: pl.BlockSpec(memory_space=pltpu.MemorySpace.VMEM)
    out2d = pl.pallas_call(
        kern,
        out_shape=jax.ShapeDtypeStruct((b * n, d), n_feat.dtype),
        in_specs=[vmem() for _ in range(5)],
        out_specs=vmem(),
    )(x2d, mask_add, w_ext, bias, head_mask)
    return out2d.reshape(b, n, d)


def gat_encoder_ref(x, adj, params, *, n_heads, d_head):
    """Pure-JAX reference (dense emulation of GATConv + ReLU stack), eval mode."""
    b, n, d = x.shape
    eye = jnp.eye(n, dtype=bool)
    allowed = jnp.logical_or(jnp.swapaxes(adj, 1, 2) != 0, eye[None])   # (B, c, r)
    out = x
    for (w, att_src, att_dst, bias) in params:
        feat = jnp.einsum('bnd,de->bne', out, w)                        # (B, N, D)
        fh = feat.reshape(b, n, n_heads, d_head)
        a_src = (fh * att_src[None, None]).sum(-1)                      # (B, N, H)
        a_dst = (fh * att_dst[None, None]).sum(-1)                      # (B, N, H)
        logits = (a_dst.transpose(0, 2, 1)[:, :, :, None] +
                  a_src.transpose(0, 2, 1)[:, :, None, :])              # (B, H, c, r)
        logits = jnp.where(logits > 0, logits, NEG_SLOPE * logits)
        logits = jnp.where(allowed[:, None], logits, -jnp.inf)
        attn = jax.nn.softmax(logits, axis=-1)
        agg = jnp.einsum('bhcr,brhk->bchk', attn, fh).reshape(b, n, d)
        out = jax.nn.relu(agg + bias[None, None])
    return out


if __name__ == "__main__":
    # Small shapes consistent with the module defaults (d_emb=64, n_heads=8, n_blocks=2).
    B, N = 2, 16
    d_emb, n_heads, n_blocks = 64, 8, 2
    d_head = d_emb // n_heads

    key = jax.random.PRNGKey(0)
    keys = jax.random.split(key, 2 + 4 * n_blocks)
    k_x, k_adj, k_params = keys[0], keys[1], keys[2:]

    x = jax.random.normal(k_x, (B, N, d_emb), jnp.float32)
    adj = (jax.random.uniform(k_adj, (B, N, N)) < 0.3).astype(jnp.float32)

    # Synthetic GATConv parameters: W [D, H*dk], att_src/att_dst [H, dk], bias [H*dk].
    params = []
    for blk in range(n_blocks):
        kw, ks, kd, kb = k_params[4 * blk:4 * blk + 4]
        w = 0.1 * jax.random.normal(kw, (d_emb, n_heads * d_head), jnp.float32)
        att_src = 0.1 * jax.random.normal(ks, (n_heads, d_head), jnp.float32)
        att_dst = 0.1 * jax.random.normal(kd, (n_heads, d_head), jnp.float32)
        bias = 0.01 * jax.random.normal(kb, (n_heads * d_head,), jnp.float32)
        params.append((w, att_src, att_dst, bias))

    out = gat_encoder(x, adj, params, n_heads=n_heads, d_head=d_head)
    out = jax.block_until_ready(out)
    assert out.shape == (B, N, d_emb) and out.dtype == jnp.float32
    assert bool(jnp.isfinite(out).all())

    ref = jax.block_until_ready(
        gat_encoder_ref(x, adj, params, n_heads=n_heads, d_head=d_head))
    np.testing.assert_allclose(np.asarray(out), np.asarray(ref), rtol=1e-2, atol=1e-2)

    print("KERNEL_OK")
</pallas_src>

<mosaic_0001>
module attributes {stable_mosaic.version = 11 : i64} {
  func.func @_gat_encoder_kernel(%arg0: memref<32x64xf32, #tpu.memory_space<vmem>>, %arg1: memref<2x16x16xf32, #tpu.memory_space<vmem>>, %arg2: memref<2x64x80xf32, #tpu.memory_space<vmem>>, %arg3: memref<2x1x64xf32, #tpu.memory_space<vmem>>, %arg4: memref<8x1x64xf32, #tpu.memory_space<vmem>>, %arg5: memref<32x64xf32, #tpu.memory_space<vmem>>) attributes {dimension_semantics = [], scalar_prefetch = 0 : i64, scratch_operands = 0 : i64, tpu.core_type = #tpu.core_type<tc>} {
    %c0 = arith.constant 0 : index
    %c0_0 = arith.constant 0 : index
    %0 = vector.load %arg0[%c0, %c0_0] : memref<32x64xf32, #tpu.memory_space<vmem>>, vector<32x64xf32>
    %c0_1 = arith.constant 0 : index
    %c0_2 = arith.constant 0 : index
    %c0_3 = arith.constant 0 : index
    %1 = vector.load %arg1[%c0_1, %c0_2, %c0_3] : memref<2x16x16xf32, #tpu.memory_space<vmem>>, vector<2x16x16xf32>
    %c0_4 = arith.constant 0 : index
    %c0_5 = arith.constant 0 : index
    %c0_6 = arith.constant 0 : index
    %2 = vector.load %arg4[%c0_4, %c0_5, %c0_6] : memref<8x1x64xf32, #tpu.memory_space<vmem>>, vector<8x1x64xf32>
    %c0_7 = arith.constant 0 : index
    %c0_8 = arith.constant 0 : index
    %c0_9 = arith.constant 0 : index
    %3 = vector.load %arg2[%c0_7, %c0_8, %c0_9] : memref<2x64x80xf32, #tpu.memory_space<vmem>>, vector<1x64x80xf32>
    %4 = vector.shape_cast %3 : vector<1x64x80xf32> to vector<64x80xf32>
    %c0_10 = arith.constant 0 : index
    %c0_11 = arith.constant 0 : index
    %c0_12 = arith.constant 0 : index
    %5 = vector.load %arg3[%c0_10, %c0_11, %c0_12] : memref<2x1x64xf32, #tpu.memory_space<vmem>>, vector<1x1x64xf32>
    %6 = vector.shape_cast %5 : vector<1x1x64xf32> to vector<1x64xf32>
    %cst = arith.constant dense<0.000000e+00> : vector<32x80xf32>
    %7 = tpu.matmul %0, %4, %cst {dimension_numbers = #tpu.dot_dimension_numbers<[1], [0], [0], [1], [0, 0, 1, 1], [], []>} : vector<32x64xf32>, vector<64x80xf32>, vector<32x80xf32> -> vector<32x80xf32>
    %8 = vector.extract_strided_slice %7 {offsets = [0, 0], sizes = [32, 64], strides = [1, 1]} : vector<32x80xf32> to vector<32x64xf32>
    %9 = vector.extract_strided_slice %7 {offsets = [0, 64], sizes = [32, 16], strides = [1, 1]} : vector<32x80xf32> to vector<32x16xf32>
    %10 = tpu.transpose %9, [1, 0] : vector<32x16xf32> -> vector<16x32xf32>
    %11 = vector.extract_strided_slice %8 {offsets = [0, 0], sizes = [16, 64], strides = [1, 1]} : vector<32x64xf32> to vector<16x64xf32>
    %12 = vector.shape_cast %11 : vector<16x64xf32> to vector<1x16x64xf32>
    %13 = vector.broadcast %2 : vector<8x1x64xf32> to vector<8x16x64xf32>
    %14 = vector.broadcast %12 : vector<1x16x64xf32> to vector<8x16x64xf32>
    %15 = arith.mulf %13, %14 : vector<8x16x64xf32>
    %16 = vector.extract_strided_slice %10 {offsets = [0, 0], sizes = [8, 16], strides = [1, 1]} : vector<16x32xf32> to vector<8x16xf32>
    %17 = vector.extract_strided_slice %10 {offsets = [8, 0], sizes = [8, 16], strides = [1, 1]} : vector<16x32xf32> to vector<8x16xf32>
    %18 = vector.shape_cast %17 : vector<8x16xf32> to vector<8x16x1xf32>
    %19 = vector.broadcast %18 : vector<8x16x1xf32> to vector<8x16x16xf32>
    %20 = vector.shape_cast %16 : vector<8x16xf32> to vector<8x1x16xf32>
    %21 = vector.broadcast %20 : vector<8x1x16xf32> to vector<8x16x16xf32>
    %22 = arith.addf %19, %21 : vector<8x16x16xf32>
    %cst_13 = arith.constant 0.000000e+00 : f32
    %23 = vector.broadcast %cst_13 : f32 to vector<8x16x16xf32>
    %24 = arith.cmpf ogt, %22, %23 : vector<8x16x16xf32>
    %cst_14 = arith.constant 2.000000e-01 : f32
    %25 = vector.broadcast %cst_14 : f32 to vector<8x16x16xf32>
    %26 = arith.mulf %25, %22 : vector<8x16x16xf32>
    %27 = arith.select %24, %22, %26 : vector<8x16x16xi1>, vector<8x16x16xf32>
    %28 = vector.extract_strided_slice %1 {offsets = [0, 0, 0], sizes = [1, 16, 16], strides = [1, 1, 1]} : vector<2x16x16xf32> to vector<1x16x16xf32>
    %29 = vector.shape_cast %28 : vector<1x16x16xf32> to vector<16x16xf32>
    %30 = vector.shape_cast %29 : vector<16x16xf32> to vector<1x16x16xf32>
    %31 = vector.broadcast %30 : vector<1x16x16xf32> to vector<8x16x16xf32>
    %32 = arith.addf %27, %31 : vector<8x16x16xf32>
    %cst_15 = arith.constant dense<0xFF800000> : vector<8x16xf32>
    %33 = vector.multi_reduction <maximumf>, %32, %cst_15 [2] : vector<8x16x16xf32> to vector<8x16xf32>
    %34 = vector.shape_cast %33 : vector<8x16xf32> to vector<8x16x1xf32>
    %35 = vector.broadcast %34 : vector<8x16x1xf32> to vector<8x16x16xf32>
    %36 = arith.subf %32, %35 : vector<8x16x16xf32>
    %37 = math.exp %36 : vector<8x16x16xf32>
    %cst_16 = arith.constant dense<0.000000e+00> : vector<8x16xf32>
    %38 = vector.multi_reduction <add>, %37, %cst_16 [2] : vector<8x16x16xf32> to vector<8x16xf32>
    %39 = vector.shape_cast %38 : vector<8x16xf32> to vector<8x16x1xf32>
    %40 = tpu.reciprocal %39 {approx = true} : vector<8x16x1xf32> -> vector<8x16x1xf32>
    %41 = vector.broadcast %40 : vector<8x16x1xf32> to vector<8x16x16xf32>
    %42 = arith.mulf %37, %41 : vector<8x16x16xf32>
    "tpu.trace_start"() <{level = 10 : i32, message = "hcr,hrd->hcd"}> : () -> ()
    %cst_17 = arith.constant dense<0.000000e+00> : vector<8x16x64xf32>
    %43 = tpu.matmul %42, %15, %cst_17 {dimension_numbers = #tpu.dot_dimension_numbers<[2], [1], [1], [2], [0, 0, 0, 1, 1, 2], [0], [0]>} : vector<8x16x16xf32>, vector<8x16x64xf32>, vector<8x16x64xf32> -> vector<8x16x64xf32>
    "tpu.trace_stop"() : () -> ()
    %cst_18 = arith.constant dense<0.000000e+00> : vector<16x64xf32>
    %44 = vector.multi_reduction <add>, %43, %cst_18 [0] : vector<8x16x64xf32> to vector<16x64xf32>
    %45 = vector.extract_strided_slice %8 {offsets = [16, 0], sizes = [16, 64], strides = [1, 1]} : vector<32x64xf32> to vector<16x64xf32>
    %46 = vector.shape_cast %45 : vector<16x64xf32> to vector<1x16x64xf32>
    %47 = vector.broadcast %2 : vector<8x1x64xf32> to vector<8x16x64xf32>
    %48 = vector.broadcast %46 : vector<1x16x64xf32> to vector<8x16x64xf32>
    %49 = arith.mulf %47, %48 : vector<8x16x64xf32>
    %50 = vector.extract_strided_slice %10 {offsets = [0, 16], sizes = [8, 16], strides = [1, 1]} : vector<16x32xf32> to vector<8x16xf32>
    %51 = vector.extract_strided_slice %10 {offsets = [8, 16], sizes = [8, 16], strides = [1, 1]} : vector<16x32xf32> to vector<8x16xf32>
    %52 = vector.shape_cast %51 : vector<8x16xf32> to vector<8x16x1xf32>
    %53 = vector.broadcast %52 : vector<8x16x1xf32> to vector<8x16x16xf32>
    %54 = vector.shape_cast %50 : vector<8x16xf32> to vector<8x1x16xf32>
    %55 = vector.broadcast %54 : vector<8x1x16xf32> to vector<8x16x16xf32>
    %56 = arith.addf %53, %55 : vector<8x16x16xf32>
    %cst_19 = arith.constant 0.000000e+00 : f32
    %57 = vector.broadcast %cst_19 : f32 to vector<8x16x16xf32>
    %58 = arith.cmpf ogt, %56, %57 : vector<8x16x16xf32>
    %cst_20 = arith.constant 2.000000e-01 : f32
    %59 = vector.broadcast %cst_20 : f32 to vector<8x16x16xf32>
    %60 = arith.mulf %59, %56 : vector<8x16x16xf32>
    %61 = arith.select %58, %56, %60 : vector<8x16x16xi1>, vector<8x16x16xf32>
    %62 = vector.extract_strided_slice %1 {offsets = [1, 0, 0], sizes = [1, 16, 16], strides = [1, 1, 1]} : vector<2x16x16xf32> to vector<1x16x16xf32>
    %63 = vector.shape_cast %62 : vector<1x16x16xf32> to vector<16x16xf32>
    %64 = vector.shape_cast %63 : vector<16x16xf32> to vector<1x16x16xf32>
    %65 = vector.broadcast %64 : vector<1x16x16xf32> to vector<8x16x16xf32>
    %66 = arith.addf %61, %65 : vector<8x16x16xf32>
    %cst_21 = arith.constant dense<0xFF800000> : vector<8x16xf32>
    %67 = vector.multi_reduction <maximumf>, %66, %cst_21 [2] : vector<8x16x16xf32> to vector<8x16xf32>
    %68 = vector.shape_cast %67 : vector<8x16xf32> to vector<8x16x1xf32>
    %69 = vector.broadcast %68 : vector<8x16x1xf32> to vector<8x16x16xf32>
    %70 = arith.subf %66, %69 : vector<8x16x16xf32>
    %71 = math.exp %70 : vector<8x16x16xf32>
    %cst_22 = arith.constant dense<0.000000e+00> : vector<8x16xf32>
    %72 = vector.multi_reduction <add>, %71, %cst_22 [2] : vector<8x16x16xf32> to vector<8x16xf32>
    %73 = vector.shape_cast %72 : vector<8x16xf32> to vector<8x16x1xf32>
    %74 = tpu.reciprocal %73 {approx = true} : vector<8x16x1xf32> -> vector<8x16x1xf32>
    %75 = vector.broadcast %74 : vector<8x16x1xf32> to vector<8x16x16xf32>
    %76 = arith.mulf %71, %75 : vector<8x16x16xf32>
    "tpu.trace_start"() <{level = 10 : i32, message = "hcr,hrd->hcd"}> : () -> ()
    %cst_23 = arith.constant dense<0.000000e+00> : vector<8x16x64xf32>
    %77 = tpu.matmul %76, %49, %cst_23 {dimension_numbers = #tpu.dot_dimension_numbers<[2], [1], [1], [2], [0, 0, 0, 1, 1, 2], [0], [0]>} : vector<8x16x16xf32>, vector<8x16x64xf32>, vector<8x16x64xf32> -> vector<8x16x64xf32>
    "tpu.trace_stop"() : () -> ()
    %cst_24 = arith.constant dense<0.000000e+00> : vector<16x64xf32>
    %78 = vector.multi_reduction <add>, %77, %cst_24 [0] : vector<8x16x64xf32> to vector<16x64xf32>
    %79 = tpu.concatenate %44, %78 in 0 : vector<16x64xf32>, vector<16x64xf32> -> vector<32x64xf32>
    %80 = vector.broadcast %6 : vector<1x64xf32> to vector<32x64xf32>
    %81 = arith.addf %79, %80 : vector<32x64xf32>
    %cst_25 = arith.constant 0.000000e+00 : f32
    %82 = vector.broadcast %cst_25 : f32 to vector<32x64xf32>
    %83 = arith.maximumf %81, %82 : vector<32x64xf32>
    %c1 = arith.constant 1 : index
    %c0_26 = arith.constant 0 : index
    %c0_27 = arith.constant 0 : index
    %84 = vector.load %arg2[%c1, %c0_26, %c0_27] : memref<2x64x80xf32, #tpu.memory_space<vmem>>, vector<1x64x80xf32>
    %85 = vector.shape_cast %84 : vector<1x64x80xf32> to vector<64x80xf32>
    %c1_28 = arith.constant 1 : index
    %c0_29 = arith.constant 0 : index
    %c0_30 = arith.constant 0 : index
    %86 = vector.load %arg3[%c1_28, %c0_29, %c0_30] : memref<2x1x64xf32, #tpu.memory_space<vmem>>, vector<1x1x64xf32>
    %87 = vector.shape_cast %86 : vector<1x1x64xf32> to vector<1x64xf32>
    %cst_31 = arith.constant dense<0.000000e+00> : vector<32x80xf32>
    %88 = tpu.matmul %83, %85, %cst_31 {dimension_numbers = #tpu.dot_dimension_numbers<[1], [0], [0], [1], [0, 0, 1, 1], [], []>} : vector<32x64xf32>, vector<64x80xf32>, vector<32x80xf32> -> vector<32x80xf32>
    %89 = vector.extract_strided_slice %88 {offsets = [0, 0], sizes = [32, 64], strides = [1, 1]} : vector<32x80xf32> to vector<32x64xf32>
    %90 = vector.extract_strided_slice %88 {offsets = [0, 64], sizes = [32, 16], strides = [1, 1]} : vector<32x80xf32> to vector<32x16xf32>
    %91 = tpu.transpose %90, [1, 0] : vector<32x16xf32> -> vector<16x32xf32>
    %92 = vector.extract_strided_slice %89 {offsets = [0, 0], sizes = [16, 64], strides = [1, 1]} : vector<32x64xf32> to vector<16x64xf32>
    %93 = vector.shape_cast %92 : vector<16x64xf32> to vector<1x16x64xf32>
    %94 = vector.broadcast %2 : vector<8x1x64xf32> to vector<8x16x64xf32>
    %95 = vector.broadcast %93 : vector<1x16x64xf32> to vector<8x16x64xf32>
    %96 = arith.mulf %94, %95 : vector<8x16x64xf32>
    %97 = vector.extract_strided_slice %91 {offsets = [0, 0], sizes = [8, 16], strides = [1, 1]} : vector<16x32xf32> to vector<8x16xf32>
    %98 = vector.extract_strided_slice %91 {offsets = [8, 0], sizes = [8, 16], strides = [1, 1]} : vector<16x32xf32> to vector<8x16xf32>
    %99 = vector.shape_cast %98 : vector<8x16xf32> to vector<8x16x1xf32>
    %100 = vector.broadcast %99 : vector<8x16x1xf32> to vector<8x16x16xf32>
    %101 = vector.shape_cast %97 : vector<8x16xf32> to vector<8x1x16xf32>
    %102 = vector.broadcast %101 : vector<8x1x16xf32> to vector<8x16x16xf32>
    %103 = arith.addf %100, %102 : vector<8x16x16xf32>
    %cst_32 = arith.constant 0.000000e+00 : f32
    %104 = vector.broadcast %cst_32 : f32 to vector<8x16x16xf32>
    %105 = arith.cmpf ogt, %103, %104 : vector<8x16x16xf32>
    %cst_33 = arith.constant 2.000000e-01 : f32
    %106 = vector.broadcast %cst_33 : f32 to vector<8x16x16xf32>
    %107 = arith.mulf %106, %103 : vector<8x16x16xf32>
    %108 = arith.select %105, %103, %107 : vector<8x16x16xi1>, vector<8x16x16xf32>
    %109 = vector.extract_strided_slice %1 {offsets = [0, 0, 0], sizes = [1, 16, 16], strides = [1, 1, 1]} : vector<2x16x16xf32> to vector<1x16x16xf32>
    %110 = vector.shape_cast %109 : vector<1x16x16xf32> to vector<16x16xf32>
    %111 = vector.shape_cast %110 : vector<16x16xf32> to vector<1x16x16xf32>
    %112 = vector.broadcast %111 : vector<1x16x16xf32> to vector<8x16x16xf32>
    %113 = arith.addf %108, %112 : vector<8x16x16xf32>
    %cst_34 = arith.constant dense<0xFF800000> : vector<8x16xf32>
    %114 = vector.multi_reduction <maximumf>, %113, %cst_34 [2] : vector<8x16x16xf32> to vector<8x16xf32>
    %115 = vector.shape_cast %114 : vector<8x16xf32> to vector<8x16x1xf32>
    %116 = vector.broadcast %115 : vector<8x16x1xf32> to vector<8x16x16xf32>
    %117 = arith.subf %113, %116 : vector<8x16x16xf32>
    %118 = math.exp %117 : vector<8x16x16xf32>
    %cst_35 = arith.constant dense<0.000000e+00> : vector<8x16xf32>
    %119 = vector.multi_reduction <add>, %118, %cst_35 [2] : vector<8x16x16xf32> to vector<8x16xf32>
    %120 = vector.shape_cast %119 : vector<8x16xf32> to vector<8x16x1xf32>
    %121 = tpu.reciprocal %120 {approx = true} : vector<8x16x1xf32> -> vector<8x16x1xf32>
    %122 = vector.broadcast %121 : vector<8x16x1xf32> to vector<8x16x16xf32>
    %123 = arith.mulf %118, %122 : vector<8x16x16xf32>
    "tpu.trace_start"() <{level = 10 : i32, message = "hcr,hrd->hcd"}> : () -> ()
    %cst_36 = arith.constant dense<0.000000e+00> : vector<8x16x64xf32>
    %124 = tpu.matmul %123, %96, %cst_36 {dimension_numbers = #tpu.dot_dimension_numbers<[2], [1], [1], [2], [0, 0, 0, 1, 1, 2], [0], [0]>} : vector<8x16x16xf32>, vector<8x16x64xf32>, vector<8x16x64xf32> -> vector<8x16x64xf32>
    "tpu.trace_stop"() : () -> ()
    %cst_37 = arith.constant dense<0.000000e+00> : vector<16x64xf32>
    %125 = vector.multi_reduction <add>, %124, %cst_37 [0] : vector<8x16x64xf32> to vector<16x64xf32>
    %126 = vector.extract_strided_slice %89 {offsets = [16, 0], sizes = [16, 64], strides = [1, 1]} : vector<32x64xf32> to vector<16x64xf32>
    %127 = vector.shape_cast %126 : vector<16x64xf32> to vector<1x16x64xf32>
    %128 = vector.broadcast %2 : vector<8x1x64xf32> to vector<8x16x64xf32>
    %129 = vector.broadcast %127 : vector<1x16x64xf32> to vector<8x16x64xf32>
    %130 = arith.mulf %128, %129 : vector<8x16x64xf32>
    %131 = vector.extract_strided_slice %91 {offsets = [0, 16], sizes = [8, 16], strides = [1, 1]} : vector<16x32xf32> to vector<8x16xf32>
    %132 = vector.extract_strided_slice %91 {offsets = [8, 16], sizes = [8, 16], strides = [1, 1]} : vector<16x32xf32> to vector<8x16xf32>
    %133 = vector.shape_cast %132 : vector<8x16xf32> to vector<8x16x1xf32>
    %134 = vector.broadcast %133 : vector<8x16x1xf32> to vector<8x16x16xf32>
    %135 = vector.shape_cast %131 : vector<8x16xf32> to vector<8x1x16xf32>
    %136 = vector.broadcast %135 : vector<8x1x16xf32> to vector<8x16x16xf32>
    %137 = arith.addf %134, %136 : vector<8x16x16xf32>
    %cst_38 = arith.constant 0.000000e+00 : f32
    %138 = vector.broadcast %cst_38 : f32 to vector<8x16x16xf32>
    %139 = arith.cmpf ogt, %137, %138 : vector<8x16x16xf32>
    %cst_39 = arith.constant 2.000000e-01 : f32
    %140 = vector.broadcast %cst_39 : f32 to vector<8x16x16xf32>
    %141 = arith.mulf %140, %137 : vector<8x16x16xf32>
    %142 = arith.select %139, %137, %141 : vector<8x16x16xi1>, vector<8x16x16xf32>
    %143 = vector.extract_strided_slice %1 {offsets = [1, 0, 0], sizes = [1, 16, 16], strides = [1, 1, 1]} : vector<2x16x16xf32> to vector<1x16x16xf32>
    %144 = vector.shape_cast %143 : vector<1x16x16xf32> to vector<16x16xf32>
    %145 = vector.shape_cast %144 : vector<16x16xf32> to vector<1x16x16xf32>
    %146 = vector.broadcast %145 : vector<1x16x16xf32> to vector<8x16x16xf32>
    %147 = arith.addf %142, %146 : vector<8x16x16xf32>
    %cst_40 = arith.constant dense<0xFF800000> : vector<8x16xf32>
    %148 = vector.multi_reduction <maximumf>, %147, %cst_40 [2] : vector<8x16x16xf32> to vector<8x16xf32>
    %149 = vector.shape_cast %148 : vector<8x16xf32> to vector<8x16x1xf32>
    %150 = vector.broadcast %149 : vector<8x16x1xf32> to vector<8x16x16xf32>
    %151 = arith.subf %147, %150 : vector<8x16x16xf32>
    %152 = math.exp %151 : vector<8x16x16xf32>
    %cst_41 = arith.constant dense<0.000000e+00> : vector<8x16xf32>
    %153 = vector.multi_reduction <add>, %152, %cst_41 [2] : vector<8x16x16xf32> to vector<8x16xf32>
    %154 = vector.shape_cast %153 : vector<8x16xf32> to vector<8x16x1xf32>
    %155 = tpu.reciprocal %154 {approx = true} : vector<8x16x1xf32> -> vector<8x16x1xf32>
    %156 = vector.broadcast %155 : vector<8x16x1xf32> to vector<8x16x16xf32>
    %157 = arith.mulf %152, %156 : vector<8x16x16xf32>
    "tpu.trace_start"() <{level = 10 : i32, message = "hcr,hrd->hcd"}> : () -> ()
    %cst_42 = arith.constant dense<0.000000e+00> : vector<8x16x64xf32>
    %158 = tpu.matmul %157, %130, %cst_42 {dimension_numbers = #tpu.dot_dimension_numbers<[2], [1], [1], [2], [0, 0, 0, 1, 1, 2], [0], [0]>} : vector<8x16x16xf32>, vector<8x16x64xf32>, vector<8x16x64xf32> -> vector<8x16x64xf32>
    "tpu.trace_stop"() : () -> ()
    %cst_43 = arith.constant dense<0.000000e+00> : vector<16x64xf32>
    %159 = vector.multi_reduction <add>, %158, %cst_43 [0] : vector<8x16x64xf32> to vector<16x64xf32>
    %160 = tpu.concatenate %125, %159 in 0 : vector<16x64xf32>, vector<16x64xf32> -> vector<32x64xf32>
    %161 = vector.broadcast %87 : vector<1x64xf32> to vector<32x64xf32>
    %162 = arith.addf %160, %161 : vector<32x64xf32>
    %cst_44 = arith.constant 0.000000e+00 : f32
    %163 = vector.broadcast %cst_44 : f32 to vector<32x64xf32>
    %164 = arith.maximumf %162, %163 : vector<32x64xf32>
    %c0_45 = arith.constant 0 : index
    %c0_46 = arith.constant 0 : index
    %165 = vector.load %arg5[%c0_45, %c0_46] : memref<32x64xf32, #tpu.memory_space<vmem>>, vector<32x64xf32>
    tpu.vector_store %arg5[%c0_45, %c0_46], %164 {strides = array<i32>} : memref<32x64xf32, #tpu.memory_space<vmem>>, vector<32x64xf32>,
    return
  }
}

</mosaic_0001>

<llo_original>
// kernel: tpu_custom_call.1
$region0: #{tpu_custom_call.1}
  #allocation0 [shape = 'u32[]', space=smem, size = 0x4, offset = 0x4, fixed_abs, tag = 'smem constant byte address 0x4 - core index']
  #allocation1 [shape = 'u32[144,128]{1,0:T(1,128)}', space=vmem, size = 0x12000, scoped, tag = 'internal scratch']
  %s0 = inlined_call_operand.hbm [shape: f32[32,64], index: 0, kind: input, shape index: {}]
  %s1 = inlined_call_operand.hbm [shape: f32[2,16,16], index: 1, kind: input, shape index: {}]
  %s2 = inlined_call_operand.hbm [shape: f32[2,64,80], index: 2, kind: input, shape index: {}]
  %s3 = inlined_call_operand.vmem [shape: f32[2,1,64], index: 3, kind: input, shape index: {}]
  %s4 = inlined_call_operand.vmem [shape: f32[8,1,64], index: 4, kind: input, shape index: {}]
  %s5 = inlined_call_operand.hbm [shape: f32[32,64], index: 5, kind: output, shape index: {}]
  %s6 = sld [smem:[#allocation0]]
  $region42: #{tpu_custom_call.1} parent=0
    _
  %s8 = ssub.s32 1, %s6
  %s9 = scalar_select 0, %s8, %s6
  $region1: #{tpu_custom_call.1} parent=0
    #allocation2 [shape = 'u8[16384]{0}', space=vmem, size = 0x4000, scoped, tag = 'input window, operand 0, single buffered']
    #allocation3 [shape = 's32[1]{0}', space=sflag, size = 0x4, scoped, tag = 'scoped memory for tpu_custom_call.1']
    #allocation4 [shape = 's32[1]{0}', space=sflag, size = 0x4, scoped, tag = 'scoped memory for tpu_custom_call.1']
    #allocation5 [shape = 'u8[16384]{0}', space=vmem, size = 0x4000, scoped, tag = 'input window, operand 1, single buffered']
    #allocation6 [shape = 's32[1]{0}', space=sflag, size = 0x4, scoped, tag = 'scoped memory for tpu_custom_call.1']
    #allocation7 [shape = 'u8[65536]{0}', space=vmem, size = 0x10000, scoped, tag = 'input window, operand 2, single buffered']
    #allocation8 [shape = 'u8[16384]{0}', space=vmem, size = 0x4000, scoped, tag = 'output window, operand 0, single buffered']
    %10 = vsyncpa [#allocation3], 0
    %11 = vsyncpa [#allocation6], 0
    %12 = vsyncpa [#allocation4], 0
    // Predicated region
    $region2: #{tpu_custom_call.1} parent=1 // pred_check
      _
    $region3: #{tpu_custom_call.1} parent=1 // pred_check_branch
      %14 = sbr.rel (0) target = $region5
    $region4: #{tpu_custom_call.1} parent=1 // pred_region
      %s16 = ssub.s32 512, 512
      %17 = vsyncadd [#allocation3], %s16
      %s18 = sshll.u32 [#allocation2], 4
      %s19 = int_to_ptr.vmem [resolvable:$true] %s18
      %24 = dma.hbm_to_vmem [thread:$0]  %s0, 512, %s19, [#allocation3], 128, 128, 8
    $region5: #{tpu_custom_call.1} parent=1 // pred_fallthru
      _
    // Predicated region
    $region6: #{tpu_custom_call.1} parent=1 // pred_check
      _
    $region7: #{tpu_custom_call.1} parent=1 // pred_check_branch
      %26 = sbr.rel (0) target = $region9
    $region8: #{tpu_custom_call.1} parent=1 // pred_region
      %s28 = ssub.s32 512, 512
      %29 = vsyncadd [#allocation6], %s28
      %s30 = sshll.u32 [#allocation5], 4
      %s31 = int_to_ptr.vmem [resolvable:$true] %s30
      %36 = dma.hbm_to_vmem [thread:$0]  %s1, 512, %s31, [#allocation6], 128, 128, 8
    $region9: #{tpu_custom_call.1} parent=1 // pred_fallthru
      _
    // Predicated region
    $region10: #{tpu_custom_call.1} parent=1 // pred_check
      _
    $region11: #{tpu_custom_call.1} parent=1 // pred_check_branch
      %38 = sbr.rel (0) target = $region13
    $region12: #{tpu_custom_call.1} parent=1 // pred_region
      %s40 = ssub.s32 2048, 2048
      %41 = vsyncadd [#allocation6], %s40
      %s42 = sshll.u32 [#allocation7], 4
      %s43 = int_to_ptr.vmem [resolvable:$true] %s42
      %48 = dma.hbm_to_vmem [thread:$0]  %s2, 2048, %s43, [#allocation6], 128, 128, 8
    $region13: #{tpu_custom_call.1} parent=1 // pred_fallthru
      _
    // Predicated region
    $region14: #{tpu_custom_call.1} parent=1 // pred_check
      _
    $region15: #{tpu_custom_call.1} parent=1 // pred_check_branch
      %50 = sbr.rel (0) target = $region17
    $region16: #{tpu_custom_call.1} parent=1 // pred_region
      _
    $region17: #{tpu_custom_call.1} parent=1 // pred_fallthru
      _
    // Predicated region
    $region18: #{tpu_custom_call.1} parent=1 // pred_check
      _
    $region19: #{tpu_custom_call.1} parent=1 // pred_check_branch
      %52 = sbr.rel (0) target = $region21
    $region20: #{tpu_custom_call.1} parent=1 // pred_region
      _
    $region21: #{tpu_custom_call.1} parent=1 // pred_fallthru
      _
    // Predicated region
    $region22: #{tpu_custom_call.1} parent=1 // pred_check
      _
    $region23: #{tpu_custom_call.1} parent=1 // pred_check_branch
      %54 = sbr.rel (0) target = $region25
    $region24: #{tpu_custom_call.1} parent=1 // pred_region
      %55 = dma.done [#allocation3], 512
    $region25: #{tpu_custom_call.1} parent=1 // pred_fallthru
      _
    // Predicated region
    $region26: #{tpu_custom_call.1} parent=1 // pred_check
      _
    $region27: #{tpu_custom_call.1} parent=1 // pred_check_branch
      %57 = sbr.rel (0) target = $region29
    $region28: #{tpu_custom_call.1} parent=1 // pred_region
      %58 = dma.done [#allocation6], 512
    $region29: #{tpu_custom_call.1} parent=1 // pred_fallthru
      _
    // Predicated region
    $region30: #{tpu_custom_call.1} parent=1 // pred_check
      _
    $region31: #{tpu_custom_call.1} parent=1 // pred_check_branch
      %60 = sbr.rel (0) target = $region33
    $region32: #{tpu_custom_call.1} parent=1 // pred_region
      %61 = dma.done [#allocation6], 2048
    $region33: #{tpu_custom_call.1} parent=1 // pred_fallthru
      _
    %v62 = vld [vmem:[#allocation2] sm:$0xff]
    %v63 = vld [vmem:[#allocation2 + $0x8] sm:$0xff]
    %v64 = vld [vmem:[#allocation2 + $0x10] sm:$0xff]
    %v65 = vld [vmem:[#allocation2 + $0x18] sm:$0xff]
    %v66 = vld [vmem:[#allocation5] sm:$0xff]
    %v67 = vld [vmem:[#allocation5 + $0x8] sm:$0xff]
    %v68 = vld [vmem:[#allocation5 + $0x10] sm:$0xff]
    %v69 = vld [vmem:[#allocation5 + $0x18] sm:$0xff]
    %v70 = vld [vmem:[%s4] sm:$0x1]
    %v71 = vld [vmem:[%s4 + $0x1] sm:$0x1]
    %v72 = vld [vmem:[%s4 + $0x2] sm:$0x1]
    %v73 = vld [vmem:[%s4 + $0x3] sm:$0x1]
    %v74 = vld [vmem:[%s4 + $0x4] sm:$0x1]
    %v75 = vld [vmem:[%s4 + $0x5] sm:$0x1]
    %v76 = vld [vmem:[%s4 + $0x6] sm:$0x1]
    %v77 = vld [vmem:[%s4 + $0x7] sm:$0x1]
    %v78 = vld [vmem:[#allocation7] sm:$0xff]
    %v79 = vld [vmem:[#allocation7 + $0x8] sm:$0xff]
    %v80 = vld [vmem:[#allocation7 + $0x10] sm:$0xff]
    %v81 = vld [vmem:[#allocation7 + $0x18] sm:$0xff]
    %v82 = vld [vmem:[#allocation7 + $0x20] sm:$0xff]
    %v83 = vld [vmem:[#allocation7 + $0x28] sm:$0xff]
    %v84 = vld [vmem:[#allocation7 + $0x30] sm:$0xff]
    %v85 = vld [vmem:[#allocation7 + $0x38] sm:$0xff]
    %v86 = vld [vmem:[%s3] sm:$0x1]
    %vm87 = vcmask 523264
    %v89 = vsel %vm87, %v62, 0
    %v92 = vsel %vm87, %v63, 0
    %v95 = vsel %vm87, %v64, 0
    %v98 = vsel %vm87, %v65, 0
    %100 = vmatprep.subr.mxu0 0.0
    %101 = vmatpush1.msra.mxu0 %v78
    %102 = vmatprep.subr.mxu0 0.0
    %103 = vmatpush1.msra.mxu0 %v79
    %104 = vmatprep.subr.mxu0 0.0
    %105 = vmatpush1.msra.mxu0 %v80
    %106 = vmatprep.subr.mxu0 0.0
    %107 = vmatpush1.msra.mxu0 %v81
    %108 = vmatprep.subr.mxu0 0.0
    %109 = vmatpush1.msra.mxu0 %v82
    %110 = vmatprep.subr.mxu0 0.0
    %111 = vmatpush1.msra.mxu0 %v83
    %112 = vmatprep.subr.mxu0 0.0
    %113 = vmatpush1.msra.mxu0 %v84
    %114 = vmatprep.subr.mxu0 0.0
    %115 = vmatpush1.msra.mxu0 %v85
    %116 = vmatprep.subr.mxu0 0.0
    %117 = vmatpush1.msra.mxu0 0.0
    %118 = vmatprep.subr.mxu0 0.0
    %119 = vmatpush1.msra.mxu0 0.0
    %120 = vmatprep.subr.mxu0 0.0
    %121 = vmatpush1.msra.mxu0 0.0
    %122 = vmatprep.subr.mxu0 0.0
    %123 = vmatpush1.msra.mxu0 0.0
    %124 = vmatprep.subr.mxu0 0.0
    %125 = vmatpush1.msra.mxu0 0.0
    %126 = vmatprep.subr.mxu0 0.0
    %127 = vmatpush1.msra.mxu0 0.0
    %128 = vmatprep.subr.mxu0 0.0
    %129 = vmatpush1.msra.mxu0 0.0
    %130 = vmatprep.subr.mxu0 0.0
    %131 = vmatpush1.msra.mxu0 0.0
    %132 = vmatprep.subr.mxu0 0.0
    %133 = vmatpush1.msra.mxu0 0.0
    %134 = vmatprep.subr.mxu0 0.0
    %135 = vmatpush1.msra.mxu0 0.0
    %136 = vmatprep.subr.mxu0 0.0
    %137 = vmatpush1.msra.mxu0 0.0
    %138 = vmatprep.subr.mxu0 0.0
    %139 = vmatpush1.msra.mxu0 0.0
    %140 = vmatprep.subr.mxu0 0.0
    %141 = vmatpush1.msra.mxu0 0.0
    %142 = vmatprep.subr.mxu0 0.0
    %143 = vmatpush1.msra.mxu0 0.0
    %144 = vmatprep.subr.mxu0 0.0
    %145 = vmatpush1.msra.mxu0 0.0
    %146 = vmatprep.subr.mxu0 0.0
    %147 = vmatpush1.msra.mxu0 0.0
    %148 = vmatprep.subr.mxu0 0.0
    %149 = vmatpush1.msra.mxu0 0.0
    %150 = vmatprep.subr.mxu0 0.0
    %151 = vmatpush1.msra.mxu0 0.0
    %152 = vmatprep.subr.mxu0 0.0
    %153 = vmatpush1.msra.mxu0 0.0
    %154 = vmatprep.subr.mxu0 0.0
    %155 = vmatpush1.msra.mxu0 0.0
    %156 = vmatprep.subr.mxu0 0.0
    %157 = vmatpush1.msra.mxu0 0.0
    %158 = vmatprep.subr.mxu0 0.0
    %159 = vmatpush1.msra.mxu0 0.0
    %160 = vmatprep.subr.mxu0 0.0
    %161 = vmatpush1.msra.mxu0 0.0
    %162 = vmatprep.subr.mxu0 0.0
    %163 = vmatpush1.msra.mxu0 0.0
    %164 = vmatprep.mubr.f32.mxu0 0.0
    %165 = vmatmul.mubr.f32.gmra.mrb[0].mxu0 %v89
    %v166 = vpop.f32.mrb[0].mxu0
    %v167 = vadd.f32 0.0, %v166
    %v168 = vpop.f32.mrb[0].mxu0
    %169 = vmatprep.mubr.f32.mxu0 0.0
    %170 = vmatmul.mubr.f32.gmra.mrb[0].mxu0 %v92
    %v171 = vpop.f32.mrb[0].mxu0
    %v172 = vadd.f32 0.0, %v171
    %v173 = vpop.f32.mrb[0].mxu0
    %174 = vmatprep.mubr.f32.mxu0 0.0
    %175 = vmatmul.mubr.f32.gmra.mrb[0].mxu0 %v95
    %v176 = vpop.f32.mrb[0].mxu0
    %v177 = vadd.f32 0.0, %v176
    %v178 = vpop.f32.mrb[0].mxu0
    %179 = vmatprep.mubr.f32.mxu0 0.0
    %180 = vmatmul.mubr.f32.gmra.mrb[0].mxu0 %v98
    %v181 = vpop.f32.mrb[0].mxu0
    %v182 = vadd.f32 0.0, %v181
    %v183 = vpop.f32.mrb[0].mxu0
    %184 = vdwg.mxu0
    %189 = vrot.lane.b32.xlu0 %v167, 64
    %v190 = vpop.permute.xlu0 %189
    %191 = vrot.lane.b32.xlu0 %v172, 64
    %v192 = vpop.permute.xlu0 %191
    %193 = vrot.lane.b32.xlu0 %v177, 64
    %v194 = vpop.permute.xlu0 %193
    %195 = vrot.lane.b32.xlu0 %v182, 64
    %v196 = vpop.permute.xlu0 %195
    %201 = vxpose.xlu0.b32.start [1/16] %v190, 128
    %202 = vxpose.xlu0.b32.cont [2/16] %v192, 128
    %203 = vxpose.xlu0.b32.cont [3/16] %v194, 128
    %204 = vxpose.xlu0.b32.cont [4/16] %v196, 128
    %205 = vxpose.xlu0.b32.cont [5/16] 0.0, 128
    %206 = vxpose.xlu0.b32.cont [6/16] 0.0, 128
    %207 = vxpose.xlu0.b32.cont [7/16] 0.0, 128
    %208 = vxpose.xlu0.b32.cont [8/16] 0.0, 128
    %209 = vxpose.xlu0.b32.cont [9/16] 0.0, 128
    %210 = vxpose.xlu0.b32.cont [10/16] 0.0, 128
    %211 = vxpose.xlu0.b32.cont [11/16] 0.0, 128
    %212 = vxpose.xlu0.b32.cont [12/16] 0.0, 128
    %213 = vxpose.xlu0.b32.cont [13/16] 0.0, 128
    %214 = vxpose.xlu0.b32.cont [14/16] 0.0, 128
    %215 = vxpose.xlu0.b32.cont [15/16] 0.0, 128
    %216 = vxpose.xlu0.b32.end [16/16] 0.0, 128
    %v217 = vpop.trf.xlu0
    %v218 = vpop.trf.xlu0
    %v219 = vpop.trf.xlu0
    %v220 = vpop.trf.xlu0
    %v221 = vpop.trf.xlu0
    %v222 = vpop.trf.xlu0
    %v223 = vpop.trf.xlu0
    %v224 = vpop.trf.xlu0
    %v225 = vpop.trf.xlu0
    %v226 = vpop.trf.xlu0
    %v227 = vpop.trf.xlu0
    %v228 = vpop.trf.xlu0
    %v229 = vpop.trf.xlu0
    %v230 = vpop.trf.xlu0
    %v231 = vpop.trf.xlu0
    %v232 = vpop.trf.xlu0
    %v241 = vlaneseq
    %v242 = vshrl.u32 %v241, 7
    %v243 = vsub.s32 0, %v242
    %v244 = vrot.slane %v70, %v243
    %v245 = vlaneseq
    %v246 = vshrl.u32 %v245, 7
    %v247 = vsub.s32 0, %v246
    %v248 = vrot.slane %v71, %v247
    %v249 = vlaneseq
    %v250 = vshrl.u32 %v249, 7
    %v251 = vsub.s32 0, %v250
    %v252 = vrot.slane %v72, %v251
    %v253 = vlaneseq
    %v254 = vshrl.u32 %v253, 7
    %v255 = vsub.s32 0, %v254
    %v256 = vrot.slane %v73, %v255
    %v257 = vlaneseq
    %v258 = vshrl.u32 %v257, 7
    %v259 = vsub.s32 0, %v258
    %v260 = vrot.slane %v74, %v259
    %v261 = vlaneseq
    %v262 = vshrl.u32 %v261, 7
    %v263 = vsub.s32 0, %v262
    %v264 = vrot.slane %v75, %v263
    %v265 = vlaneseq
    %v266 = vshrl.u32 %v265, 7
    %v267 = vsub.s32 0, %v266
    %v268 = vrot.slane %v76, %v267
    %v269 = vlaneseq
    %v270 = vshrl.u32 %v269, 7
    %v271 = vsub.s32 0, %v270
    %v272 = vrot.slane %v77, %v271
    %v281 = vmul.f32 %v244, %v167
    %v282 = vmul.f32 %v244, %v172
    %v283 = vmul.f32 %v248, %v167
    %v284 = vmul.f32 %v248, %v172
    %v285 = vmul.f32 %v252, %v167
    %v286 = vmul.f32 %v252, %v172
    %v287 = vmul.f32 %v256, %v167
    %v288 = vmul.f32 %v256, %v172
    %v289 = vmul.f32 %v260, %v167
    %v290 = vmul.f32 %v260, %v172
    %v291 = vmul.f32 %v264, %v167
    %v292 = vmul.f32 %v264, %v172
    %v293 = vmul.f32 %v268, %v167
    %v294 = vmul.f32 %v268, %v172
    %v295 = vmul.f32 %v272, %v167
    %v296 = vmul.f32 %v272, %v172
    %v297 = vlaneseq
    %v298 = vshrl.u32 %v297, 7
    %v299 = vsub.s32 0, %v298
    %v300 = vrot.slane %v218, %v299
    %302 = vbcast.lane.b32.xlu0 %v300, 256
    %v303 = vpop.permute.xlu0 %302
    %s305 = sor.u32 256, 8
    %306 = vbcast.lane.b32.xlu0 %v300, %s305
    %v307 = vpop.permute.xlu0 %306
    %v308 = vlaneseq
    %v309 = vshrl.u32 %v308, 7
    %v310 = vsub.s32 1, %v309
    %v311 = vrot.slane %v218, %v310
    %313 = vbcast.lane.b32.xlu0 %v311, 256
    %v314 = vpop.permute.xlu0 %313
    %s316 = sor.u32 256, 8
    %317 = vbcast.lane.b32.xlu0 %v311, %s316
    %v318 = vpop.permute.xlu0 %317
    %v319 = vlaneseq
    %v320 = vshrl.u32 %v319, 7
    %v321 = vsub.s32 2, %v320
    %v322 = vrot.slane %v218, %v321
    %324 = vbcast.lane.b32.xlu0 %v322, 256
    %v325 = vpop.permute.xlu0 %324
    %s327 = sor.u32 256, 8
    %328 = vbcast.lane.b32.xlu0 %v322, %s327
    %v329 = vpop.permute.xlu0 %328
    %v330 = vlaneseq
    %v331 = vshrl.u32 %v330, 7
    %v332 = vsub.s32 3, %v331
    %v333 = vrot.slane %v218, %v332
    %335 = vbcast.lane.b32.xlu0 %v333, 256
    %v336 = vpop.permute.xlu0 %335
    %s338 = sor.u32 256, 8
    %339 = vbcast.lane.b32.xlu0 %v333, %s338
    %v340 = vpop.permute.xlu0 %339
    %v341 = vlaneseq
    %v342 = vshrl.u32 %v341, 7
    %v343 = vsub.s32 4, %v342
    %v344 = vrot.slane %v218, %v343
    %346 = vbcast.lane.b32.xlu0 %v344, 256
    %v347 = vpop.permute.xlu0 %346
    %s349 = sor.u32 256, 8
    %350 = vbcast.lane.b32.xlu0 %v344, %s349
    %v351 = vpop.permute.xlu0 %350
    %v352 = vlaneseq
    %v353 = vshrl.u32 %v352, 7
    %v354 = vsub.s32 5, %v353
    %v355 = vrot.slane %v218, %v354
    %357 = vbcast.lane.b32.xlu0 %v355, 256
    %v358 = vpop.permute.xlu0 %357
    %s360 = sor.u32 256, 8
    %361 = vbcast.lane.b32.xlu0 %v355, %s360
    %v362 = vpop.permute.xlu0 %361
    %v363 = vlaneseq
    %v364 = vshrl.u32 %v363, 7
    %v365 = vsub.s32 6, %v364
    %v366 = vrot.slane %v218, %v365
    %368 = vbcast.lane.b32.xlu0 %v366, 256
    %v369 = vpop.permute.xlu0 %368
    %s371 = sor.u32 256, 8
    %372 = vbcast.lane.b32.xlu0 %v366, %s371
    %v373 = vpop.permute.xlu0 %372
    %v374 = vlaneseq
    %v375 = vshrl.u32 %v374, 7
    %v376 = vsub.s32 7, %v375
    %v377 = vrot.slane %v218, %v376
    %379 = vbcast.lane.b32.xlu0 %v377, 256
    %v380 = vpop.permute.xlu0 %379
    %s382 = sor.u32 256, 8
    %383 = vbcast.lane.b32.xlu0 %v377, %s382
    %v384 = vpop.permute.xlu0 %383
    %v386 = vcombine.high %v217, %v217
    %v388 = vunpack.c.l.s4 1966171168
    %v389 = vunpack.c.0.s8 %v388
    %v390 = vlaneseq
    %v391 = vshrl.u32 %v390, 7
    %v392 = vsub.s32 %v389, %v391
    %v393 = vrot.slane %v217, %v392
    %v395 = vunpack.c.l.s4 1966171168
    %v396 = vunpack.c.0.s8 %v395
    %v397 = vlaneseq
    %v398 = vshrl.u32 %v397, 7
    %v399 = vsub.s32 %v396, %v398
    %v400 = vrot.slane %v386, %v399
    %v401 = vcombine.high %v393, %v393
    %v402 = vcombine.high %v400, %v400
    %v404 = vunpack.c.l.s4 1966171168
    %v405 = vunpack.c.0.s8 %v404
    %v406 = vlaneseq
    %v407 = vshrl.u32 %v406, 7
    %v408 = vsub.s32 %v405, %v407
    %v409 = vrot.slane %v393, %v408
    %v411 = vunpack.c.l.s4 1966171168
    %v412 = vunpack.c.0.s8 %v411
    %v413 = vlaneseq
    %v414 = vshrl.u32 %v413, 7
    %v415 = vsub.s32 %v412, %v414
    %v416 = vrot.slane %v400, %v415
    %v418 = vunpack.c.l.s4 1966171168
    %v419 = vunpack.c.0.s8 %v418
    %v420 = vlaneseq
    %v421 = vshrl.u32 %v420, 7
    %v422 = vsub.s32 %v419, %v421
    %v423 = vrot.slane %v401, %v422
    %v425 = vunpack.c.l.s4 1966171168
    %v426 = vunpack.c.0.s8 %v425
    %v427 = vlaneseq
    %v428 = vshrl.u32 %v427, 7
    %v429 = vsub.s32 %v426, %v428
    %v430 = vrot.slane %v402, %v429
    %v431 = vcombine.high %v409, %v409
    %v432 = vcombine.high %v416, %v416
    %v433 = vcombine.high %v423, %v423
    %v434 = vcombine.high %v430, %v430
    %v435 = vlaneseq
    %v436 = vshrl.u32 %v435, 7
    %v437 = vsub.s32 0, %v436
    %v438 = vrot.slane %v409, %v437
    %v439 = vlaneseq
    %v440 = vshrl.u32 %v439, 7
    %v441 = vsub.s32 0, %v440
    %v442 = vrot.slane %v423, %v441
    %v443 = vlaneseq
    %v444 = vshrl.u32 %v443, 7
    %v445 = vsub.s32 0, %v444
    %v446 = vrot.slane %v431, %v445
    %v447 = vlaneseq
    %v448 = vshrl.u32 %v447, 7
    %v449 = vsub.s32 0, %v448
    %v450 = vrot.slane %v433, %v449
    %v451 = vlaneseq
    %v452 = vshrl.u32 %v451, 7
    %v453 = vsub.s32 0, %v452
    %v454 = vrot.slane %v416, %v453
    %v455 = vlaneseq
    %v456 = vshrl.u32 %v455, 7
    %v457 = vsub.s32 0, %v456
    %v458 = vrot.slane %v430, %v457
    %v459 = vlaneseq
    %v460 = vshrl.u32 %v459, 7
    %v461 = vsub.s32 0, %v460
    %v462 = vrot.slane %v432, %v461
    %v463 = vlaneseq
    %v464 = vshrl.u32 %v463, 7
    %v465 = vsub.s32 0, %v464
    %v466 = vrot.slane %v434, %v465
    %v475 = vadd.f32 %v303, %v438
    %v476 = vadd.f32 %v307, %v438
    %v477 = vadd.f32 %v314, %v442
    %v478 = vadd.f32 %v318, %v442
    %v479 = vadd.f32 %v325, %v446
    %v480 = vadd.f32 %v329, %v446
    %v481 = vadd.f32 %v336, %v450
    %v482 = vadd.f32 %v340, %v450
    %v483 = vadd.f32 %v347, %v454
    %v484 = vadd.f32 %v351, %v454
    %v485 = vadd.f32 %v358, %v458
    %v486 = vadd.f32 %v362, %v458
    %v487 = vadd.f32 %v369, %v462
    %v488 = vadd.f32 %v373, %v462
    %v489 = vadd.f32 %v380, %v466
    %v490 = vadd.f32 %v384, %v466
    %vm491 = vcmp.gt.f32.partialorder %v475, 0.0
    %vm492 = vcmp.gt.f32.partialorder %v476, 0.0
    %vm493 = vcmp.gt.f32.partialorder %v477, 0.0
    %vm494 = vcmp.gt.f32.partialorder %v478, 0.0
    %vm495 = vcmp.gt.f32.partialorder %v479, 0.0
    %vm496 = vcmp.gt.f32.partialorder %v480, 0.0
    %vm497 = vcmp.gt.f32.partialorder %v481, 0.0
    %vm498 = vcmp.gt.f32.partialorder %v482, 0.0
    %vm499 = vcmp.gt.f32.partialorder %v483, 0.0
    %vm500 = vcmp.gt.f32.partialorder %v484, 0.0
    %vm501 = vcmp.gt.f32.partialorder %v485, 0.0
    %vm502 = vcmp.gt.f32.partialorder %v486, 0.0
    %vm503 = vcmp.gt.f32.partialorder %v487, 0.0
    %vm504 = vcmp.gt.f32.partialorder %v488, 0.0
    %vm505 = vcmp.gt.f32.partialorder %v489, 0.0
    %vm506 = vcmp.gt.f32.partialorder %v490, 0.0
    %v507 = vmul.f32 %v475, 0.2
    %v508 = vmul.f32 %v476, 0.2
    %v509 = vmul.f32 %v477, 0.2
    %v510 = vmul.f32 %v478, 0.2
    %v511 = vmul.f32 %v479, 0.2
    %v512 = vmul.f32 %v480, 0.2
    %v513 = vmul.f32 %v481, 0.2
    %v514 = vmul.f32 %v482, 0.2
    %v515 = vmul.f32 %v483, 0.2
    %v516 = vmul.f32 %v484, 0.2
    %v517 = vmul.f32 %v485, 0.2
    %v518 = vmul.f32 %v486, 0.2
    %v519 = vmul.f32 %v487, 0.2
    %v520 = vmul.f32 %v488, 0.2
    %v521 = vmul.f32 %v489, 0.2
    %v522 = vmul.f32 %v490, 0.2
    %v523 = vsel %vm491, %v475, %v507
    %v524 = vsel %vm492, %v476, %v508
    %v525 = vsel %vm493, %v477, %v509
    %v526 = vsel %vm494, %v478, %v510
    %v527 = vsel %vm495, %v479, %v511
    %v528 = vsel %vm496, %v480, %v512
    %v529 = vsel %vm497, %v481, %v513
    %v530 = vsel %vm498, %v482, %v514
    %v531 = vsel %vm499, %v483, %v515
    %v532 = vsel %vm500, %v484, %v516
    %v533 = vsel %vm501, %v485, %v517
    %v534 = vsel %vm502, %v486, %v518
    %v535 = vsel %vm503, %v487, %v519
    %v536 = vsel %vm504, %v488, %v520
    %v537 = vsel %vm505, %v489, %v521
    %v538 = vsel %vm506, %v490, %v522
    %v539 = vadd.f32 %v523, %v66
    %v540 = vadd.f32 %v524, %v67
    %v541 = vadd.f32 %v525, %v66
    %v542 = vadd.f32 %v526, %v67
    %v543 = vadd.f32 %v527, %v66
    %v544 = vadd.f32 %v528, %v67
    %v545 = vadd.f32 %v529, %v66
    %v546 = vadd.f32 %v530, %v67
    %v547 = vadd.f32 %v531, %v66
    %v548 = vadd.f32 %v532, %v67
    %v549 = vadd.f32 %v533, %v66
    %v550 = vadd.f32 %v534, %v67
    %v551 = vadd.f32 %v535, %v66
    %v552 = vadd.f32 %v536, %v67
    %v553 = vadd.f32 %v537, %v66
    %v554 = vadd.f32 %v538, %v67
    %vm555 = vcmask 130048
    %v556 = vsel %vm555, %v539, -inf
    %557 = vmax.xlane.f32.xlu0 %v556
    %v558 = vpop.xlane.xlu0 %557
    %v559 = vsel %vm555, %v540, -inf
    %560 = vmax.xlane.f32.xlu0 %v559
    %v561 = vpop.xlane.xlu0 %560
    %v562 = vsel %vm555, %v541, -inf
    %563 = vmax.xlane.f32.xlu0 %v562
    %v564 = vpop.xlane.xlu0 %563
    %v565 = vsel %vm555, %v542, -inf
    %566 = vmax.xlane.f32.xlu0 %v565
    %v567 = vpop.xlane.xlu0 %566
    %v568 = vsel %vm555, %v543, -inf
    %569 = vmax.xlane.f32.xlu0 %v568
    %v570 = vpop.xlane.xlu0 %569
    %v571 = vsel %vm555, %v544, -inf
    %572 = vmax.xlane.f32.xlu0 %v571
    %v573 = vpop.xlane.xlu0 %572
    %v574 = vsel %vm555, %v545, -inf
    %575 = vmax.xlane.f32.xlu0 %v574
    %v576 = vpop.xlane.xlu0 %575
    %v577 = vsel %vm555, %v546, -inf
    %578 = vmax.xlane.f32.xlu0 %v577
    %v579 = vpop.xlane.xlu0 %578
    %v580 = vsel %vm555, %v547, -inf
    %581 = vmax.xlane.f32.xlu0 %v580
    %v582 = vpop.xlane.xlu0 %581
    %v583 = vsel %vm555, %v548, -inf
    %584 = vmax.xlane.f32.xlu0 %v583
    %v585 = vpop.xlane.xlu0 %584
    %v586 = vsel %vm555, %v549, -inf
    %587 = vmax.xlane.f32.xlu0 %v586
    %v588 = vpop.xlane.xlu0 %587
    %v589 = vsel %vm555, %v550, -inf
    %590 = vmax.xlane.f32.xlu0 %v589
    %v591 = vpop.xlane.xlu0 %590
    %v592 = vsel %vm555, %v551, -inf
    %593 = vmax.xlane.f32.xlu0 %v592
    %v594 = vpop.xlane.xlu0 %593
    %v595 = vsel %vm555, %v552, -inf
    %596 = vmax.xlane.f32.xlu0 %v595
    %v597 = vpop.xlane.xlu0 %596
    %v598 = vsel %vm555, %v553, -inf
    %599 = vmax.xlane.f32.xlu0 %v598
    %v600 = vpop.xlane.xlu0 %599
    %v601 = vsel %vm555, %v554, -inf
    %602 = vmax.xlane.f32.xlu0 %v601
    %v603 = vpop.xlane.xlu0 %602
    %v604 = vsub.f32 %v539, %v558
    %v605 = vsub.f32 %v540, %v561
    %v606 = vsub.f32 %v541, %v564
    %v607 = vsub.f32 %v542, %v567
    %v608 = vsub.f32 %v543, %v570
    %v609 = vsub.f32 %v544, %v573
    %v610 = vsub.f32 %v545, %v576
    %v611 = vsub.f32 %v546, %v579
    %v612 = vsub.f32 %v547, %v582
    %v613 = vsub.f32 %v548, %v585
    %v614 = vsub.f32 %v549, %v588
    %v615 = vsub.f32 %v550, %v591
    %v616 = vsub.f32 %v551, %v594
    %v617 = vsub.f32 %v552, %v597
    %v618 = vsub.f32 %v553, %v600
    %v619 = vsub.f32 %v554, %v603
    %v620 = vmul.f32 %v604, 1.442695
    %v621 = vpow.pop %v620
    %v622 = vmul.f32 %v605, 1.442695
    %v623 = vpow.pop %v622
    %v624 = vmul.f32 %v606, 1.442695
    %v625 = vpow.pop %v624
    %v626 = vmul.f32 %v607, 1.442695
    %v627 = vpow.pop %v626
    %v628 = vmul.f32 %v608, 1.442695
    %v629 = vpow.pop %v628
    %v630 = vmul.f32 %v609, 1.442695
    %v631 = vpow.pop %v630
    %v632 = vmul.f32 %v610, 1.442695
    %v633 = vpow.pop %v632
    %v634 = vmul.f32 %v611, 1.442695
    %v635 = vpow.pop %v634
    %v636 = vmul.f32 %v612, 1.442695
    %v637 = vpow.pop %v636
    %v638 = vmul.f32 %v613, 1.442695
    %v639 = vpow.pop %v638
    %v640 = vmul.f32 %v614, 1.442695
    %v641 = vpow.pop %v640
    %v642 = vmul.f32 %v615, 1.442695
    %v643 = vpow.pop %v642
    %v644 = vmul.f32 %v616, 1.442695
    %v645 = vpow.pop %v644
    %v646 = vmul.f32 %v617, 1.442695
    %v647 = vpow.pop %v646
    %v648 = vmul.f32 %v618, 1.442695
    %v649 = vpow.pop %v648
    %v650 = vmul.f32 %v619, 1.442695
    %v651 = vpow.pop %v650
    %v652 = vsel %vm555, %v621, 0.0
    %653 = vadd.xlane.f32.xlu0 %v652
    %v654 = vpop.xlane.xlu0 %653
    %v655 = vsel %vm555, %v623, 0.0
    %656 = vadd.xlane.f32.xlu0 %v655
    %v657 = vpop.xlane.xlu0 %656
    %v658 = vsel %vm555, %v625, 0.0
    %659 = vadd.xlane.f32.xlu0 %v658
    %v660 = vpop.xlane.xlu0 %659
    %v661 = vsel %vm555, %v627, 0.0
    %662 = vadd.xlane.f32.xlu0 %v661
    %v663 = vpop.xlane.xlu0 %662
    %v664 = vsel %vm555, %v629, 0.0
    %665 = vadd.xlane.f32.xlu0 %v664
    %v666 = vpop.xlane.xlu0 %665
    %v667 = vsel %vm555, %v631, 0.0
    %668 = vadd.xlane.f32.xlu0 %v667
    %v669 = vpop.xlane.xlu0 %668
    %v670 = vsel %vm555, %v633, 0.0
    %671 = vadd.xlane.f32.xlu0 %v670
    %v672 = vpop.xlane.xlu0 %671
    %v673 = vsel %vm555, %v635, 0.0
    %674 = vadd.xlane.f32.xlu0 %v673
    %v675 = vpop.xlane.xlu0 %674
    %v676 = vsel %vm555, %v637, 0.0
    %677 = vadd.xlane.f32.xlu0 %v676
    %v678 = vpop.xlane.xlu0 %677
    %v679 = vsel %vm555, %v639, 0.0
    %680 = vadd.xlane.f32.xlu0 %v679
    %v681 = vpop.xlane.xlu0 %680
    %v682 = vsel %vm555, %v641, 0.0
    %683 = vadd.xlane.f32.xlu0 %v682
    %v684 = vpop.xlane.xlu0 %683
    %v685 = vsel %vm555, %v643, 0.0
    %686 = vadd.xlane.f32.xlu0 %v685
    %v687 = vpop.xlane.xlu0 %686
    %v688 = vsel %vm555, %v645, 0.0
    %689 = vadd.xlane.f32.xlu0 %v688
    %v690 = vpop.xlane.xlu0 %689
    %v691 = vsel %vm555, %v647, 0.0
    %692 = vadd.xlane.f32.xlu0 %v691
    %v693 = vpop.xlane.xlu0 %692
    %v694 = vsel %vm555, %v649, 0.0
    %695 = vadd.xlane.f32.xlu0 %v694
    %v696 = vpop.xlane.xlu0 %695
    %v697 = vsel %vm555, %v651, 0.0
    %698 = vadd.xlane.f32.xlu0 %v697
    %v699 = vpop.xlane.xlu0 %698
    %v700 = vrcp.pop %v654
    %v701 = vrcp.pop %v657
    %v702 = vrcp.pop %v660
    %v703 = vrcp.pop %v663
    %v704 = vrcp.pop %v666
    %v705 = vrcp.pop %v669
    %v706 = vrcp.pop %v672
    %v707 = vrcp.pop %v675
    %v708 = vrcp.pop %v678
    %v709 = vrcp.pop %v681
    %v710 = vrcp.pop %v684
    %v711 = vrcp.pop %v687
    %v712 = vrcp.pop %v690
    %v713 = vrcp.pop %v693
    %v714 = vrcp.pop %v696
    %v715 = vrcp.pop %v699
    %v716 = vmul.f32 %v621, %v700
    %v717 = vmul.f32 %v623, %v701
    %v718 = vmul.f32 %v625, %v702
    %v719 = vmul.f32 %v627, %v703
    %v720 = vmul.f32 %v629, %v704
    %v721 = vmul.f32 %v631, %v705
    %v722 = vmul.f32 %v633, %v706
    %v723 = vmul.f32 %v635, %v707
    %v724 = vmul.f32 %v637, %v708
    %v725 = vmul.f32 %v639, %v709
    %v726 = vmul.f32 %v641, %v710
    %v727 = vmul.f32 %v643, %v711
    %v728 = vmul.f32 %v645, %v712
    %v729 = vmul.f32 %v647, %v713
    %v730 = vmul.f32 %v649, %v714
    %v731 = vmul.f32 %v651, %v715
    %v733 = vsel %vm555, %v716, 0
    %v736 = vsel %vm555, %v717, 0
    %738 = vmatprep.subr.mxu0 0.0
    %739 = vmatpush1.msra.mxu0 %v281
    %740 = vmatprep.subr.mxu0 0.0
    %741 = vmatpush1.msra.mxu0 %v282
    %742 = vmatprep.subr.mxu0 0.0
    %743 = vmatpush1.msra.mxu0 0.0
    %744 = vmatprep.subr.mxu0 0.0
    %745 = vmatpush1.msra.mxu0 0.0
    %746 = vmatprep.subr.mxu0 0.0
    %747 = vmatpush1.msra.mxu0 0.0
    %748 = vmatprep.subr.mxu0 0.0
    %749 = vmatpush1.msra.mxu0 0.0
    %750 = vmatprep.subr.mxu0 0.0
    %751 = vmatpush1.msra.mxu0 0.0
    %752 = vmatprep.subr.mxu0 0.0
    %753 = vmatpush1.msra.mxu0 0.0
    %754 = vmatprep.subr.mxu0 0.0
    %755 = vmatpush1.msra.mxu0 0.0
    %756 = vmatprep.subr.mxu0 0.0
    %757 = vmatpush1.msra.mxu0 0.0
    %758 = vmatprep.subr.mxu0 0.0
    %759 = vmatpush1.msra.mxu0 0.0
    %760 = vmatprep.subr.mxu0 0.0
    %761 = vmatpush1.msra.mxu0 0.0
    %762 = vmatprep.subr.mxu0 0.0
    %763 = vmatpush1.msra.mxu0 0.0
    %764 = vmatprep.subr.mxu0 0.0
    %765 = vmatpush1.msra.mxu0 0.0
    %766 = vmatprep.subr.mxu0 0.0
    %767 = vmatpush1.msra.mxu0 0.0
    %768 = vmatprep.subr.mxu0 0.0
    %769 = vmatpush1.msra.mxu0 0.0
    %770 = vmatprep.subr.mxu0 0.0
    %771 = vmatpush1.msra.mxu0 0.0
    %772 = vmatprep.subr.mxu0 0.0
    %773 = vmatpush1.msra.mxu0 0.0
    %774 = vmatprep.subr.mxu0 0.0
    %775 = vmatpush1.msra.mxu0 0.0
    %776 = vmatprep.subr.mxu0 0.0
    %777 = vmatpush1.msra.mxu0 0.0
    %778 = vmatprep.subr.mxu0 0.0
    %779 = vmatpush1.msra.mxu0 0.0
    %780 = vmatprep.subr.mxu0 0.0
    %781 = vmatpush1.msra.mxu0 0.0
    %782 = vmatprep.subr.mxu0 0.0
    %783 = vmatpush1.msra.mxu0 0.0
    %784 = vmatprep.subr.mxu0 0.0
    %785 = vmatpush1.msra.mxu0 0.0
    %786 = vmatprep.subr.mxu0 0.0
    %787 = vmatpush1.msra.mxu0 0.0
    %788 = vmatprep.subr.mxu0 0.0
    %789 = vmatpush1.msra.mxu0 0.0
    %790 = vmatprep.subr.mxu0 0.0
    %791 = vmatpush1.msra.mxu0 0.0
    %792 = vmatprep.subr.mxu0 0.0
    %793 = vmatpush1.msra.mxu0 0.0
    %794 = vmatprep.subr.mxu0 0.0
    %795 = vmatpush1.msra.mxu0 0.0
    %796 = vmatprep.subr.mxu0 0.0
    %797 = vmatpush1.msra.mxu0 0.0
    %798 = vmatprep.subr.mxu0 0.0
    %799 = vmatpush1.msra.mxu0 0.0
    %800 = vmatprep.subr.mxu0 0.0
    %801 = vmatpush1.msra.mxu0 0.0
    %802 = vmatprep.mubr.f32.mxu0 0.0
    %803 = vmatmul.mubr.f32.gmra.mrb[0].mxu0 %v733
    %v804 = vpop.f32.mrb[0].mxu0
    %v805 = vadd.f32 0.0, %v804
    %v806 = vpop.f32.mrb[0].mxu0
    %807 = vmatprep.mubr.f32.mxu0 0.0
    %808 = vmatmul.mubr.f32.gmra.mrb[0].mxu0 %v736
    %v809 = vpop.f32.mrb[0].mxu0
    %v810 = vadd.f32 0.0, %v809
    %v811 = vpop.f32.mrb[0].mxu0
    %812 = vdwg.mxu0
    %v814 = vsel %vm555, %v718, 0
    %v817 = vsel %vm555, %v719, 0
    %819 = vmatprep.subr.mxu0 0.0
    %820 = vmatpush1.msra.mxu0 %v283
    %821 = vmatprep.subr.mxu0 0.0
    %822 = vmatpush1.msra.mxu0 %v284
    %823 = vmatprep.subr.mxu0 0.0
    %824 = vmatpush1.msra.mxu0 0.0
    %825 = vmatprep.subr.mxu0 0.0
    %826 = vmatpush1.msra.mxu0 0.0
    %827 = vmatprep.subr.mxu0 0.0
    %828 = vmatpush1.msra.mxu0 0.0
    %829 = vmatprep.subr.mxu0 0.0
    %830 = vmatpush1.msra.mxu0 0.0
    %831 = vmatprep.subr.mxu0 0.0
    %832 = vmatpush1.msra.mxu0 0.0
    %833 = vmatprep.subr.mxu0 0.0
    %834 = vmatpush1.msra.mxu0 0.0
    %835 = vmatprep.subr.mxu0 0.0
    %836 = vmatpush1.msra.mxu0 0.0
    %837 = vmatprep.subr.mxu0 0.0
    %838 = vmatpush1.msra.mxu0 0.0
    %839 = vmatprep.subr.mxu0 0.0
    %840 = vmatpush1.msra.mxu0 0.0
    %841 = vmatprep.subr.mxu0 0.0
    %842 = vmatpush1.msra.mxu0 0.0
    %843 = vmatprep.subr.mxu0 0.0
    %844 = vmatpush1.msra.mxu0 0.0
    %845 = vmatprep.subr.mxu0 0.0
    %846 = vmatpush1.msra.mxu0 0.0
    %847 = vmatprep.subr.mxu0 0.0
    %848 = vmatpush1.msra.mxu0 0.0
    %849 = vmatprep.subr.mxu0 0.0
    %850 = vmatpush1.msra.mxu0 0.0
    %851 = vmatprep.subr.mxu0 0.0
    %852 = vmatpush1.msra.mxu0 0.0
    %853 = vmatprep.subr.mxu0 0.0
    %854 = vmatpush1.msra.mxu0 0.0
    %855 = vmatprep.subr.mxu0 0.0
    %856 = vmatpush1.msra.mxu0 0.0
    %857 = vmatprep.subr.mxu0 0.0
    %858 = vmatpush1.msra.mxu0 0.0
    %859 = vmatprep.subr.mxu0 0.0
    %860 = vmatpush1.msra.mxu0 0.0
    %861 = vmatprep.subr.mxu0 0.0
    %862 = vmatpush1.msra.mxu0 0.0
    %863 = vmatprep.subr.mxu0 0.0
    %864 = vmatpush1.msra.mxu0 0.0
    %865 = vmatprep.subr.mxu0 0.0
    %866 = vmatpush1.msra.mxu0 0.0
    %867 = vmatprep.subr.mxu0 0.0
    %868 = vmatpush1.msra.mxu0 0.0
    %869 = vmatprep.subr.mxu0 0.0
    %870 = vmatpush1.msra.mxu0 0.0
    %871 = vmatprep.subr.mxu0 0.0
    %872 = vmatpush1.msra.mxu0 0.0
    %873 = vmatprep.subr.mxu0 0.0
    %874 = vmatpush1.msra.mxu0 0.0
    %875 = vmatprep.subr.mxu0 0.0
    %876 = vmatpush1.msra.mxu0 0.0
    %877 = vmatprep.subr.mxu0 0.0
    %878 = vmatpush1.msra.mxu0 0.0
    %879 = vmatprep.subr.mxu0 0.0
    %880 = vmatpush1.msra.mxu0 0.0
    %881 = vmatprep.subr.mxu0 0.0
    %882 = vmatpush1.msra.mxu0 0.0
    %883 = vmatprep.mubr.f32.mxu0 0.0
    %884 = vmatmul.mubr.f32.gmra.mrb[0].mxu0 %v814
    %v885 = vpop.f32.mrb[0].mxu0
    %v886 = vadd.f32 0.0, %v885
    %v887 = vpop.f32.mrb[0].mxu0
    %888 = vmatprep.mubr.f32.mxu0 0.0
    %889 = vmatmul.mubr.f32.gmra.mrb[0].mxu0 %v817
    %v890 = vpop.f32.mrb[0].mxu0
    %v891 = vadd.f32 0.0, %v890
    %v892 = vpop.f32.mrb[0].mxu0
    %893 = vdwg.mxu0
    %v895 = vsel %vm555, %v720, 0
    %v898 = vsel %vm555, %v721, 0
    %900 = vmatprep.subr.mxu0 0.0
    %901 = vmatpush1.msra.mxu0 %v285
    %902 = vmatprep.subr.mxu0 0.0
    %903 = vmatpush1.msra.mxu0 %v286
    %904 = vmatprep.subr.mxu0 0.0
    %905 = vmatpush1.msra.mxu0 0.0
    %906 = vmatprep.subr.mxu0 0.0
    %907 = vmatpush1.msra.mxu0 0.0
    %908 = vmatprep.subr.mxu0 0.0
    %909 = vmatpush1.msra.mxu0 0.0
    %910 = vmatprep.subr.mxu0 0.0
    %911 = vmatpush1.msra.mxu0 0.0
    %912 = vmatprep.subr.mxu0 0.0
    %913 = vmatpush1.msra.mxu0 0.0
    %914 = vmatprep.subr.mxu0 0.0
    %915 = vmatpush1.msra.mxu0 0.0
    %916 = vmatprep.subr.mxu0 0.0
    %917 = vmatpush1.msra.mxu0 0.0
    %918 = vmatprep.subr.mxu0 0.0
    %919 = vmatpush1.msra.mxu0 0.0
    %920 = vmatprep.subr.mxu0 0.0
    %921 = vmatpush1.msra.mxu0 0.0
    %922 = vmatprep.subr.mxu0 0.0
    %923 = vmatpush1.msra.mxu0 0.0
    %924 = vmatprep.subr.mxu0 0.0
    %925 = vmatpush1.msra.mxu0 0.0
    %926 = vmatprep.subr.mxu0 0.0
    %927 = vmatpush1.msra.mxu0 0.0
    %928 = vmatprep.subr.mxu0 0.0
    %929 = vmatpush1.msra.mxu0 0.0
    %930 = vmatprep.subr.mxu0 0.0
    %931 = vmatpush1.msra.mxu0 0.0
    %932 = vmatprep.subr.mxu0 0.0
    %933 = vmatpush1.msra.mxu0 0.0
    %934 = vmatprep.subr.mxu0 0.0
    %935 = vmatpush1.msra.mxu0 0.0
    %936 = vmatprep.subr.mxu0 0.0
    %937 = vmatpush1.msra.mxu0 0.0
    %938 = vmatprep.subr.mxu0 0.0
    %939 = vmatpush1.msra.mxu0 0.0
    %940 = vmatprep.subr.mxu0 0.0
    %941 = vmatpush1.msra.mxu0 0.0
    %942 = vmatprep.subr.mxu0 0.0
    %943 = vmatpush1.msra.mxu0 0.0
    %944 = vmatprep.subr.mxu0 0.0
    %945 = vmatpush1.msra.mxu0 0.0
    %946 = vmatprep.subr.mxu0 0.0
    %947 = vmatpush1.msra.mxu0 0.0
    %948 = vmatprep.subr.mxu0 0.0
    %949 = vmatpush1.msra.mxu0 0.0
    %950 = vmatprep.subr.mxu0 0.0
    %951 = vmatpush1.msra.mxu0 0.0
    %952 = vmatprep.subr.mxu0 0.0
    %953 = vmatpush1.msra.mxu0 0.0
    %954 = vmatprep.subr.mxu0 0.0
    %955 = vmatpush1.msra.mxu0 0.0
    %956 = vmatprep.subr.mxu0 0.0
    %957 = vmatpush1.msra.mxu0 0.0
    %958 = vmatprep.subr.mxu0 0.0
    %959 = vmatpush1.msra.mxu0 0.0
    %960 = vmatprep.subr.mxu0 0.0
    %961 = vmatpush1.msra.mxu0 0.0
    %962 = vmatprep.subr.mxu0 0.0
    %963 = vmatpush1.msra.mxu0 0.0
    %964 = vmatprep.mubr.f32.mxu0 0.0
    %965 = vmatmul.mubr.f32.gmra.mrb[0].mxu0 %v895
    %v966 = vpop.f32.mrb[0].mxu0
    %v967 = vadd.f32 0.0, %v966
    %v968 = vpop.f32.mrb[0].mxu0
    %969 = vmatprep.mubr.f32.mxu0 0.0
    %970 = vmatmul.mubr.f32.gmra.mrb[0].mxu0 %v898
    %v971 = vpop.f32.mrb[0].mxu0
    %v972 = vadd.f32 0.0, %v971
    %v973 = vpop.f32.mrb[0].mxu0
    %974 = vdwg.mxu0
    %v976 = vsel %vm555, %v722, 0
    %v979 = vsel %vm555, %v723, 0
    %981 = vmatprep.subr.mxu0 0.0
    %982 = vmatpush1.msra.mxu0 %v287
    %983 = vmatprep.subr.mxu0 0.0
    %984 = vmatpush1.msra.mxu0 %v288
    %985 = vmatprep.subr.mxu0 0.0
    %986 = vmatpush1.msra.mxu0 0.0
    %987 = vmatprep.subr.mxu0 0.0
    %988 = vmatpush1.msra.mxu0 0.0
    %989 = vmatprep.subr.mxu0 0.0
    %990 = vmatpush1.msra.mxu0 0.0
    %991 = vmatprep.subr.mxu0 0.0
    %992 = vmatpush1.msra.mxu0 0.0
    %993 = vmatprep.subr.mxu0 0.0
    %994 = vmatpush1.msra.mxu0 0.0
    %995 = vmatprep.subr.mxu0 0.0
    %996 = vmatpush1.msra.mxu0 0.0
    %997 = vmatprep.subr.mxu0 0.0
    %998 = vmatpush1.msra.mxu0 0.0
    %999 = vmatprep.subr.mxu0 0.0
    %1000 = vmatpush1.msra.mxu0 0.0
    %1001 = vmatprep.subr.mxu0 0.0
    %1002 = vmatpush1.msra.mxu0 0.0
    %1003 = vmatprep.subr.mxu0 0.0
    %1004 = vmatpush1.msra.mxu0 0.0
    %1005 = vmatprep.subr.mxu0 0.0
    %1006 = vmatpush1.msra.mxu0 0.0
    %1007 = vmatprep.subr.mxu0 0.0
    %1008 = vmatpush1.msra.mxu0 0.0
    %1009 = vmatprep.subr.mxu0 0.0
    %1010 = vmatpush1.msra.mxu0 0.0
    %1011 = vmatprep.subr.mxu0 0.0
    %1012 = vmatpush1.msra.mxu0 0.0
    %1013 = vmatprep.subr.mxu0 0.0
    %1014 = vmatpush1.msra.mxu0 0.0
    %1015 = vmatprep.subr.mxu0 0.0
    %1016 = vmatpush1.msra.mxu0 0.0
    %1017 = vmatprep.subr.mxu0 0.0
    %1018 = vmatpush1.msra.mxu0 0.0
    %1019 = vmatprep.subr.mxu0 0.0
    %1020 = vmatpush1.msra.mxu0 0.0
    %1021 = vmatprep.subr.mxu0 0.0
    %1022 = vmatpush1.msra.mxu0 0.0
    %1023 = vmatprep.subr.mxu0 0.0
    %1024 = vmatpush1.msra.mxu0 0.0
    %1025 = vmatprep.subr.mxu0 0.0
    %1026 = vmatpush1.msra.mxu0 0.0
    %1027 = vmatprep.subr.mxu0 0.0
    %1028 = vmatpush1.msra.mxu0 0.0
    %1029 = vmatprep.subr.mxu0 0.0
    %1030 = vmatpush1.msra.mxu0 0.0
    %1031 = vmatprep.subr.mxu0 0.0
    %1032 = vmatpush1.msra.mxu0 0.0
    %1033 = vmatprep.subr.mxu0 0.0
    %1034 = vmatpush1.msra.mxu0 0.0
    %1035 = vmatprep.subr.mxu0 0.0
    %1036 = vmatpush1.msra.mxu0 0.0
    %1037 = vmatprep.subr.mxu0 0.0
    %1038 = vmatpush1.msra.mxu0 0.0
    %1039 = vmatprep.subr.mxu0 0.0
    %1040 = vmatpush1.msra.mxu0 0.0
    %1041 = vmatprep.subr.mxu0 0.0
    %1042 = vmatpush1.msra.mxu0 0.0
    %1043 = vmatprep.subr.mxu0 0.0
    %1044 = vmatpush1.msra.mxu0 0.0
    %1045 = vmatprep.mubr.f32.mxu0 0.0
    %1046 = vmatmul.mubr.f32.gmra.mrb[0].mxu0 %v976
    %v1047 = vpop.f32.mrb[0].mxu0
    %v1048 = vadd.f32 0.0, %v1047
    %v1049 = vpop.f32.mrb[0].mxu0
    %1050 = vmatprep.mubr.f32.mxu0 0.0
    %1051 = vmatmul.mubr.f32.gmra.mrb[0].mxu0 %v979
    %v1052 = vpop.f32.mrb[0].mxu0
    %v1053 = vadd.f32 0.0, %v1052
    %v1054 = vpop.f32.mrb[0].mxu0
    %1055 = vdwg.mxu0
    %v1057 = vsel %vm555, %v724, 0
    %v1060 = vsel %vm555, %v725, 0
    %1062 = vmatprep.subr.mxu0 0.0
    %1063 = vmatpush1.msra.mxu0 %v289
    %1064 = vmatprep.subr.mxu0 0.0
    %1065 = vmatpush1.msra.mxu0 %v290
    %1066 = vmatprep.subr.mxu0 0.0
    %1067 = vmatpush1.msra.mxu0 0.0
    %1068 = vmatprep.subr.mxu0 0.0
    %1069 = vmatpush1.msra.mxu0 0.0
    %1070 = vmatprep.subr.mxu0 0.0
    %1071 = vmatpush1.msra.mxu0 0.0
    %1072 = vmatprep.subr.mxu0 0.0
    %1073 = vmatpush1.msra.mxu0 0.0
    %1074 = vmatprep.subr.mxu0 0.0
    %1075 = vmatpush1.msra.mxu0 0.0
    %1076 = vmatprep.subr.mxu0 0.0
    %1077 = vmatpush1.msra.mxu0 0.0
    %1078 = vmatprep.subr.mxu0 0.0
    %1079 = vmatpush1.msra.mxu0 0.0
    %1080 = vmatprep.subr.mxu0 0.0
    %1081 = vmatpush1.msra.mxu0 0.0
    %1082 = vmatprep.subr.mxu0 0.0
    %1083 = vmatpush1.msra.mxu0 0.0
    %1084 = vmatprep.subr.mxu0 0.0
    %1085 = vmatpush1.msra.mxu0 0.0
    %1086 = vmatprep.subr.mxu0 0.0
    %1087 = vmatpush1.msra.mxu0 0.0
    %1088 = vmatprep.subr.mxu0 0.0
    %1089 = vmatpush1.msra.mxu0 0.0
    %1090 = vmatprep.subr.mxu0 0.0
    %1091 = vmatpush1.msra.mxu0 0.0
    %1092 = vmatprep.subr.mxu0 0.0
    %1093 = vmatpush1.msra.mxu0 0.0
    %1094 = vmatprep.subr.mxu0 0.0
    %1095 = vmatpush1.msra.mxu0 0.0
    %1096 = vmatprep.subr.mxu0 0.0
    %1097 = vmatpush1.msra.mxu0 0.0
    %1098 = vmatprep.subr.mxu0 0.0
    %1099 = vmatpush1.msra.mxu0 0.0
    %1100 = vmatprep.subr.mxu0 0.0
    %1101 = vmatpush1.msra.mxu0 0.0
    %1102 = vmatprep.subr.mxu0 0.0
    %1103 = vmatpush1.msra.mxu0 0.0
    %1104 = vmatprep.subr.mxu0 0.0
    %1105 = vmatpush1.msra.mxu0 0.0
    %1106 = vmatprep.subr.mxu0 0.0
    %1107 = vmatpush1.msra.mxu0 0.0
    %1108 = vmatprep.subr.mxu0 0.0
    %1109 = vmatpush1.msra.mxu0 0.0
    %1110 = vmatprep.subr.mxu0 0.0
    %1111 = vmatpush1.msra.mxu0 0.0
    %1112 = vmatprep.subr.mxu0 0.0
    %1113 = vmatpush1.msra.mxu0 0.0
    %1114 = vmatprep.subr.mxu0 0.0
    %1115 = vmatpush1.msra.mxu0 0.0
    %1116 = vmatprep.subr.mxu0 0.0
    %1117 = vmatpush1.msra.mxu0 0.0
    %1118 = vmatprep.subr.mxu0 0.0
    %1119 = vmatpush1.msra.mxu0 0.0
    %1120 = vmatprep.subr.mxu0 0.0
    %1121 = vmatpush1.msra.mxu0 0.0
    %1122 = vmatprep.subr.mxu0 0.0
    %1123 = vmatpush1.msra.mxu0 0.0
    %1124 = vmatprep.subr.mxu0 0.0
    %1125 = vmatpush1.msra.mxu0 0.0
    %1126 = vmatprep.mubr.f32.mxu0 0.0
    %1127 = vmatmul.mubr.f32.gmra.mrb[0].mxu0 %v1057
    %v1128 = vpop.f32.mrb[0].mxu0
    %v1129 = vadd.f32 0.0, %v1128
    %v1130 = vpop.f32.mrb[0].mxu0
    %1131 = vmatprep.mubr.f32.mxu0 0.0
    %1132 = vmatmul.mubr.f32.gmra.mrb[0].mxu0 %v1060
    %v1133 = vpop.f32.mrb[0].mxu0
    %v1134 = vadd.f32 0.0, %v1133
    %v1135 = vpop.f32.mrb[0].mxu0
    %1136 = vdwg.mxu0
    %v1138 = vsel %vm555, %v726, 0
    %v1141 = vsel %vm555, %v727, 0
    %1143 = vmatprep.subr.mxu0 0.0
    %1144 = vmatpush1.msra.mxu0 %v291
    %1145 = vmatprep.subr.mxu0 0.0
    %1146 = vmatpush1.msra.mxu0 %v292
    %1147 = vmatprep.subr.mxu0 0.0
    %1148 = vmatpush1.msra.mxu0 0.0
    %1149 = vmatprep.subr.mxu0 0.0
    %1150 = vmatpush1.msra.mxu0 0.0
    %1151 = vmatprep.subr.mxu0 0.0
    %1152 = vmatpush1.msra.mxu0 0.0
    %1153 = vmatprep.subr.mxu0 0.0
    %1154 = vmatpush1.msra.mxu0 0.0
    %1155 = vmatprep.subr.mxu0 0.0
    %1156 = vmatpush1.msra.mxu0 0.0
    %1157 = vmatprep.subr.mxu0 0.0
    %1158 = vmatpush1.msra.mxu0 0.0
    %1159 = vmatprep.subr.mxu0 0.0
    %1160 = vmatpush1.msra.mxu0 0.0
    %1161 = vmatprep.subr.mxu0 0.0
    %1162 = vmatpush1.msra.mxu0 0.0
    %1163 = vmatprep.subr.mxu0 0.0
    %1164 = vmatpush1.msra.mxu0 0.0
    %1165 = vmatprep.subr.mxu0 0.0
    %1166 = vmatpush1.msra.mxu0 0.0
    %1167 = vmatprep.subr.mxu0 0.0
    %1168 = vmatpush1.msra.mxu0 0.0
    %1169 = vmatprep.subr.mxu0 0.0
    %1170 = vmatpush1.msra.mxu0 0.0
    %1171 = vmatprep.subr.mxu0 0.0
    %1172 = vmatpush1.msra.mxu0 0.0
    %1173 = vmatprep.subr.mxu0 0.0
    %1174 = vmatpush1.msra.mxu0 0.0
    %1175 = vmatprep.subr.mxu0 0.0
    %1176 = vmatpush1.msra.mxu0 0.0
    %1177 = vmatprep.subr.mxu0 0.0
    %1178 = vmatpush1.msra.mxu0 0.0
    %1179 = vmatprep.subr.mxu0 0.0
    %1180 = vmatpush1.msra.mxu0 0.0
    %1181 = vmatprep.subr.mxu0 0.0
    %1182 = vmatpush1.msra.mxu0 0.0
    %1183 = vmatprep.subr.mxu0 0.0
    %1184 = vmatpush1.msra.mxu0 0.0
    %1185 = vmatprep.subr.mxu0 0.0
    %1186 = vmatpush1.msra.mxu0 0.0
    %1187 = vmatprep.subr.mxu0 0.0
    %1188 = vmatpush1.msra.mxu0 0.0
    %1189 = vmatprep.subr.mxu0 0.0
    %1190 = vmatpush1.msra.mxu0 0.0
    %1191 = vmatprep.subr.mxu0 0.0
    %1192 = vmatpush1.msra.mxu0 0.0
    %1193 = vmatprep.subr.mxu0 0.0
    %1194 = vmatpush1.msra.mxu0 0.0
    %1195 = vmatprep.subr.mxu0 0.0
    %1196 = vmatpush1.msra.mxu0 0.0
    %1197 = vmatprep.subr.mxu0 0.0
    %1198 = vmatpush1.msra.mxu0 0.0
    %1199 = vmatprep.subr.mxu0 0.0
    %1200 = vmatpush1.msra.mxu0 0.0
    %1201 = vmatprep.subr.mxu0 0.0
    %1202 = vmatpush1.msra.mxu0 0.0
    %1203 = vmatprep.subr.mxu0 0.0
    %1204 = vmatpush1.msra.mxu0 0.0
    %1205 = vmatprep.subr.mxu0 0.0
    %1206 = vmatpush1.msra.mxu0 0.0
    %1207 = vmatprep.mubr.f32.mxu0 0.0
    %1208 = vmatmul.mubr.f32.gmra.mrb[0].mxu0 %v1138
    %v1209 = vpop.f32.mrb[0].mxu0
    %v1210 = vadd.f32 0.0, %v1209
    %v1211 = vpop.f32.mrb[0].mxu0
    %1212 = vmatprep.mubr.f32.mxu0 0.0
    %1213 = vmatmul.mubr.f32.gmra.mrb[0].mxu0 %v1141
    %v1214 = vpop.f32.mrb[0].mxu0
    %v1215 = vadd.f32 0.0, %v1214
    %v1216 = vpop.f32.mrb[0].mxu0
    %1217 = vdwg.mxu0
    %v1219 = vsel %vm555, %v728, 0
    %v1222 = vsel %vm555, %v729, 0
    %1224 = vmatprep.subr.mxu0 0.0
    %1225 = vmatpush1.msra.mxu0 %v293
    %1226 = vmatprep.subr.mxu0 0.0
    %1227 = vmatpush1.msra.mxu0 %v294
    %1228 = vmatprep.subr.mxu0 0.0
    %1229 = vmatpush1.msra.mxu0 0.0
    %1230 = vmatprep.subr.mxu0 0.0
    %1231 = vmatpush1.msra.mxu0 0.0
    %1232 = vmatprep.subr.mxu0 0.0
    %1233 = vmatpush1.msra.mxu0 0.0
    %1234 = vmatprep.subr.mxu0 0.0
    %1235 = vmatpush1.msra.mxu0 0.0
    %1236 = vmatprep.subr.mxu0 0.0
    %1237 = vmatpush1.msra.mxu0 0.0
    %1238 = vmatprep.subr.mxu0 0.0
    %1239 = vmatpush1.msra.mxu0 0.0
    %1240 = vmatprep.subr.mxu0 0.0
    %1241 = vmatpush1.msra.mxu0 0.0
    %1242 = vmatprep.subr.mxu0 0.0
    %1243 = vmatpush1.msra.mxu0 0.0
    %1244 = vmatprep.subr.mxu0 0.0
    %1245 = vmatpush1.msra.mxu0 0.0
    %1246 = vmatprep.subr.mxu0 0.0
    %1247 = vmatpush1.msra.mxu0 0.0
    %1248 = vmatprep.subr.mxu0 0.0
    %1249 = vmatpush1.msra.mxu0 0.0
    %1250 = vmatprep.subr.mxu0 0.0
    %1251 = vmatpush1.msra.mxu0 0.0
    %1252 = vmatprep.subr.mxu0 0.0
    %1253 = vmatpush1.msra.mxu0 0.0
    %1254 = vmatprep.subr.mxu0 0.0
    %1255 = vmatpush1.msra.mxu0 0.0
    %1256 = vmatprep.subr.mxu0 0.0
    %1257 = vmatpush1.msra.mxu0 0.0
    %1258 = vmatprep.subr.mxu0 0.0
    %1259 = vmatpush1.msra.mxu0 0.0
    %1260 = vmatprep.subr.mxu0 0.0
    %1261 = vmatpush1.msra.mxu0 0.0
    %1262 = vmatprep.subr.mxu0 0.0
    %1263 = vmatpush1.msra.mxu0 0.0
    %1264 = vmatprep.subr.mxu0 0.0
    %1265 = vmatpush1.msra.mxu0 0.0
    %1266 = vmatprep.subr.mxu0 0.0
    %1267 = vmatpush1.msra.mxu0 0.0
    %1268 = vmatprep.subr.mxu0 0.0
    %1269 = vmatpush1.msra.mxu0 0.0
    %1270 = vmatprep.subr.mxu0 0.0
    %1271 = vmatpush1.msra.mxu0 0.0
    %1272 = vmatprep.subr.mxu0 0.0
    %1273 = vmatpush1.msra.mxu0 0.0
    %1274 = vmatprep.subr.mxu0 0.0
    %1275 = vmatpush1.msra.mxu0 0.0
    %1276 = vmatprep.subr.mxu0 0.0
    %1277 = vmatpush1.msra.mxu0 0.0
    %1278 = vmatprep.subr.mxu0 0.0
    %1279 = vmatpush1.msra.mxu0 0.0
    %1280 = vmatprep.subr.mxu0 0.0
    %1281 = vmatpush1.msra.mxu0 0.0
    %1282 = vmatprep.subr.mxu0 0.0
    %1283 = vmatpush1.msra.mxu0 0.0
    %1284 = vmatprep.subr.mxu0 0.0
    %1285 = vmatpush1.msra.mxu0 0.0
    %1286 = vmatprep.subr.mxu0 0.0
    %1287 = vmatpush1.msra.mxu0 0.0
    %1288 = vmatprep.mubr.f32.mxu0 0.0
    %1289 = vmatmul.mubr.f32.gmra.mrb[0].mxu0 %v1219
    %v1290 = vpop.f32.mrb[0].mxu0
    %v1291 = vadd.f32 0.0, %v1290
    %v1292 = vpop.f32.mrb[0].mxu0
    %1293 = vmatprep.mubr.f32.mxu0 0.0
    %1294 = vmatmul.mubr.f32.gmra.mrb[0].mxu0 %v1222
    %v1295 = vpop.f32.mrb[0].mxu0
    %v1296 = vadd.f32 0.0, %v1295
    %v1297 = vpop.f32.mrb[0].mxu0
    %1298 = vdwg.mxu0
    %v1300 = vsel %vm555, %v730, 0
    %v1303 = vsel %vm555, %v731, 0
    %1305 = vmatprep.subr.mxu0 0.0
    %1306 = vmatpush1.msra.mxu0 %v295
    %1307 = vmatprep.subr.mxu0 0.0
    %1308 = vmatpush1.msra.mxu0 %v296
    %1309 = vmatprep.subr.mxu0 0.0
    %1310 = vmatpush1.msra.mxu0 0.0
    %1311 = vmatprep.subr.mxu0 0.0
    %1312 = vmatpush1.msra.mxu0 0.0
    %1313 = vmatprep.subr.mxu0 0.0
    %1314 = vmatpush1.msra.mxu0 0.0
    %1315 = vmatprep.subr.mxu0 0.0
    %1316 = vmatpush1.msra.mxu0 0.0
    %1317 = vmatprep.subr.mxu0 0.0
    %1318 = vmatpush1.msra.mxu0 0.0
    %1319 = vmatprep.subr.mxu0 0.0
    %1320 = vmatpush1.msra.mxu0 0.0
    %1321 = vmatprep.subr.mxu0 0.0
    %1322 = vmatpush1.msra.mxu0 0.0
    %1323 = vmatprep.subr.mxu0 0.0
    %1324 = vmatpush1.msra.mxu0 0.0
    %1325 = vmatprep.subr.mxu0 0.0
    %1326 = vmatpush1.msra.mxu0 0.0
    %1327 = vmatprep.subr.mxu0 0.0
    %1328 = vmatpush1.msra.mxu0 0.0
    %1329 = vmatprep.subr.mxu0 0.0
    %1330 = vmatpush1.msra.mxu0 0.0
    %1331 = vmatprep.subr.mxu0 0.0
    %1332 = vmatpush1.msra.mxu0 0.0
    %1333 = vmatprep.subr.mxu0 0.0
    %1334 = vmatpush1.msra.mxu0 0.0
    %1335 = vmatprep.subr.mxu0 0.0
    %1336 = vmatpush1.msra.mxu0 0.0
    %1337 = vmatprep.subr.mxu0 0.0
    %1338 = vmatpush1.msra.mxu0 0.0
    %1339 = vmatprep.subr.mxu0 0.0
    %1340 = vmatpush1.msra.mxu0 0.0
    %1341 = vmatprep.subr.mxu0 0.0
    %1342 = vmatpush1.msra.mxu0 0.0
    %1343 = vmatprep.subr.mxu0 0.0
    %1344 = vmatpush1.msra.mxu0 0.0
    %1345 = vmatprep.subr.mxu0 0.0
    %1346 = vmatpush1.msra.mxu0 0.0
    %1347 = vmatprep.subr.mxu0 0.0
    %1348 = vmatpush1.msra.mxu0 0.0
    %1349 = vmatprep.subr.mxu0 0.0
    %1350 = vmatpush1.msra.mxu0 0.0
    %1351 = vmatprep.subr.mxu0 0.0
    %1352 = vmatpush1.msra.mxu0 0.0
    %1353 = vmatprep.subr.mxu0 0.0
    %1354 = vmatpush1.msra.mxu0 0.0
    %1355 = vmatprep.subr.mxu0 0.0
    %1356 = vmatpush1.msra.mxu0 0.0
    %1357 = vmatprep.subr.mxu0 0.0
    %1358 = vmatpush1.msra.mxu0 0.0
    %1359 = vmatprep.subr.mxu0 0.0
    %1360 = vmatpush1.msra.mxu0 0.0
    %1361 = vmatprep.subr.mxu0 0.0
    %1362 = vmatpush1.msra.mxu0 0.0
    %1363 = vmatprep.subr.mxu0 0.0
    %1364 = vmatpush1.msra.mxu0 0.0
    %1365 = vmatprep.subr.mxu0 0.0
    %1366 = vmatpush1.msra.mxu0 0.0
    %1367 = vmatprep.subr.mxu0 0.0
    %1368 = vmatpush1.msra.mxu0 0.0
    %1369 = vmatprep.mubr.f32.mxu0 0.0
    %1370 = vmatmul.mubr.f32.gmra.mrb[0].mxu0 %v1300
    %v1371 = vpop.f32.mrb[0].mxu0
    %v1372 = vadd.f32 0.0, %v1371
    %v1373 = vpop.f32.mrb[0].mxu0
    %1374 = vmatprep.mubr.f32.mxu0 0.0
    %1375 = vmatmul.mubr.f32.gmra.mrb[0].mxu0 %v1303
    %v1376 = vpop.f32.mrb[0].mxu0
    %v1377 = vadd.f32 0.0, %v1376
    %v1378 = vpop.f32.mrb[0].mxu0
    %1379 = vdwg.mxu0
    %v1380 = vsel %vm87, %v805, 0.0
    %v1381 = vsel %vm87, %v886, 0.0
    %v1382 = vadd.f32 %v1380, %v1381
    %v1383 = vsel %vm87, %v967, 0.0
    %v1384 = vadd.f32 %v1382, %v1383
    %v1385 = vsel %vm87, %v1048, 0.0
    %v1386 = vadd.f32 %v1384, %v1385
    %v1387 = vsel %vm87, %v1129, 0.0
    %v1388 = vadd.f32 %v1386, %v1387
    %v1389 = vsel %vm87, %v1210, 0.0
    %v1390 = vadd.f32 %v1388, %v1389
    %v1391 = vsel %vm87, %v1291, 0.0
    %v1392 = vadd.f32 %v1390, %v1391
    %v1393 = vsel %vm87, %v1372, 0.0
    %v1394 = vadd.f32 %v1392, %v1393
    %v1395 = vsel %vm87, %v810, 0.0
    %v1396 = vsel %vm87, %v891, 0.0
    %v1397 = vadd.f32 %v1395, %v1396
    %v1398 = vsel %vm87, %v972, 0.0
    %v1399 = vadd.f32 %v1397, %v1398
    %v1400 = vsel %vm87, %v1053, 0.0
    %v1401 = vadd.f32 %v1399, %v1400
    %v1402 = vsel %vm87, %v1134, 0.0
    %v1403 = vadd.f32 %v1401, %v1402
    %v1404 = vsel %vm87, %v1215, 0.0
    %v1405 = vadd.f32 %v1403, %v1404
    %v1406 = vsel %vm87, %v1296, 0.0
    %v1407 = vadd.f32 %v1405, %v1406
    %v1408 = vsel %vm87, %v1377, 0.0
    %v1409 = vadd.f32 %v1407, %v1408
    %v1410 = vmul.f32 %v244, %v177
    %v1411 = vmul.f32 %v244, %v182
    %v1412 = vmul.f32 %v248, %v177
    %v1413 = vmul.f32 %v248, %v182
    %v1414 = vmul.f32 %v252, %v177
    %v1415 = vmul.f32 %v252, %v182
    %v1416 = vmul.f32 %v256, %v177
    %v1417 = vmul.f32 %v256, %v182
    %v1418 = vmul.f32 %v260, %v177
    %v1419 = vmul.f32 %v260, %v182
    %v1420 = vmul.f32 %v264, %v177
    %v1421 = vmul.f32 %v264, %v182
    %v1422 = vmul.f32 %v268, %v177
    %v1423 = vmul.f32 %v268, %v182
    %v1424 = vmul.f32 %v272, %v177
    %v1425 = vmul.f32 %v272, %v182
    %s1427 = sor.u32 256, 16
    %1428 = vbcast.lane.b32.xlu0 %v300, %s1427
    %v1429 = vpop.permute.xlu0 %1428
    %s1431 = sor.u32 256, 24
    %1432 = vbcast.lane.b32.xlu0 %v300, %s1431
    %v1433 = vpop.permute.xlu0 %1432
    %s1435 = sor.u32 256, 16
    %1436 = vbcast.lane.b32.xlu0 %v311, %s1435
    %v1437 = vpop.permute.xlu0 %1436
    %s1439 = sor.u32 256, 24
    %1440 = vbcast.lane.b32.xlu0 %v311, %s1439
    %v1441 = vpop.permute.xlu0 %1440
    %s1443 = sor.u32 256, 16
    %1444 = vbcast.lane.b32.xlu0 %v322, %s1443
    %v1445 = vpop.permute.xlu0 %1444
    %s1447 = sor.u32 256, 24
    %1448 = vbcast.lane.b32.xlu0 %v322, %s1447
    %v1449 = vpop.permute.xlu0 %1448
    %s1451 = sor.u32 256, 16
    %1452 = vbcast.lane.b32.xlu0 %v333, %s1451
    %v1453 = vpop.permute.xlu0 %1452
    %s1455 = sor.u32 256, 24
    %1456 = vbcast.lane.b32.xlu0 %v333, %s1455
    %v1457 = vpop.permute.xlu0 %1456
    %s1459 = sor.u32 256, 16
    %1460 = vbcast.lane.b32.xlu0 %v344, %s1459
    %v1461 = vpop.permute.xlu0 %1460
    %s1463 = sor.u32 256, 24
    %1464 = vbcast.lane.b32.xlu0 %v344, %s1463
    %v1465 = vpop.permute.xlu0 %1464
    %s1467 = sor.u32 256, 16
    %1468 = vbcast.lane.b32.xlu0 %v355, %s1467
    %v1469 = vpop.permute.xlu0 %1468
    %s1471 = sor.u32 256, 24
    %1472 = vbcast.lane.b32.xlu0 %v355, %s1471
    %v1473 = vpop.permute.xlu0 %1472
    %s1475 = sor.u32 256, 16
    %1476 = vbcast.lane.b32.xlu0 %v366, %s1475
    %v1477 = vpop.permute.xlu0 %1476
    %s1479 = sor.u32 256, 24
    %1480 = vbcast.lane.b32.xlu0 %v366, %s1479
    %v1481 = vpop.permute.xlu0 %1480
    %s1483 = sor.u32 256, 16
    %1484 = vbcast.lane.b32.xlu0 %v377, %s1483
    %v1485 = vpop.permute.xlu0 %1484
    %s1487 = sor.u32 256, 24
    %1488 = vbcast.lane.b32.xlu0 %v377, %s1487
    %v1489 = vpop.permute.xlu0 %1488
    %v1490 = vadd.f32 %v1429, %v438
    %v1491 = vadd.f32 %v1433, %v438
    %v1492 = vadd.f32 %v1437, %v442
    %v1493 = vadd.f32 %v1441, %v442
    %v1494 = vadd.f32 %v1445, %v446
    %v1495 = vadd.f32 %v1449, %v446
    %v1496 = vadd.f32 %v1453, %v450
    %v1497 = vadd.f32 %v1457, %v450
    %v1498 = vadd.f32 %v1461, %v454
    %v1499 = vadd.f32 %v1465, %v454
    %v1500 = vadd.f32 %v1469, %v458
    %v1501 = vadd.f32 %v1473, %v458
    %v1502 = vadd.f32 %v1477, %v462
    %v1503 = vadd.f32 %v1481, %v462
    %v1504 = vadd.f32 %v1485, %v466
    %v1505 = vadd.f32 %v1489, %v466
    %vm1506 = vcmp.gt.f32.partialorder %v1490, 0.0
    %vm1507 = vcmp.gt.f32.partialorder %v1491, 0.0
    %vm1508 = vcmp.gt.f32.partialorder %v1492, 0.0
    %vm1509 = vcmp.gt.f32.partialorder %v1493, 0.0
    %vm1510 = vcmp.gt.f32.partialorder %v1494, 0.0
    %vm1511 = vcmp.gt.f32.partialorder %v1495, 0.0
    %vm1512 = vcmp.gt.f32.partialorder %v1496, 0.0
    %vm1513 = vcmp.gt.f32.partialorder %v1497, 0.0
    %vm1514 = vcmp.gt.f32.partialorder %v1498, 0.0
    %vm1515 = vcmp.gt.f32.partialorder %v1499, 0.0
    %vm1516 = vcmp.gt.f32.partialorder %v1500, 0.0
    %vm1517 = vcmp.gt.f32.partialorder %v1501, 0.0
    %vm1518 = vcmp.gt.f32.partialorder %v1502, 0.0
    %vm1519 = vcmp.gt.f32.partialorder %v1503, 0.0
    %vm1520 = vcmp.gt.f32.partialorder %v1504, 0.0
    %vm1521 = vcmp.gt.f32.partialorder %v1505, 0.0
    %v1522 = vmul.f32 %v1490, 0.2
    %v1523 = vmul.f32 %v1491, 0.2
    %v1524 = vmul.f32 %v1492, 0.2
    %v1525 = vmul.f32 %v1493, 0.2
    %v1526 = vmul.f32 %v1494, 0.2
    %v1527 = vmul.f32 %v1495, 0.2
    %v1528 = vmul.f32 %v1496, 0.2
    %v1529 = vmul.f32 %v1497, 0.2
    %v1530 = vmul.f32 %v1498, 0.2
    %v1531 = vmul.f32 %v1499, 0.2
    %v1532 = vmul.f32 %v1500, 0.2
    %v1533 = vmul.f32 %v1501, 0.2
    %v1534 = vmul.f32 %v1502, 0.2
    %v1535 = vmul.f32 %v1503, 0.2
    %v1536 = vmul.f32 %v1504, 0.2
    %v1537 = vmul.f32 %v1505, 0.2
    %v1538 = vsel %vm1506, %v1490, %v1522
    %v1539 = vsel %vm1507, %v1491, %v1523
    %v1540 = vsel %vm1508, %v1492, %v1524
    %v1541 = vsel %vm1509, %v1493, %v1525
    %v1542 = vsel %vm1510, %v1494, %v1526
    %v1543 = vsel %vm1511, %v1495, %v1527
    %v1544 = vsel %vm1512, %v1496, %v1528
    %v1545 = vsel %vm1513, %v1497, %v1529
    %v1546 = vsel %vm1514, %v1498, %v1530
    %v1547 = vsel %vm1515, %v1499, %v1531
    %v1548 = vsel %vm1516, %v1500, %v1532
    %v1549 = vsel %vm1517, %v1501, %v1533
    %v1550 = vsel %vm1518, %v1502, %v1534
    %v1551 = vsel %vm1519, %v1503, %v1535
    %v1552 = vsel %vm1520, %v1504, %v1536
    %v1553 = vsel %vm1521, %v1505, %v1537
    %1556 = vrot.lane.b32.xlu0 %v68, 16
    %v1557 = vpop.permute.xlu0 %1556
    %1558 = vrot.lane.b32.xlu0 %v69, 16
    %v1559 = vpop.permute.xlu0 %1558
    %v1562 = vadd.f32 %v1538, %v1557
    %v1563 = vadd.f32 %v1539, %v1559
    %v1564 = vadd.f32 %v1540, %v1557
    %v1565 = vadd.f32 %v1541, %v1559
    %v1566 = vadd.f32 %v1542, %v1557
    %v1567 = vadd.f32 %v1543, %v1559
    %v1568 = vadd.f32 %v1544, %v1557
    %v1569 = vadd.f32 %v1545, %v1559
    %v1570 = vadd.f32 %v1546, %v1557
    %v1571 = vadd.f32 %v1547, %v1559
    %v1572 = vadd.f32 %v1548, %v1557
    %v1573 = vadd.f32 %v1549, %v1559
    %v1574 = vadd.f32 %v1550, %v1557
    %v1575 = vadd.f32 %v1551, %v1559
    %v1576 = vadd.f32 %v1552, %v1557
    %v1577 = vadd.f32 %v1553, %v1559
    %vm1578 = vcmask 261248
    %v1579 = vsel %vm1578, %v1562, -inf
    %1580 = vmax.xlane.f32.xlu0 %v1579
    %v1581 = vpop.xlane.xlu0 %1580
    %v1582 = vsel %vm1578, %v1563, -inf
    %1583 = vmax.xlane.f32.xlu0 %v1582
    %v1584 = vpop.xlane.xlu0 %1583
    %v1585 = vsel %vm1578, %v1564, -inf
    %1586 = vmax.xlane.f32.xlu0 %v1585
    %v1587 = vpop.xlane.xlu0 %1586
    %v1588 = vsel %vm1578, %v1565, -inf
    %1589 = vmax.xlane.f32.xlu0 %v1588
    %v1590 = vpop.xlane.xlu0 %1589
    %v1591 = vsel %vm1578, %v1566, -inf
    %1592 = vmax.xlane.f32.xlu0 %v1591
    %v1593 = vpop.xlane.xlu0 %1592
    %v1594 = vsel %vm1578, %v1567, -inf
    %1595 = vmax.xlane.f32.xlu0 %v1594
    %v1596 = vpop.xlane.xlu0 %1595
    %v1597 = vsel %vm1578, %v1568, -inf
    %1598 = vmax.xlane.f32.xlu0 %v1597
    %v1599 = vpop.xlane.xlu0 %1598
    %v1600 = vsel %vm1578, %v1569, -inf
    %1601 = vmax.xlane.f32.xlu0 %v1600
    %v1602 = vpop.xlane.xlu0 %1601
    %v1603 = vsel %vm1578, %v1570, -inf
    %1604 = vmax.xlane.f32.xlu0 %v1603
    %v1605 = vpop.xlane.xlu0 %1604
    %v1606 = vsel %vm1578, %v1571, -inf
    %1607 = vmax.xlane.f32.xlu0 %v1606
    %v1608 = vpop.xlane.xlu0 %1607
    %v1609 = vsel %vm1578, %v1572, -inf
    %1610 = vmax.xlane.f32.xlu0 %v1609
    %v1611 = vpop.xlane.xlu0 %1610
    %v1612 = vsel %vm1578, %v1573, -inf
    %1613 = vmax.xlane.f32.xlu0 %v1612
    %v1614 = vpop.xlane.xlu0 %1613
    %v1615 = vsel %vm1578, %v1574, -inf
    %1616 = vmax.xlane.f32.xlu0 %v1615
    %v1617 = vpop.xlane.xlu0 %1616
    %v1618 = vsel %vm1578, %v1575, -inf
    %1619 = vmax.xlane.f32.xlu0 %v1618
    %v1620 = vpop.xlane.xlu0 %1619
    %v1621 = vsel %vm1578, %v1576, -inf
    %1622 = vmax.xlane.f32.xlu0 %v1621
    %v1623 = vpop.xlane.xlu0 %1622
    %v1624 = vsel %vm1578, %v1577, -inf
    %1625 = vmax.xlane.f32.xlu0 %v1624
    %v1626 = vpop.xlane.xlu0 %1625
    %v1627 = vsub.f32 %v1562, %v1581
    %v1628 = vsub.f32 %v1563, %v1584
    %v1629 = vsub.f32 %v1564, %v1587
    %v1630 = vsub.f32 %v1565, %v1590
    %v1631 = vsub.f32 %v1566, %v1593
    %v1632 = vsub.f32 %v1567, %v1596
    %v1633 = vsub.f32 %v1568, %v1599
    %v1634 = vsub.f32 %v1569, %v1602
    %v1635 = vsub.f32 %v1570, %v1605
    %v1636 = vsub.f32 %v1571, %v1608
    %v1637 = vsub.f32 %v1572, %v1611
    %v1638 = vsub.f32 %v1573, %v1614
    %v1639 = vsub.f32 %v1574, %v1617
    %v1640 = vsub.f32 %v1575, %v1620
    %v1641 = vsub.f32 %v1576, %v1623
    %v1642 = vsub.f32 %v1577, %v1626
    %v1643 = vmul.f32 %v1627, 1.442695
    %v1644 = vpow.pop %v1643
    %v1645 = vmul.f32 %v1628, 1.442695
    %v1646 = vpow.pop %v1645
    %v1647 = vmul.f32 %v1629, 1.442695
    %v1648 = vpow.pop %v1647
    %v1649 = vmul.f32 %v1630, 1.442695
    %v1650 = vpow.pop %v1649
    %v1651 = vmul.f32 %v1631, 1.442695
    %v1652 = vpow.pop %v1651
    %v1653 = vmul.f32 %v1632, 1.442695
    %v1654 = vpow.pop %v1653
    %v1655 = vmul.f32 %v1633, 1.442695
    %v1656 = vpow.pop %v1655
    %v1657 = vmul.f32 %v1634, 1.442695
    %v1658 = vpow.pop %v1657
    %v1659 = vmul.f32 %v1635, 1.442695
    %v1660 = vpow.pop %v1659
    %v1661 = vmul.f32 %v1636, 1.442695
    %v1662 = vpow.pop %v1661
    %v1663 = vmul.f32 %v1637, 1.442695
    %v1664 = vpow.pop %v1663
    %v1665 = vmul.f32 %v1638, 1.442695
    %v1666 = vpow.pop %v1665
    %v1667 = vmul.f32 %v1639, 1.442695
    %v1668 = vpow.pop %v1667
    %v1669 = vmul.f32 %v1640, 1.442695
    %v1670 = vpow.pop %v1669
    %v1671 = vmul.f32 %v1641, 1.442695
    %v1672 = vpow.pop %v1671
    %v1673 = vmul.f32 %v1642, 1.442695
    %v1674 = vpow.pop %v1673
    %1691 = vrot.lane.b32.xlu0 %v1644, 112
    %v1692 = vpop.permute.xlu0 %1691
    %1693 = vrot.lane.b32.xlu0 %v1646, 112
    %v1694 = vpop.permute.xlu0 %1693
    %1695 = vrot.lane.b32.xlu0 %v1648, 112
    %v1696 = vpop.permute.xlu0 %1695
    %1697 = vrot.lane.b32.xlu0 %v1650, 112
    %v1698 = vpop.permute.xlu0 %1697
    %1699 = vrot.lane.b32.xlu0 %v1652, 112
    %v1700 = vpop.permute.xlu0 %1699
    %1701 = vrot.lane.b32.xlu0 %v1654, 112
    %v1702 = vpop.permute.xlu0 %1701
    %1703 = vrot.lane.b32.xlu0 %v1656, 112
    %v1704 = vpop.permute.xlu0 %1703
    %1705 = vrot.lane.b32.xlu0 %v1658, 112
    %v1706 = vpop.permute.xlu0 %1705
    %1707 = vrot.lane.b32.xlu0 %v1660, 112
    %v1708 = vpop.permute.xlu0 %1707
    %1709 = vrot.lane.b32.xlu0 %v1662, 112
    %v1710 = vpop.permute.xlu0 %1709
    %1711 = vrot.lane.b32.xlu0 %v1664, 112
    %v1712 = vpop.permute.xlu0 %1711
    %1713 = vrot.lane.b32.xlu0 %v1666, 112
    %v1714 = vpop.permute.xlu0 %1713
    %1715 = vrot.lane.b32.xlu0 %v1668, 112
    %v1716 = vpop.permute.xlu0 %1715
    %1717 = vrot.lane.b32.xlu0 %v1670, 112
    %v1718 = vpop.permute.xlu0 %1717
    %1719 = vrot.lane.b32.xlu0 %v1672, 112
    %v1720 = vpop.permute.xlu0 %1719
    %1721 = vrot.lane.b32.xlu0 %v1674, 112
    %v1722 = vpop.permute.xlu0 %1721
    %v1739 = vsel %vm555, %v1692, 0.0
    %1740 = vadd.xlane.f32.xlu0 %v1739
    %v1741 = vpop.xlane.xlu0 %1740
    %v1742 = vsel %vm555, %v1694, 0.0
    %1743 = vadd.xlane.f32.xlu0 %v1742
    %v1744 = vpop.xlane.xlu0 %1743
    %v1745 = vsel %vm555, %v1696, 0.0
    %1746 = vadd.xlane.f32.xlu0 %v1745
    %v1747 = vpop.xlane.xlu0 %1746
    %v1748 = vsel %vm555, %v1698, 0.0
    %1749 = vadd.xlane.f32.xlu0 %v1748
    %v1750 = vpop.xlane.xlu0 %1749
    %v1751 = vsel %vm555, %v1700, 0.0
    %1752 = vadd.xlane.f32.xlu0 %v1751
    %v1753 = vpop.xlane.xlu0 %1752
    %v1754 = vsel %vm555, %v1702, 0.0
    %1755 = vadd.xlane.f32.xlu0 %v1754
    %v1756 = vpop.xlane.xlu0 %1755
    %v1757 = vsel %vm555, %v1704, 0.0
    %1758 = vadd.xlane.f32.xlu0 %v1757
    %v1759 = vpop.xlane.xlu0 %1758
    %v1760 = vsel %vm555, %v1706, 0.0
    %1761 = vadd.xlane.f32.xlu0 %v1760
    %v1762 = vpop.xlane.xlu0 %1761
    %v1763 = vsel %vm555, %v1708, 0.0
    %1764 = vadd.xlane.f32.xlu0 %v1763
    %v1765 = vpop.xlane.xlu0 %1764
    %v1766 = vsel %vm555, %v1710, 0.0
    %1767 = vadd.xlane.f32.xlu0 %v1766
    %v1768 = vpop.xlane.xlu0 %1767
    %v1769 = vsel %vm555, %v1712, 0.0
    %1770 = vadd.xlane.f32.xlu0 %v1769
    %v1771 = vpop.xlane.xlu0 %1770
    %v1772 = vsel %vm555, %v1714, 0.0
    %1773 = vadd.xlane.f32.xlu0 %v1772
    %v1774 = vpop.xlane.xlu0 %1773
    %v1775 = vsel %vm555, %v1716, 0.0
    %1776 = vadd.xlane.f32.xlu0 %v1775
    %v1777 = vpop.xlane.xlu0 %1776
    %v1778 = vsel %vm555, %v1718, 0.0
    %1779 = vadd.xlane.f32.xlu0 %v1778
    %v1780 = vpop.xlane.xlu0 %1779
    %v1781 = vsel %vm555, %v1720, 0.0
    %1782 = vadd.xlane.f32.xlu0 %v1781
    %v1783 = vpop.xlane.xlu0 %1782
    %v1784 = vsel %vm555, %v1722, 0.0
    %1785 = vadd.xlane.f32.xlu0 %v1784
    %v1786 = vpop.xlane.xlu0 %1785
    %v1787 = vrcp.pop %v1741
    %v1788 = vrcp.pop %v1744
    %v1789 = vrcp.pop %v1747
    %v1790 = vrcp.pop %v1750
    %v1791 = vrcp.pop %v1753
    %v1792 = vrcp.pop %v1756
    %v1793 = vrcp.pop %v1759
    %v1794 = vrcp.pop %v1762
    %v1795 = vrcp.pop %v1765
    %v1796 = vrcp.pop %v1768
    %v1797 = vrcp.pop %v1771
    %v1798 = vrcp.pop %v1774
    %v1799 = vrcp.pop %v1777
    %v1800 = vrcp.pop %v1780
    %v1801 = vrcp.pop %v1783
    %v1802 = vrcp.pop %v1786
    %v1803 = vmul.f32 %v1644, %v1787
    %v1804 = vmul.f32 %v1646, %v1788
    %v1805 = vmul.f32 %v1648, %v1789
    %v1806 = vmul.f32 %v1650, %v1790
    %v1807 = vmul.f32 %v1652, %v1791
    %v1808 = vmul.f32 %v1654, %v1792
    %v1809 = vmul.f32 %v1656, %v1793
    %v1810 = vmul.f32 %v1658, %v1794
    %v1811 = vmul.f32 %v1660, %v1795
    %v1812 = vmul.f32 %v1662, %v1796
    %v1813 = vmul.f32 %v1664, %v1797
    %v1814 = vmul.f32 %v1666, %v1798
    %v1815 = vmul.f32 %v1668, %v1799
    %v1816 = vmul.f32 %v1670, %v1800
    %v1817 = vmul.f32 %v1672, %v1801
    %v1818 = vmul.f32 %v1674, %v1802
    %1821 = vrot.lane.b32.xlu0 %v1803, 112
    %v1822 = vpop.permute.xlu0 %1821
    %1823 = vrot.lane.b32.xlu0 %v1804, 112
    %v1824 = vpop.permute.xlu0 %1823
    %v1825 = vsel %vm555, %v1822, 0
    %v1827 = vsel %vm555, %v1824, 0
    %1829 = vmatprep.subr.mxu0 0.0
    %1830 = vmatpush1.msra.mxu0 %v1410
    %1831 = vmatprep.subr.mxu0 0.0
    %1832 = vmatpush1.msra.mxu0 %v1411
    %1833 = vmatprep.subr.mxu0 0.0
    %1834 = vmatpush1.msra.mxu0 0.0
    %1835 = vmatprep.subr.mxu0 0.0
    %1836 = vmatpush1.msra.mxu0 0.0
    %1837 = vmatprep.subr.mxu0 0.0
    %1838 = vmatpush1.msra.mxu0 0.0
    %1839 = vmatprep.subr.mxu0 0.0
    %1840 = vmatpush1.msra.mxu0 0.0
    %1841 = vmatprep.subr.mxu0 0.0
    %1842 = vmatpush1.msra.mxu0 0.0
    %1843 = vmatprep.subr.mxu0 0.0
    %1844 = vmatpush1.msra.mxu0 0.0
    %1845 = vmatprep.subr.mxu0 0.0
    %1846 = vmatpush1.msra.mxu0 0.0
    %1847 = vmatprep.subr.mxu0 0.0
    %1848 = vmatpush1.msra.mxu0 0.0
    %1849 = vmatprep.subr.mxu0 0.0
    %1850 = vmatpush1.msra.mxu0 0.0
    %1851 = vmatprep.subr.mxu0 0.0
    %1852 = vmatpush1.msra.mxu0 0.0
    %1853 = vmatprep.subr.mxu0 0.0
    %1854 = vmatpush1.msra.mxu0 0.0
    %1855 = vmatprep.subr.mxu0 0.0
    %1856 = vmatpush1.msra.mxu0 0.0
    %1857 = vmatprep.subr.mxu0 0.0
    %1858 = vmatpush1.msra.mxu0 0.0
    %1859 = vmatprep.subr.mxu0 0.0
    %1860 = vmatpush1.msra.mxu0 0.0
    %1861 = vmatprep.subr.mxu0 0.0
    %1862 = vmatpush1.msra.mxu0 0.0
    %1863 = vmatprep.subr.mxu0 0.0
    %1864 = vmatpush1.msra.mxu0 0.0
    %1865 = vmatprep.subr.mxu0 0.0
    %1866 = vmatpush1.msra.mxu0 0.0
    %1867 = vmatprep.subr.mxu0 0.0
    %1868 = vmatpush1.msra.mxu0 0.0
    %1869 = vmatprep.subr.mxu0 0.0
    %1870 = vmatpush1.msra.mxu0 0.0
    %1871 = vmatprep.subr.mxu0 0.0
    %1872 = vmatpush1.msra.mxu0 0.0
    %1873 = vmatprep.subr.mxu0 0.0
    %1874 = vmatpush1.msra.mxu0 0.0
    %1875 = vmatprep.subr.mxu0 0.0
    %1876 = vmatpush1.msra.mxu0 0.0
    %1877 = vmatprep.subr.mxu0 0.0
    %1878 = vmatpush1.msra.mxu0 0.0
    %1879 = vmatprep.subr.mxu0 0.0
    %1880 = vmatpush1.msra.mxu0 0.0
    %1881 = vmatprep.subr.mxu0 0.0
    %1882 = vmatpush1.msra.mxu0 0.0
    %1883 = vmatprep.subr.mxu0 0.0
    %1884 = vmatpush1.msra.mxu0 0.0
    %1885 = vmatprep.subr.mxu0 0.0
    %1886 = vmatpush1.msra.mxu0 0.0
    %1887 = vmatprep.subr.mxu0 0.0
    %1888 = vmatpush1.msra.mxu0 0.0
    %1889 = vmatprep.subr.mxu0 0.0
    %1890 = vmatpush1.msra.mxu0 0.0
    %1891 = vmatprep.subr.mxu0 0.0
    %1892 = vmatpush1.msra.mxu0 0.0
    %1893 = vmatprep.mubr.f32.mxu0 0.0
    %1894 = vmatmul.mubr.f32.gmra.mrb[0].mxu0 %v1825
    %v1895 = vpop.f32.mrb[0].mxu0
    %v1896 = vadd.f32 0.0, %v1895
    %v1897 = vpop.f32.mrb[0].mxu0
    %1898 = vmatprep.mubr.f32.mxu0 0.0
    %1899 = vmatmul.mubr.f32.gmra.mrb[0].mxu0 %v1827
    %v1900 = vpop.f32.mrb[0].mxu0
    %v1901 = vadd.f32 0.0, %v1900
    %v1902 = vpop.f32.mrb[0].mxu0
    %1903 = vdwg.mxu0
    %1906 = vrot.lane.b32.xlu0 %v1805, 112
    %v1907 = vpop.permute.xlu0 %1906
    %1908 = vrot.lane.b32.xlu0 %v1806, 112
    %v1909 = vpop.permute.xlu0 %1908
    %v1910 = vsel %vm555, %v1907, 0
    %v1912 = vsel %vm555, %v1909, 0
    %1914 = vmatprep.subr.mxu0 0.0
    %1915 = vmatpush1.msra.mxu0 %v1412
    %1916 = vmatprep.subr.mxu0 0.0
    %1917 = vmatpush1.msra.mxu0 %v1413
    %1918 = vmatprep.subr.mxu0 0.0
    %1919 = vmatpush1.msra.mxu0 0.0
    %1920 = vmatprep.subr.mxu0 0.0
    %1921 = vmatpush1.msra.mxu0 0.0
    %1922 = vmatprep.subr.mxu0 0.0
    %1923 = vmatpush1.msra.mxu0 0.0
    %1924 = vmatprep.subr.mxu0 0.0
    %1925 = vmatpush1.msra.mxu0 0.0
    %1926 = vmatprep.subr.mxu0 0.0
    %1927 = vmatpush1.msra.mxu0 0.0
    %1928 = vmatprep.subr.mxu0 0.0
    %1929 = vmatpush1.msra.mxu0 0.0
    %1930 = vmatprep.subr.mxu0 0.0
    %1931 = vmatpush1.msra.mxu0 0.0
    %1932 = vmatprep.subr.mxu0 0.0
    %1933 = vmatpush1.msra.mxu0 0.0
    %1934 = vmatprep.subr.mxu0 0.0
    %1935 = vmatpush1.msra.mxu0 0.0
    %1936 = vmatprep.subr.mxu0 0.0
    %1937 = vmatpush1.msra.mxu0 0.0
    %1938 = vmatprep.subr.mxu0 0.0
    %1939 = vmatpush1.msra.mxu0 0.0
    %1940 = vmatprep.subr.mxu0 0.0
    %1941 = vmatpush1.msra.mxu0 0.0
    %1942 = vmatprep.subr.mxu0 0.0
    %1943 = vmatpush1.msra.mxu0 0.0
    %1944 = vmatprep.subr.mxu0 0.0
    %1945 = vmatpush1.msra.mxu0 0.0
    %1946 = vmatprep.subr.mxu0 0.0
    %1947 = vmatpush1.msra.mxu0 0.0
    %1948 = vmatprep.subr.mxu0 0.0
    %1949 = vmatpush1.msra.mxu0 0.0
    %1950 = vmatprep.subr.mxu0 0.0
    %1951 = vmatpush1.msra.mxu0 0.0
    %1952 = vmatprep.subr.mxu0 0.0
    %1953 = vmatpush1.msra.mxu0 0.0
    %1954 = vmatprep.subr.mxu0 0.0
    %1955 = vmatpush1.msra.mxu0 0.0
    %1956 = vmatprep.subr.mxu0 0.0
    %1957 = vmatpush1.msra.mxu0 0.0
    %1958 = vmatprep.subr.mxu0 0.0
    %1959 = vmatpush1.msra.mxu0 0.0
    %1960 = vmatprep.subr.mxu0 0.0
    %1961 = vmatpush1.msra.mxu0 0.0
    %1962 = vmatprep.subr.mxu0 0.0
    %1963 = vmatpush1.msra.mxu0 0.0
    %1964 = vmatprep.subr.mxu0 0.0
    %1965 = vmatpush1.msra.mxu0 0.0
    %1966 = vmatprep.subr.mxu0 0.0
    %1967 = vmatpush1.msra.mxu0 0.0
    %1968 = vmatprep.subr.mxu0 0.0
    %1969 = vmatpush1.msra.mxu0 0.0
    %1970 = vmatprep.subr.mxu0 0.0
    %1971 = vmatpush1.msra.mxu0 0.0
    %1972 = vmatprep.subr.mxu0 0.0
    %1973 = vmatpush1.msra.mxu0 0.0
    %1974 = vmatprep.subr.mxu0 0.0
    %1975 = vmatpush1.msra.mxu0 0.0
    %1976 = vmatprep.subr.mxu0 0.0
    %1977 = vmatpush1.msra.mxu0 0.0
    %1978 = vmatprep.mubr.f32.mxu0 0.0
    %1979 = vmatmul.mubr.f32.gmra.mrb[0].mxu0 %v1910
    %v1980 = vpop.f32.mrb[0].mxu0
    %v1981 = vadd.f32 0.0, %v1980
    %v1982 = vpop.f32.mrb[0].mxu0
    %1983 = vmatprep.mubr.f32.mxu0 0.0
    %1984 = vmatmul.mubr.f32.gmra.mrb[0].mxu0 %v1912
    %v1985 = vpop.f32.mrb[0].mxu0
    %v1986 = vadd.f32 0.0, %v1985
    %v1987 = vpop.f32.mrb[0].mxu0
    %1988 = vdwg.mxu0
    %1991 = vrot.lane.b32.xlu0 %v1807, 112
    %v1992 = vpop.permute.xlu0 %1991
    %1993 = vrot.lane.b32.xlu0 %v1808, 112
    %v1994 = vpop.permute.xlu0 %1993
    %v1995 = vsel %vm555, %v1992, 0
    %v1997 = vsel %vm555, %v1994, 0
    %1999 = vmatprep.subr.mxu0 0.0
    %2000 = vmatpush1.msra.mxu0 %v1414
    %2001 = vmatprep.subr.mxu0 0.0
    %2002 = vmatpush1.msra.mxu0 %v1415
    %2003 = vmatprep.subr.mxu0 0.0
    %2004 = vmatpush1.msra.mxu0 0.0
    %2005 = vmatprep.subr.mxu0 0.0
    %2006 = vmatpush1.msra.mxu0 0.0
    %2007 = vmatprep.subr.mxu0 0.0
    %2008 = vmatpush1.msra.mxu0 0.0
    %2009 = vmatprep.subr.mxu0 0.0
    %2010 = vmatpush1.msra.mxu0 0.0
    %2011 = vmatprep.subr.mxu0 0.0
    %2012 = vmatpush1.msra.mxu0 0.0
    %2013 = vmatprep.subr.mxu0 0.0
    %2014 = vmatpush1.msra.mxu0 0.0
    %2015 = vmatprep.subr.mxu0 0.0
    %2016 = vmatpush1.msra.mxu0 0.0
    %2017 = vmatprep.subr.mxu0 0.0
    %2018 = vmatpush1.msra.mxu0 0.0
    %2019 = vmatprep.subr.mxu0 0.0
    %2020 = vmatpush1.msra.mxu0 0.0
    %2021 = vmatprep.subr.mxu0 0.0
    %2022 = vmatpush1.msra.mxu0 0.0
    %2023 = vmatprep.subr.mxu0 0.0
    %2024 = vmatpush1.msra.mxu0 0.0
    %2025 = vmatprep.subr.mxu0 0.0
    %2026 = vmatpush1.msra.mxu0 0.0
    %2027 = vmatprep.subr.mxu0 0.0
    %2028 = vmatpush1.msra.mxu0 0.0
    %2029 = vmatprep.subr.mxu0 0.0
    %2030 = vmatpush1.msra.mxu0 0.0
    %2031 = vmatprep.subr.mxu0 0.0
    %2032 = vmatpush1.msra.mxu0 0.0
    %2033 = vmatprep.subr.mxu0 0.0
    %2034 = vmatpush1.msra.mxu0 0.0
    %2035 = vmatprep.subr.mxu0 0.0
    %2036 = vmatpush1.msra.mxu0 0.0
    %2037 = vmatprep.subr.mxu0 0.0
    %2038 = vmatpush1.msra.mxu0 0.0
    %2039 = vmatprep.subr.mxu0 0.0
    %2040 = vmatpush1.msra.mxu0 0.0
    %2041 = vmatprep.subr.mxu0 0.0
    %2042 = vmatpush1.msra.mxu0 0.0
    %2043 = vmatprep.subr.mxu0 0.0
    %2044 = vmatpush1.msra.mxu0 0.0
    %2045 = vmatprep.subr.mxu0 0.0
    %2046 = vmatpush1.msra.mxu0 0.0
    %2047 = vmatprep.subr.mxu0 0.0
    %2048 = vmatpush1.msra.mxu0 0.0
    %2049 = vmatprep.subr.mxu0 0.0
    %2050 = vmatpush1.msra.mxu0 0.0
    %2051 = vmatprep.subr.mxu0 0.0
    %2052 = vmatpush1.msra.mxu0 0.0
    %2053 = vmatprep.subr.mxu0 0.0
    %2054 = vmatpush1.msra.mxu0 0.0
    %2055 = vmatprep.subr.mxu0 0.0
    %2056 = vmatpush1.msra.mxu0 0.0
    %2057 = vmatprep.subr.mxu0 0.0
    %2058 = vmatpush1.msra.mxu0 0.0
    %2059 = vmatprep.subr.mxu0 0.0
    %2060 = vmatpush1.msra.mxu0 0.0
    %2061 = vmatprep.subr.mxu0 0.0
    %2062 = vmatpush1.msra.mxu0 0.0
    %2063 = vmatprep.mubr.f32.mxu0 0.0
    %2064 = vmatmul.mubr.f32.gmra.mrb[0].mxu0 %v1995
    %v2065 = vpop.f32.mrb[0].mxu0
    %v2066 = vadd.f32 0.0, %v2065
    %v2067 = vpop.f32.mrb[0].mxu0
    %2068 = vmatprep.mubr.f32.mxu0 0.0
    %2069 = vmatmul.mubr.f32.gmra.mrb[0].mxu0 %v1997
    %v2070 = vpop.f32.mrb[0].mxu0
    %v2071 = vadd.f32 0.0, %v2070
    %v2072 = vpop.f32.mrb[0].mxu0
    %2073 = vdwg.mxu0
    %2076 = vrot.lane.b32.xlu0 %v1809, 112
    %v2077 = vpop.permute.xlu0 %2076
    %2078 = vrot.lane.b32.xlu0 %v1810, 112
    %v2079 = vpop.permute.xlu0 %2078
    %v2080 = vsel %vm555, %v2077, 0
    %v2082 = vsel %vm555, %v2079, 0
    %2084 = vmatprep.subr.mxu0 0.0
    %2085 = vmatpush1.msra.mxu0 %v1416
    %2086 = vmatprep.subr.mxu0 0.0
    %2087 = vmatpush1.msra.mxu0 %v1417
    %2088 = vmatprep.subr.mxu0 0.0
    %2089 = vmatpush1.msra.mxu0 0.0
    %2090 = vmatprep.subr.mxu0 0.0
    %2091 = vmatpush1.msra.mxu0 0.0
    %2092 = vmatprep.subr.mxu0 0.0
    %2093 = vmatpush1.msra.mxu0 0.0
    %2094 = vmatprep.subr.mxu0 0.0
    %2095 = vmatpush1.msra.mxu0 0.0
    %2096 = vmatprep.subr.mxu0 0.0
    %2097 = vmatpush1.msra.mxu0 0.0
    %2098 = vmatprep.subr.mxu0 0.0
    %2099 = vmatpush1.msra.mxu0 0.0
    %2100 = vmatprep.subr.mxu0 0.0
    %2101 = vmatpush1.msra.mxu0 0.0
    %2102 = vmatprep.subr.mxu0 0.0
    %2103 = vmatpush1.msra.mxu0 0.0
    %2104 = vmatprep.subr.mxu0 0.0
    %2105 = vmatpush1.msra.mxu0 0.0
    %2106 = vmatprep.subr.mxu0 0.0
    %2107 = vmatpush1.msra.mxu0 0.0
    %2108 = vmatprep.subr.mxu0 0.0
    %2109 = vmatpush1.msra.mxu0 0.0
    %2110 = vmatprep.subr.mxu0 0.0
    %2111 = vmatpush1.msra.mxu0 0.0
    %2112 = vmatprep.subr.mxu0 0.0
    %2113 = vmatpush1.msra.mxu0 0.0
    %2114 = vmatprep.subr.mxu0 0.0
    %2115 = vmatpush1.msra.mxu0 0.0
    %2116 = vmatprep.subr.mxu0 0.0
    %2117 = vmatpush1.msra.mxu0 0.0
    %2118 = vmatprep.subr.mxu0 0.0
    %2119 = vmatpush1.msra.mxu0 0.0
    %2120 = vmatprep.subr.mxu0 0.0
    %2121 = vmatpush1.msra.mxu0 0.0
    %2122 = vmatprep.subr.mxu0 0.0
    %2123 = vmatpush1.msra.mxu0 0.0
    %2124 = vmatprep.subr.mxu0 0.0
    %2125 = vmatpush1.msra.mxu0 0.0
    %2126 = vmatprep.subr.mxu0 0.0
    %2127 = vmatpush1.msra.mxu0 0.0
    %2128 = vmatprep.subr.mxu0 0.0
    %2129 = vmatpush1.msra.mxu0 0.0
    %2130 = vmatprep.subr.mxu0 0.0
    %2131 = vmatpush1.msra.mxu0 0.0
    %2132 = vmatprep.subr.mxu0 0.0
    %2133 = vmatpush1.msra.mxu0 0.0
    %2134 = vmatprep.subr.mxu0 0.0
    %2135 = vmatpush1.msra.mxu0 0.0
    %2136 = vmatprep.subr.mxu0 0.0
    %2137 = vmatpush1.msra.mxu0 0.0
    %2138 = vmatprep.subr.mxu0 0.0
    %2139 = vmatpush1.msra.mxu0 0.0
    %2140 = vmatprep.subr.mxu0 0.0
    %2141 = vmatpush1.msra.mxu0 0.0
    %2142 = vmatprep.subr.mxu0 0.0
    %2143 = vmatpush1.msra.mxu0 0.0
    %2144 = vmatprep.subr.mxu0 0.0
    %2145 = vmatpush1.msra.mxu0 0.0
    %2146 = vmatprep.subr.mxu0 0.0
    %2147 = vmatpush1.msra.mxu0 0.0
    %2148 = vmatprep.mubr.f32.mxu0 0.0
    %2149 = vmatmul.mubr.f32.gmra.mrb[0].mxu0 %v2080
    %v2150 = vpop.f32.mrb[0].mxu0
    %v2151 = vadd.f32 0.0, %v2150
    %v2152 = vpop.f32.mrb[0].mxu0
    %2153 = vmatprep.mubr.f32.mxu0 0.0
    %2154 = vmatmul.mubr.f32.gmra.mrb[0].mxu0 %v2082
    %v2155 = vpop.f32.mrb[0].mxu0
    %v2156 = vadd.f32 0.0, %v2155
    %v2157 = vpop.f32.mrb[0].mxu0
    %2158 = vdwg.mxu0
    %2161 = vrot.lane.b32.xlu0 %v1811, 112
    %v2162 = vpop.permute.xlu0 %2161
    %2163 = vrot.lane.b32.xlu0 %v1812, 112
    %v2164 = vpop.permute.xlu0 %2163
    %v2165 = vsel %vm555, %v2162, 0
    %v2167 = vsel %vm555, %v2164, 0
    %2169 = vmatprep.subr.mxu0 0.0
    %2170 = vmatpush1.msra.mxu0 %v1418
    %2171 = vmatprep.subr.mxu0 0.0
    %2172 = vmatpush1.msra.mxu0 %v1419
    %2173 = vmatprep.subr.mxu0 0.0
    %2174 = vmatpush1.msra.mxu0 0.0
    %2175 = vmatprep.subr.mxu0 0.0
    %2176 = vmatpush1.msra.mxu0 0.0
    %2177 = vmatprep.subr.mxu0 0.0
    %2178 = vmatpush1.msra.mxu0 0.0
    %2179 = vmatprep.subr.mxu0 0.0
    %2180 = vmatpush1.msra.mxu0 0.0
    %2181 = vmatprep.subr.mxu0 0.0
    %2182 = vmatpush1.msra.mxu0 0.0
    %2183 = vmatprep.subr.mxu0 0.0
    %2184 = vmatpush1.msra.mxu0 0.0
    %2185 = vmatprep.subr.mxu0 0.0
    %2186 = vmatpush1.msra.mxu0 0.0
    %2187 = vmatprep.subr.mxu0 0.0
    %2188 = vmatpush1.msra.mxu0 0.0
    %2189 = vmatprep.subr.mxu0 0.0
    %2190 = vmatpush1.msra.mxu0 0.0
    %2191 = vmatprep.subr.mxu0 0.0
    %2192 = vmatpush1.msra.mxu0 0.0
    %2193 = vmatprep.subr.mxu0 0.0
    %2194 = vmatpush1.msra.mxu0 0.0
    %2195 = vmatprep.subr.mxu0 0.0
    %2196 = vmatpush1.msra.mxu0 0.0
    %2197 = vmatprep.subr.mxu0 0.0
    %2198 = vmatpush1.msra.mxu0 0.0
    %2199 = vmatprep.subr.mxu0 0.0
    %2200 = vmatpush1.msra.mxu0 0.0
    %2201 = vmatprep.subr.mxu0 0.0
    %2202 = vmatpush1.msra.mxu0 0.0
    %2203 = vmatprep.subr.mxu0 0.0
    %2204 = vmatpush1.msra.mxu0 0.0
    %2205 = vmatprep.subr.mxu0 0.0
    %2206 = vmatpush1.msra.mxu0 0.0
    %2207 = vmatprep.subr.mxu0 0.0
    %2208 = vmatpush1.msra.mxu0 0.0
    %2209 = vmatprep.subr.mxu0 0.0
    %2210 = vmatpush1.msra.mxu0 0.0
    %2211 = vmatprep.subr.mxu0 0.0
    %2212 = vmatpush1.msra.mxu0 0.0
    %2213 = vmatprep.subr.mxu0 0.0
    %2214 = vmatpush1.msra.mxu0 0.0
    %2215 = vmatprep.subr.mxu0 0.0
    %2216 = vmatpush1.msra.mxu0 0.0
    %2217 = vmatprep.subr.mxu0 0.0
    %2218 = vmatpush1.msra.mxu0 0.0
    %2219 = vmatprep.subr.mxu0 0.0
    %2220 = vmatpush1.msra.mxu0 0.0
    %2221 = vmatprep.subr.mxu0 0.0
    %2222 = vmatpush1.msra.mxu0 0.0
    %2223 = vmatprep.subr.mxu0 0.0
    %2224 = vmatpush1.msra.mxu0 0.0
    %2225 = vmatprep.subr.mxu0 0.0
    %2226 = vmatpush1.msra.mxu0 0.0
    %2227 = vmatprep.subr.mxu0 0.0
    %2228 = vmatpush1.msra.mxu0 0.0
    %2229 = vmatprep.subr.mxu0 0.0
    %2230 = vmatpush1.msra.mxu0 0.0
    %2231 = vmatprep.subr.mxu0 0.0
    %2232 = vmatpush1.msra.mxu0 0.0
    %2233 = vmatprep.mubr.f32.mxu0 0.0
    %2234 = vmatmul.mubr.f32.gmra.mrb[0].mxu0 %v2165
    %v2235 = vpop.f32.mrb[0].mxu0
    %v2236 = vadd.f32 0.0, %v2235
    %v2237 = vpop.f32.mrb[0].mxu0
    %2238 = vmatprep.mubr.f32.mxu0 0.0
    %2239 = vmatmul.mubr.f32.gmra.mrb[0].mxu0 %v2167
    %v2240 = vpop.f32.mrb[0].mxu0
    %v2241 = vadd.f32 0.0, %v2240
    %v2242 = vpop.f32.mrb[0].mxu0
    %2243 = vdwg.mxu0
    %2246 = vrot.lane.b32.xlu0 %v1813, 112
    %v2247 = vpop.permute.xlu0 %2246
    %2248 = vrot.lane.b32.xlu0 %v1814, 112
    %v2249 = vpop.permute.xlu0 %2248
    %v2250 = vsel %vm555, %v2247, 0
    %v2252 = vsel %vm555, %v2249, 0
    %2254 = vmatprep.subr.mxu0 0.0
    %2255 = vmatpush1.msra.mxu0 %v1420
    %2256 = vmatprep.subr.mxu0 0.0
    %2257 = vmatpush1.msra.mxu0 %v1421
    %2258 = vmatprep.subr.mxu0 0.0
    %2259 = vmatpush1.msra.mxu0 0.0
    %2260 = vmatprep.subr.mxu0 0.0
    %2261 = vmatpush1.msra.mxu0 0.0
    %2262 = vmatprep.subr.mxu0 0.0
    %2263 = vmatpush1.msra.mxu0 0.0
    %2264 = vmatprep.subr.mxu0 0.0
    %2265 = vmatpush1.msra.mxu0 0.0
    %2266 = vmatprep.subr.mxu0 0.0
    %2267 = vmatpush1.msra.mxu0 0.0
    %2268 = vmatprep.subr.mxu0 0.0
    %2269 = vmatpush1.msra.mxu0 0.0
    %2270 = vmatprep.subr.mxu0 0.0
    %2271 = vmatpush1.msra.mxu0 0.0
    %2272 = vmatprep.subr.mxu0 0.0
    %2273 = vmatpush1.msra.mxu0 0.0
    %2274 = vmatprep.subr.mxu0 0.0
    %2275 = vmatpush1.msra.mxu0 0.0
    %2276 = vmatprep.subr.mxu0 0.0
    %2277 = vmatpush1.msra.mxu0 0.0
    %2278 = vmatprep.subr.mxu0 0.0
    %2279 = vmatpush1.msra.mxu0 0.0
    %2280 = vmatprep.subr.mxu0 0.0
    %2281 = vmatpush1.msra.mxu0 0.0
    %2282 = vmatprep.subr.mxu0 0.0
    %2283 = vmatpush1.msra.mxu0 0.0
    %2284 = vmatprep.subr.mxu0 0.0
    %2285 = vmatpush1.msra.mxu0 0.0
    %2286 = vmatprep.subr.mxu0 0.0
    %2287 = vmatpush1.msra.mxu0 0.0
    %2288 = vmatprep.subr.mxu0 0.0
    %2289 = vmatpush1.msra.mxu0 0.0
    %2290 = vmatprep.subr.mxu0 0.0
    %2291 = vmatpush1.msra.mxu0 0.0
    %2292 = vmatprep.subr.mxu0 0.0
    %2293 = vmatpush1.msra.mxu0 0.0
    %2294 = vmatprep.subr.mxu0 0.0
    %2295 = vmatpush1.msra.mxu0 0.0
    %2296 = vmatprep.subr.mxu0 0.0
    %2297 = vmatpush1.msra.mxu0 0.0
    %2298 = vmatprep.subr.mxu0 0.0
    %2299 = vmatpush1.msra.mxu0 0.0
    %2300 = vmatprep.subr.mxu0 0.0
    %2301 = vmatpush1.msra.mxu0 0.0
    %2302 = vmatprep.subr.mxu0 0.0
    %2303 = vmatpush1.msra.mxu0 0.0
    %2304 = vmatprep.subr.mxu0 0.0
    %2305 = vmatpush1.msra.mxu0 0.0
    %2306 = vmatprep.subr.mxu0 0.0
    %2307 = vmatpush1.msra.mxu0 0.0
    %2308 = vmatprep.subr.mxu0 0.0
    %2309 = vmatpush1.msra.mxu0 0.0
    %2310 = vmatprep.subr.mxu0 0.0
    %2311 = vmatpush1.msra.mxu0 0.0
    %2312 = vmatprep.subr.mxu0 0.0
    %2313 = vmatpush1.msra.mxu0 0.0
    %2314 = vmatprep.subr.mxu0 0.0
    %2315 = vmatpush1.msra.mxu0 0.0
    %2316 = vmatprep.subr.mxu0 0.0
    %2317 = vmatpush1.msra.mxu0 0.0
    %2318 = vmatprep.mubr.f32.mxu0 0.0
    %2319 = vmatmul.mubr.f32.gmra.mrb[0].mxu0 %v2250
    %v2320 = vpop.f32.mrb[0].mxu0
    %v2321 = vadd.f32 0.0, %v2320
    %v2322 = vpop.f32.mrb[0].mxu0
    %2323 = vmatprep.mubr.f32.mxu0 0.0
    %2324 = vmatmul.mubr.f32.gmra.mrb[0].mxu0 %v2252
    %v2325 = vpop.f32.mrb[0].mxu0
    %v2326 = vadd.f32 0.0, %v2325
    %v2327 = vpop.f32.mrb[0].mxu0
    %2328 = vdwg.mxu0
    %2331 = vrot.lane.b32.xlu0 %v1815, 112
    %v2332 = vpop.permute.xlu0 %2331
    %2333 = vrot.lane.b32.xlu0 %v1816, 112
    %v2334 = vpop.permute.xlu0 %2333
    %v2335 = vsel %vm555, %v2332, 0
    %v2337 = vsel %vm555, %v2334, 0
    %2339 = vmatprep.subr.mxu0 0.0
    %2340 = vmatpush1.msra.mxu0 %v1422
    %2341 = vmatprep.subr.mxu0 0.0
    %2342 = vmatpush1.msra.mxu0 %v1423
    %2343 = vmatprep.subr.mxu0 0.0
    %2344 = vmatpush1.msra.mxu0 0.0
    %2345 = vmatprep.subr.mxu0 0.0
    %2346 = vmatpush1.msra.mxu0 0.0
    %2347 = vmatprep.subr.mxu0 0.0
    %2348 = vmatpush1.msra.mxu0 0.0
    %2349 = vmatprep.subr.mxu0 0.0
    %2350 = vmatpush1.msra.mxu0 0.0
    %2351 = vmatprep.subr.mxu0 0.0
    %2352 = vmatpush1.msra.mxu0 0.0
    %2353 = vmatprep.subr.mxu0 0.0
    %2354 = vmatpush1.msra.mxu0 0.0
    %2355 = vmatprep.subr.mxu0 0.0
    %2356 = vmatpush1.msra.mxu0 0.0
    %2357 = vmatprep.subr.mxu0 0.0
    %2358 = vmatpush1.msra.mxu0 0.0
    %2359 = vmatprep.subr.mxu0 0.0
    %2360 = vmatpush1.msra.mxu0 0.0
    %2361 = vmatprep.subr.mxu0 0.0
    %2362 = vmatpush1.msra.mxu0 0.0
    %2363 = vmatprep.subr.mxu0 0.0
    %2364 = vmatpush1.msra.mxu0 0.0
    %2365 = vmatprep.subr.mxu0 0.0
    %2366 = vmatpush1.msra.mxu0 0.0
    %2367 = vmatprep.subr.mxu0 0.0
    %2368 = vmatpush1.msra.mxu0 0.0
    %2369 = vmatprep.subr.mxu0 0.0
    %2370 = vmatpush1.msra.mxu0 0.0
    %2371 = vmatprep.subr.mxu0 0.0
    %2372 = vmatpush1.msra.mxu0 0.0
    %2373 = vmatprep.subr.mxu0 0.0
    %2374 = vmatpush1.msra.mxu0 0.0
    %2375 = vmatprep.subr.mxu0 0.0
    %2376 = vmatpush1.msra.mxu0 0.0
    %2377 = vmatprep.subr.mxu0 0.0
    %2378 = vmatpush1.msra.mxu0 0.0
    %2379 = vmatprep.subr.mxu0 0.0
    %2380 = vmatpush1.msra.mxu0 0.0
    %2381 = vmatprep.subr.mxu0 0.0
    %2382 = vmatpush1.msra.mxu0 0.0
    %2383 = vmatprep.subr.mxu0 0.0
    %2384 = vmatpush1.msra.mxu0 0.0
    %2385 = vmatprep.subr.mxu0 0.0
    %2386 = vmatpush1.msra.mxu0 0.0
    %2387 = vmatprep.subr.mxu0 0.0
    %2388 = vmatpush1.msra.mxu0 0.0
    %2389 = vmatprep.subr.mxu0 0.0
    %2390 = vmatpush1.msra.mxu0 0.0
    %2391 = vmatprep.subr.mxu0 0.0
    %2392 = vmatpush1.msra.mxu0 0.0
    %2393 = vmatprep.subr.mxu0 0.0
    %2394 = vmatpush1.msra.mxu0 0.0
    %2395 = vmatprep.subr.mxu0 0.0
    %2396 = vmatpush1.msra.mxu0 0.0
    %2397 = vmatprep.subr.mxu0 0.0
    %2398 = vmatpush1.msra.mxu0 0.0
    %2399 = vmatprep.subr.mxu0 0.0
    %2400 = vmatpush1.msra.mxu0 0.0
    %2401 = vmatprep.subr.mxu0 0.0
    %2402 = vmatpush1.msra.mxu0 0.0
    %2403 = vmatprep.mubr.f32.mxu0 0.0
    %2404 = vmatmul.mubr.f32.gmra.mrb[0].mxu0 %v2335
    %v2405 = vpop.f32.mrb[0].mxu0
    %v2406 = vadd.f32 0.0, %v2405
    %v2407 = vpop.f32.mrb[0].mxu0
    %2408 = vmatprep.mubr.f32.mxu0 0.0
    %2409 = vmatmul.mubr.f32.gmra.mrb[0].mxu0 %v2337
    %v2410 = vpop.f32.mrb[0].mxu0
    %v2411 = vadd.f32 0.0, %v2410
    %v2412 = vpop.f32.mrb[0].mxu0
    %2413 = vdwg.mxu0
    %2416 = vrot.lane.b32.xlu0 %v1817, 112
    %v2417 = vpop.permute.xlu0 %2416
    %2418 = vrot.lane.b32.xlu0 %v1818, 112
    %v2419 = vpop.permute.xlu0 %2418
    %v2420 = vsel %vm555, %v2417, 0
    %v2422 = vsel %vm555, %v2419, 0
    %2424 = vmatprep.subr.mxu0 0.0
    %2425 = vmatpush1.msra.mxu0 %v1424
    %2426 = vmatprep.subr.mxu0 0.0
    %2427 = vmatpush1.msra.mxu0 %v1425
    %2428 = vmatprep.subr.mxu0 0.0
    %2429 = vmatpush1.msra.mxu0 0.0
    %2430 = vmatprep.subr.mxu0 0.0
    %2431 = vmatpush1.msra.mxu0 0.0
    %2432 = vmatprep.subr.mxu0 0.0
    %2433 = vmatpush1.msra.mxu0 0.0
    %2434 = vmatprep.subr.mxu0 0.0
    %2435 = vmatpush1.msra.mxu0 0.0
    %2436 = vmatprep.subr.mxu0 0.0
    %2437 = vmatpush1.msra.mxu0 0.0
    %2438 = vmatprep.subr.mxu0 0.0
    %2439 = vmatpush1.msra.mxu0 0.0
    %2440 = vmatprep.subr.mxu0 0.0
    %2441 = vmatpush1.msra.mxu0 0.0
    %2442 = vmatprep.subr.mxu0 0.0
    %2443 = vmatpush1.msra.mxu0 0.0
    %2444 = vmatprep.subr.mxu0 0.0
    %2445 = vmatpush1.msra.mxu0 0.0
    %2446 = vmatprep.subr.mxu0 0.0
    %2447 = vmatpush1.msra.mxu0 0.0
    %2448 = vmatprep.subr.mxu0 0.0
    %2449 = vmatpush1.msra.mxu0 0.0
    %2450 = vmatprep.subr.mxu0 0.0
    %2451 = vmatpush1.msra.mxu0 0.0
    %2452 = vmatprep.subr.mxu0 0.0
    %2453 = vmatpush1.msra.mxu0 0.0
    %2454 = vmatprep.subr.mxu0 0.0
    %2455 = vmatpush1.msra.mxu0 0.0
    %2456 = vmatprep.subr.mxu0 0.0
    %2457 = vmatpush1.msra.mxu0 0.0
    %2458 = vmatprep.subr.mxu0 0.0
    %2459 = vmatpush1.msra.mxu0 0.0
    %2460 = vmatprep.subr.mxu0 0.0
    %2461 = vmatpush1.msra.mxu0 0.0
    %2462 = vmatprep.subr.mxu0 0.0
    %2463 = vmatpush1.msra.mxu0 0.0
    %2464 = vmatprep.subr.mxu0 0.0
    %2465 = vmatpush1.msra.mxu0 0.0
    %2466 = vmatprep.subr.mxu0 0.0
    %2467 = vmatpush1.msra.mxu0 0.0
    %2468 = vmatprep.subr.mxu0 0.0
    %2469 = vmatpush1.msra.mxu0 0.0
    %2470 = vmatprep.subr.mxu0 0.0
    %2471 = vmatpush1.msra.mxu0 0.0
    %2472 = vmatprep.subr.mxu0 0.0
    %2473 = vmatpush1.msra.mxu0 0.0
    %2474 = vmatprep.subr.mxu0 0.0
    %2475 = vmatpush1.msra.mxu0 0.0
    %2476 = vmatprep.subr.mxu0 0.0
    %2477 = vmatpush1.msra.mxu0 0.0
    %2478 = vmatprep.subr.mxu0 0.0
    %2479 = vmatpush1.msra.mxu0 0.0
    %2480 = vmatprep.subr.mxu0 0.0
    %2481 = vmatpush1.msra.mxu0 0.0
    %2482 = vmatprep.subr.mxu0 0.0
    %2483 = vmatpush1.msra.mxu0 0.0
    %2484 = vmatprep.subr.mxu0 0.0
    %2485 = vmatpush1.msra.mxu0 0.0
    %2486 = vmatprep.subr.mxu0 0.0
    %2487 = vmatpush1.msra.mxu0 0.0
    %2488 = vmatprep.mubr.f32.mxu0 0.0
    %2489 = vmatmul.mubr.f32.gmra.mrb[0].mxu0 %v2420
    %v2490 = vpop.f32.mrb[0].mxu0
    %v2491 = vadd.f32 0.0, %v2490
    %v2492 = vpop.f32.mrb[0].mxu0
    %2493 = vmatprep.mubr.f32.mxu0 0.0
    %2494 = vmatmul.mubr.f32.gmra.mrb[0].mxu0 %v2422
    %v2495 = vpop.f32.mrb[0].mxu0
    %v2496 = vadd.f32 0.0, %v2495
    %v2497 = vpop.f32.mrb[0].mxu0
    %2498 = vdwg.mxu0
    %v2499 = vsel %vm87, %v1896, 0.0
    %v2500 = vsel %vm87, %v1981, 0.0
    %v2501 = vadd.f32 %v2499, %v2500
    %v2502 = vsel %vm87, %v2066, 0.0
    %v2503 = vadd.f32 %v2501, %v2502
    %v2504 = vsel %vm87, %v2151, 0.0
    %v2505 = vadd.f32 %v2503, %v2504
    %v2506 = vsel %vm87, %v2236, 0.0
    %v2507 = vadd.f32 %v2505, %v2506
    %v2508 = vsel %vm87, %v2321, 0.0
    %v2509 = vadd.f32 %v2507, %v2508
    %v2510 = vsel %vm87, %v2406, 0.0
    %v2511 = vadd.f32 %v2509, %v2510
    %v2512 = vsel %vm87, %v2491, 0.0
    %v2513 = vadd.f32 %v2511, %v2512
    %v2514 = vsel %vm87, %v1901, 0.0
    %v2515 = vsel %vm87, %v1986, 0.0
    %v2516 = vadd.f32 %v2514, %v2515
    %v2517 = vsel %vm87, %v2071, 0.0
    %v2518 = vadd.f32 %v2516, %v2517
    %v2519 = vsel %vm87, %v2156, 0.0
    %v2520 = vadd.f32 %v2518, %v2519
    %v2521 = vsel %vm87, %v2241, 0.0
    %v2522 = vadd.f32 %v2520, %v2521
    %v2523 = vsel %vm87, %v2326, 0.0
    %v2524 = vadd.f32 %v2522, %v2523
    %v2525 = vsel %vm87, %v2411, 0.0
    %v2526 = vadd.f32 %v2524, %v2525
    %v2527 = vsel %vm87, %v2496, 0.0
    %v2528 = vadd.f32 %v2526, %v2527
    %v2530 = vlaneseq
    %v2531 = vshrl.u32 %v2530, 7
    %v2532 = vsub.s32 0, %v2531
    %v2533 = vrot.slane %v86, %v2532
    %v2535 = vadd.f32 %v1394, %v2533
    %v2536 = vadd.f32 %v1409, %v2533
    %v2537 = vadd.f32 %v2513, %v2533
    %v2538 = vadd.f32 %v2528, %v2533
    %v2539 = vmax.f32 %v2535, 0.0
    %v2540 = vmax.f32 %v2536, 0.0
    %v2541 = vmax.f32 %v2537, 0.0
    %v2542 = vmax.f32 %v2538, 0.0
    %s2543 = scalar_lea.vmem [#allocation7], 64
    %v2544 = vld [vmem:[%s2543] sm:$0xff]
    %v2545 = vld [vmem:[%s2543 + $0x8] sm:$0xff]
    %v2546 = vld [vmem:[%s2543 + $0x10] sm:$0xff]
    %v2547 = vld [vmem:[%s2543 + $0x18] sm:$0xff]
    %v2548 = vld [vmem:[%s2543 + $0x20] sm:$0xff]
    %v2549 = vld [vmem:[%s2543 + $0x28] sm:$0xff]
    %v2550 = vld [vmem:[%s2543 + $0x30] sm:$0xff]
    %v2551 = vld [vmem:[%s2543 + $0x38] sm:$0xff]
    %s2552 = scalar_lea.vmem %s3, 1
    %v2553 = vld [vmem:[%s2552] sm:$0x1]
    %v2555 = vsel %vm87, %v2539, 0
    %v2558 = vsel %vm87, %v2540, 0
    %v2561 = vsel %vm87, %v2541, 0
    %v2564 = vsel %vm87, %v2542, 0
    %2566 = vmatprep.subr.mxu0 0.0
    %2567 = vmatpush1.msra.mxu0 %v2544
    %2568 = vmatprep.subr.mxu0 0.0
    %2569 = vmatpush1.msra.mxu0 %v2545
    %2570 = vmatprep.subr.mxu0 0.0
    %2571 = vmatpush1.msra.mxu0 %v2546
    %2572 = vmatprep.subr.mxu0 0.0
    %2573 = vmatpush1.msra.mxu0 %v2547
    %2574 = vmatprep.subr.mxu0 0.0
    %2575 = vmatpush1.msra.mxu0 %v2548
    %2576 = vmatprep.subr.mxu0 0.0
    %2577 = vmatpush1.msra.mxu0 %v2549
    %2578 = vmatprep.subr.mxu0 0.0
    %2579 = vmatpush1.msra.mxu0 %v2550
    %2580 = vmatprep.subr.mxu0 0.0
    %2581 = vmatpush1.msra.mxu0 %v2551
    %2582 = vmatprep.subr.mxu0 0.0
    %2583 = vmatpush1.msra.mxu0 0.0
    %2584 = vmatprep.subr.mxu0 0.0
    %2585 = vmatpush1.msra.mxu0 0.0
    %2586 = vmatprep.subr.mxu0 0.0
    %2587 = vmatpush1.msra.mxu0 0.0
    %2588 = vmatprep.subr.mxu0 0.0
    %2589 = vmatpush1.msra.mxu0 0.0
    %2590 = vmatprep.subr.mxu0 0.0
    %2591 = vmatpush1.msra.mxu0 0.0
    %2592 = vmatprep.subr.mxu0 0.0
    %2593 = vmatpush1.msra.mxu0 0.0
    %2594 = vmatprep.subr.mxu0 0.0
    %2595 = vmatpush1.msra.mxu0 0.0
    %2596 = vmatprep.subr.mxu0 0.0
    %2597 = vmatpush1.msra.mxu0 0.0
    %2598 = vmatprep.subr.mxu0 0.0
    %2599 = vmatpush1.msra.mxu0 0.0
    %2600 = vmatprep.subr.mxu0 0.0
    %2601 = vmatpush1.msra.mxu0 0.0
    %2602 = vmatprep.subr.mxu0 0.0
    %2603 = vmatpush1.msra.mxu0 0.0
    %2604 = vmatprep.subr.mxu0 0.0
    %2605 = vmatpush1.msra.mxu0 0.0
    %2606 = vmatprep.subr.mxu0 0.0
    %2607 = vmatpush1.msra.mxu0 0.0
    %2608 = vmatprep.subr.mxu0 0.0
    %2609 = vmatpush1.msra.mxu0 0.0
    %2610 = vmatprep.subr.mxu0 0.0
    %2611 = vmatpush1.msra.mxu0 0.0
    %2612 = vmatprep.subr.mxu0 0.0
    %2613 = vmatpush1.msra.mxu0 0.0
    %2614 = vmatprep.subr.mxu0 0.0
    %2615 = vmatpush1.msra.mxu0 0.0
    %2616 = vmatprep.subr.mxu0 0.0
    %2617 = vmatpush1.msra.mxu0 0.0
    %2618 = vmatprep.subr.mxu0 0.0
    %2619 = vmatpush1.msra.mxu0 0.0
    %2620 = vmatprep.subr.mxu0 0.0
    %2621 = vmatpush1.msra.mxu0 0.0
    %2622 = vmatprep.subr.mxu0 0.0
    %2623 = vmatpush1.msra.mxu0 0.0
    %2624 = vmatprep.subr.mxu0 0.0
    %2625 = vmatpush1.msra.mxu0 0.0
    %2626 = vmatprep.subr.mxu0 0.0
    %2627 = vmatpush1.msra.mxu0 0.0
    %2628 = vmatprep.subr.mxu0 0.0
    %2629 = vmatpush1.msra.mxu0 0.0
    %2630 = vmatprep.mubr.f32.mxu0 0.0
    %2631 = vmatmul.mubr.f32.gmra.mrb[0].mxu0 %v2555
    %v2632 = vpop.f32.mrb[0].mxu0
    %v2633 = vadd.f32 0.0, %v2632
    %v2634 = vpop.f32.mrb[0].mxu0
    %2635 = vmatprep.mubr.f32.mxu0 0.0
    %2636 = vmatmul.mubr.f32.gmra.mrb[0].mxu0 %v2558
    %v2637 = vpop.f32.mrb[0].mxu0
    %v2638 = vadd.f32 0.0, %v2637
    %v2639 = vpop.f32.mrb[0].mxu0
    %2640 = vmatprep.mubr.f32.mxu0 0.0
    %2641 = vmatmul.mubr.f32.gmra.mrb[0].mxu0 %v2561
    %v2642 = vpop.f32.mrb[0].mxu0
    %v2643 = vadd.f32 0.0, %v2642
    %v2644 = vpop.f32.mrb[0].mxu0
    %2645 = vmatprep.mubr.f32.mxu0 0.0
    %2646 = vmatmul.mubr.f32.gmra.mrb[0].mxu0 %v2564
    %v2647 = vpop.f32.mrb[0].mxu0
    %v2648 = vadd.f32 0.0, %v2647
    %v2649 = vpop.f32.mrb[0].mxu0
    %2650 = vdwg.mxu0
    %2655 = vrot.lane.b32.xlu0 %v2633, 64
    %v2656 = vpop.permute.xlu0 %2655
    %2657 = vrot.lane.b32.xlu0 %v2638, 64
    %v2658 = vpop.permute.xlu0 %2657
    %2659 = vrot.lane.b32.xlu0 %v2643, 64
    %v2660 = vpop.permute.xlu0 %2659
    %2661 = vrot.lane.b32.xlu0 %v2648, 64
    %v2662 = vpop.permute.xlu0 %2661
    %2667 = vxpose.xlu0.b32.start [1/16] %v2656, 128
    %2668 = vxpose.xlu0.b32.cont [2/16] %v2658, 128
    %2669 = vxpose.xlu0.b32.cont [3/16] %v2660, 128
    %2670 = vxpose.xlu0.b32.cont [4/16] %v2662, 128
    %2671 = vxpose.xlu0.b32.cont [5/16] 0.0, 128
    %2672 = vxpose.xlu0.b32.cont [6/16] 0.0, 128
    %2673 = vxpose.xlu0.b32.cont [7/16] 0.0, 128
    %2674 = vxpose.xlu0.b32.cont [8/16] 0.0, 128
    %2675 = vxpose.xlu0.b32.cont [9/16] 0.0, 128
    %2676 = vxpose.xlu0.b32.cont [10/16] 0.0, 128
    %2677 = vxpose.xlu0.b32.cont [11/16] 0.0, 128
    %2678 = vxpose.xlu0.b32.cont [12/16] 0.0, 128
    %2679 = vxpose.xlu0.b32.cont [13/16] 0.0, 128
    %2680 = vxpose.xlu0.b32.cont [14/16] 0.0, 128
    %2681 = vxpose.xlu0.b32.cont [15/16] 0.0, 128
    %2682 = vxpose.xlu0.b32.end [16/16] 0.0, 128
    %v2683 = vpop.trf.xlu0
    %v2684 = vpop.trf.xlu0
    %v2685 = vpop.trf.xlu0
    %v2686 = vpop.trf.xlu0
    %v2687 = vpop.trf.xlu0
    %v2688 = vpop.trf.xlu0
    %v2689 = vpop.trf.xlu0
    %v2690 = vpop.trf.xlu0
    %v2691 = vpop.trf.xlu0
    %v2692 = vpop.trf.xlu0
    %v2693 = vpop.trf.xlu0
    %v2694 = vpop.trf.xlu0
    %v2695 = vpop.trf.xlu0
    %v2696 = vpop.trf.xlu0
    %v2697 = vpop.trf.xlu0
    %v2698 = vpop.trf.xlu0
    %v2699 = vmul.f32 %v244, %v2633
    %v2700 = vmul.f32 %v244, %v2638
    %v2701 = vmul.f32 %v248, %v2633
    %v2702 = vmul.f32 %v248, %v2638
    %v2703 = vmul.f32 %v252, %v2633
    %v2704 = vmul.f32 %v252, %v2638
    %v2705 = vmul.f32 %v256, %v2633
    %v2706 = vmul.f32 %v256, %v2638
    %v2707 = vmul.f32 %v260, %v2633
    %v2708 = vmul.f32 %v260, %v2638
    %v2709 = vmul.f32 %v264, %v2633
    %v2710 = vmul.f32 %v264, %v2638
    %v2711 = vmul.f32 %v268, %v2633
    %v2712 = vmul.f32 %v268, %v2638
    %v2713 = vmul.f32 %v272, %v2633
    %v2714 = vmul.f32 %v272, %v2638
    %v2715 = vlaneseq
    %v2716 = vshrl.u32 %v2715, 7
    %v2717 = vsub.s32 0, %v2716
    %v2718 = vrot.slane %v2684, %v2717
    %2720 = vbcast.lane.b32.xlu0 %v2718, 256
    %v2721 = vpop.permute.xlu0 %2720
    %s2723 = sor.u32 256, 8
    %2724 = vbcast.lane.b32.xlu0 %v2718, %s2723
    %v2725 = vpop.permute.xlu0 %2724
    %v2726 = vlaneseq
    %v2727 = vshrl.u32 %v2726, 7
    %v2728 = vsub.s32 1, %v2727
    %v2729 = vrot.slane %v2684, %v2728
    %2731 = vbcast.lane.b32.xlu0 %v2729, 256
    %v2732 = vpop.permute.xlu0 %2731
    %s2734 = sor.u32 256, 8
    %2735 = vbcast.lane.b32.xlu0 %v2729, %s2734
    %v2736 = vpop.permute.xlu0 %2735
    %v2737 = vlaneseq
    %v2738 = vshrl.u32 %v2737, 7
    %v2739 = vsub.s32 2, %v2738
    %v2740 = vrot.slane %v2684, %v2739
    %2742 = vbcast.lane.b32.xlu0 %v2740, 256
    %v2743 = vpop.permute.xlu0 %2742
    %s2745 = sor.u32 256, 8
    %2746 = vbcast.lane.b32.xlu0 %v2740, %s2745
    %v2747 = vpop.permute.xlu0 %2746
    %v2748 = vlaneseq
    %v2749 = vshrl.u32 %v2748, 7
    %v2750 = vsub.s32 3, %v2749
    %v2751 = vrot.slane %v2684, %v2750
    %2753 = vbcast.lane.b32.xlu0 %v2751, 256
    %v2754 = vpop.permute.xlu0 %2753
    %s2756 = sor.u32 256, 8
    %2757 = vbcast.lane.b32.xlu0 %v2751, %s2756
    %v2758 = vpop.permute.xlu0 %2757
    %v2759 = vlaneseq
    %v2760 = vshrl.u32 %v2759, 7
    %v2761 = vsub.s32 4, %v2760
    %v2762 = vrot.slane %v2684, %v2761
    %2764 = vbcast.lane.b32.xlu0 %v2762, 256
    %v2765 = vpop.permute.xlu0 %2764
    %s2767 = sor.u32 256, 8
    %2768 = vbcast.lane.b32.xlu0 %v2762, %s2767
    %v2769 = vpop.permute.xlu0 %2768
    %v2770 = vlaneseq
    %v2771 = vshrl.u32 %v2770, 7
    %v2772 = vsub.s32 5, %v2771
    %v2773 = vrot.slane %v2684, %v2772
    %2775 = vbcast.lane.b32.xlu0 %v2773, 256
    %v2776 = vpop.permute.xlu0 %2775
    %s2778 = sor.u32 256, 8
    %2779 = vbcast.lane.b32.xlu0 %v2773, %s2778
    %v2780 = vpop.permute.xlu0 %2779
    %v2781 = vlaneseq
    %v2782 = vshrl.u32 %v2781, 7
    %v2783 = vsub.s32 6, %v2782
    %v2784 = vrot.slane %v2684, %v2783
    %2786 = vbcast.lane.b32.xlu0 %v2784, 256
    %v2787 = vpop.permute.xlu0 %2786
    %s2789 = sor.u32 256, 8
    %2790 = vbcast.lane.b32.xlu0 %v2784, %s2789
    %v2791 = vpop.permute.xlu0 %2790
    %v2792 = vlaneseq
    %v2793 = vshrl.u32 %v2792, 7
    %v2794 = vsub.s32 7, %v2793
    %v2795 = vrot.slane %v2684, %v2794
    %2797 = vbcast.lane.b32.xlu0 %v2795, 256
    %v2798 = vpop.permute.xlu0 %2797
    %s2800 = sor.u32 256, 8
    %2801 = vbcast.lane.b32.xlu0 %v2795, %s2800
    %v2802 = vpop.permute.xlu0 %2801
    %v2804 = vcombine.high %v2683, %v2683
    %v2806 = vunpack.c.l.s4 1966171168
    %v2807 = vunpack.c.0.s8 %v2806
    %v2808 = vlaneseq
    %v2809 = vshrl.u32 %v2808, 7
    %v2810 = vsub.s32 %v2807, %v2809
    %v2811 = vrot.slane %v2683, %v2810
    %v2813 = vunpack.c.l.s4 1966171168
    %v2814 = vunpack.c.0.s8 %v2813
    %v2815 = vlaneseq
    %v2816 = vshrl.u32 %v2815, 7
    %v2817 = vsub.s32 %v2814, %v2816
    %v2818 = vrot.slane %v2804, %v2817
    %v2819 = vcombine.high %v2811, %v2811
    %v2820 = vcombine.high %v2818, %v2818
    %v2822 = vunpack.c.l.s4 1966171168
    %v2823 = vunpack.c.0.s8 %v2822
    %v2824 = vlaneseq
    %v2825 = vshrl.u32 %v2824, 7
    %v2826 = vsub.s32 %v2823, %v2825
    %v2827 = vrot.slane %v2811, %v2826
    %v2829 = vunpack.c.l.s4 1966171168
    %v2830 = vunpack.c.0.s8 %v2829
    %v2831 = vlaneseq
    %v2832 = vshrl.u32 %v2831, 7
    %v2833 = vsub.s32 %v2830, %v2832
    %v2834 = vrot.slane %v2818, %v2833
    %v2836 = vunpack.c.l.s4 1966171168
    %v2837 = vunpack.c.0.s8 %v2836
    %v2838 = vlaneseq
    %v2839 = vshrl.u32 %v2838, 7
    %v2840 = vsub.s32 %v2837, %v2839
    %v2841 = vrot.slane %v2819, %v2840
    %v2843 = vunpack.c.l.s4 1966171168
    %v2844 = vunpack.c.0.s8 %v2843
    %v2845 = vlaneseq
    %v2846 = vshrl.u32 %v2845, 7
    %v2847 = vsub.s32 %v2844, %v2846
    %v2848 = vrot.slane %v2820, %v2847
    %v2849 = vcombine.high %v2827, %v2827
    %v2850 = vcombine.high %v2834, %v2834
    %v2851 = vcombine.high %v2841, %v2841
    %v2852 = vcombine.high %v2848, %v2848
    %v2853 = vlaneseq
    %v2854 = vshrl.u32 %v2853, 7
    %v2855 = vsub.s32 0, %v2854
    %v2856 = vrot.slane %v2827, %v2855
    %v2857 = vlaneseq
    %v2858 = vshrl.u32 %v2857, 7
    %v2859 = vsub.s32 0, %v2858
    %v2860 = vrot.slane %v2841, %v2859
    %v2861 = vlaneseq
    %v2862 = vshrl.u32 %v2861, 7
    %v2863 = vsub.s32 0, %v2862
    %v2864 = vrot.slane %v2849, %v2863
    %v2865 = vlaneseq
    %v2866 = vshrl.u32 %v2865, 7
    %v2867 = vsub.s32 0, %v2866
    %v2868 = vrot.slane %v2851, %v2867
    %v2869 = vlaneseq
    %v2870 = vshrl.u32 %v2869, 7
    %v2871 = vsub.s32 0, %v2870
    %v2872 = vrot.slane %v2834, %v2871
    %v2873 = vlaneseq
    %v2874 = vshrl.u32 %v2873, 7
    %v2875 = vsub.s32 0, %v2874
    %v2876 = vrot.slane %v2848, %v2875
    %v2877 = vlaneseq
    %v2878 = vshrl.u32 %v2877, 7
    %v2879 = vsub.s32 0, %v2878
    %v2880 = vrot.slane %v2850, %v2879
    %v2881 = vlaneseq
    %v2882 = vshrl.u32 %v2881, 7
    %v2883 = vsub.s32 0, %v2882
    %v2884 = vrot.slane %v2852, %v2883
    %v2893 = vadd.f32 %v2721, %v2856
    %v2894 = vadd.f32 %v2725, %v2856
    %v2895 = vadd.f32 %v2732, %v2860
    %v2896 = vadd.f32 %v2736, %v2860
    %v2897 = vadd.f32 %v2743, %v2864
    %v2898 = vadd.f32 %v2747, %v2864
    %v2899 = vadd.f32 %v2754, %v2868
    %v2900 = vadd.f32 %v2758, %v2868
    %v2901 = vadd.f32 %v2765, %v2872
    %v2902 = vadd.f32 %v2769, %v2872
    %v2903 = vadd.f32 %v2776, %v2876
    %v2904 = vadd.f32 %v2780, %v2876
    %v2905 = vadd.f32 %v2787, %v2880
    %v2906 = vadd.f32 %v2791, %v2880
    %v2907 = vadd.f32 %v2798, %v2884
    %v2908 = vadd.f32 %v2802, %v2884
    %vm2909 = vcmp.gt.f32.partialorder %v2893, 0.0
    %vm2910 = vcmp.gt.f32.partialorder %v2894, 0.0
    %vm2911 = vcmp.gt.f32.partialorder %v2895, 0.0
    %vm2912 = vcmp.gt.f32.partialorder %v2896, 0.0
    %vm2913 = vcmp.gt.f32.partialorder %v2897, 0.0
    %vm2914 = vcmp.gt.f32.partialorder %v2898, 0.0
    %vm2915 = vcmp.gt.f32.partialorder %v2899, 0.0
    %vm2916 = vcmp.gt.f32.partialorder %v2900, 0.0
    %vm2917 = vcmp.gt.f32.partialorder %v2901, 0.0
    %vm2918 = vcmp.gt.f32.partialorder %v2902, 0.0
    %vm2919 = vcmp.gt.f32.partialorder %v2903, 0.0
    %vm2920 = vcmp.gt.f32.partialorder %v2904, 0.0
    %vm2921 = vcmp.gt.f32.partialorder %v2905, 0.0
    %vm2922 = vcmp.gt.f32.partialorder %v2906, 0.0
    %vm2923 = vcmp.gt.f32.partialorder %v2907, 0.0
    %vm2924 = vcmp.gt.f32.partialorder %v2908, 0.0
    %v2925 = vmul.f32 %v2893, 0.2
    %v2926 = vmul.f32 %v2894, 0.2
    %v2927 = vmul.f32 %v2895, 0.2
    %v2928 = vmul.f32 %v2896, 0.2
    %v2929 = vmul.f32 %v2897, 0.2
    %v2930 = vmul.f32 %v2898, 0.2
    %v2931 = vmul.f32 %v2899, 0.2
    %v2932 = vmul.f32 %v2900, 0.2
    %v2933 = vmul.f32 %v2901, 0.2
    %v2934 = vmul.f32 %v2902, 0.2
    %v2935 = vmul.f32 %v2903, 0.2
    %v2936 = vmul.f32 %v2904, 0.2
    %v2937 = vmul.f32 %v2905, 0.2
    %v2938 = vmul.f32 %v2906, 0.2
    %v2939 = vmul.f32 %v2907, 0.2
    %v2940 = vmul.f32 %v2908, 0.2
    %v2941 = vsel %vm2909, %v2893, %v2925
    %v2942 = vsel %vm2910, %v2894, %v2926
    %v2943 = vsel %vm2911, %v2895, %v2927
    %v2944 = vsel %vm2912, %v2896, %v2928
    %v2945 = vsel %vm2913, %v2897, %v2929
    %v2946 = vsel %vm2914, %v2898, %v2930
    %v2947 = vsel %vm2915, %v2899, %v2931
    %v2948 = vsel %vm2916, %v2900, %v2932
    %v2949 = vsel %vm2917, %v2901, %v2933
    %v2950 = vsel %vm2918, %v2902, %v2934
    %v2951 = vsel %vm2919, %v2903, %v2935
    %v2952 = vsel %vm2920, %v2904, %v2936
    %v2953 = vsel %vm2921, %v2905, %v2937
    %v2954 = vsel %vm2922, %v2906, %v2938
    %v2955 = vsel %vm2923, %v2907, %v2939
    %v2956 = vsel %vm2924, %v2908, %v2940
    %v2957 = vadd.f32 %v2941, %v66
    %v2958 = vadd.f32 %v2942, %v67
    %v2959 = vadd.f32 %v2943, %v66
    %v2960 = vadd.f32 %v2944, %v67
    %v2961 = vadd.f32 %v2945, %v66
    %v2962 = vadd.f32 %v2946, %v67
    %v2963 = vadd.f32 %v2947, %v66
    %v2964 = vadd.f32 %v2948, %v67
    %v2965 = vadd.f32 %v2949, %v66
    %v2966 = vadd.f32 %v2950, %v67
    %v2967 = vadd.f32 %v2951, %v66
    %v2968 = vadd.f32 %v2952, %v67
    %v2969 = vadd.f32 %v2953, %v66
    %v2970 = vadd.f32 %v2954, %v67
    %v2971 = vadd.f32 %v2955, %v66
    %v2972 = vadd.f32 %v2956, %v67
    %v2973 = vsel %vm555, %v2957, -inf
    %2974 = vmax.xlane.f32.xlu0 %v2973
    %v2975 = vpop.xlane.xlu0 %2974
    %v2976 = vsel %vm555, %v2958, -inf
    %2977 = vmax.xlane.f32.xlu0 %v2976
    %v2978 = vpop.xlane.xlu0 %2977
    %v2979 = vsel %vm555, %v2959, -inf
    %2980 = vmax.xlane.f32.xlu0 %v2979
    %v2981 = vpop.xlane.xlu0 %2980
    %v2982 = vsel %vm555, %v2960, -inf
    %2983 = vmax.xlane.f32.xlu0 %v2982
    %v2984 = vpop.xlane.xlu0 %2983
    %v2985 = vsel %vm555, %v2961, -inf
    %2986 = vmax.xlane.f32.xlu0 %v2985
    %v2987 = vpop.xlane.xlu0 %2986
    %v2988 = vsel %vm555, %v2962, -inf
    %2989 = vmax.xlane.f32.xlu0 %v2988
    %v2990 = vpop.xlane.xlu0 %2989
    %v2991 = vsel %vm555, %v2963, -inf
    %2992 = vmax.xlane.f32.xlu0 %v2991
    %v2993 = vpop.xlane.xlu0 %2992
    %v2994 = vsel %vm555, %v2964, -inf
    %2995 = vmax.xlane.f32.xlu0 %v2994
    %v2996 = vpop.xlane.xlu0 %2995
    %v2997 = vsel %vm555, %v2965, -inf
    %2998 = vmax.xlane.f32.xlu0 %v2997
    %v2999 = vpop.xlane.xlu0 %2998
    %v3000 = vsel %vm555, %v2966, -inf
    %3001 = vmax.xlane.f32.xlu0 %v3000
    %v3002 = vpop.xlane.xlu0 %3001
    %v3003 = vsel %vm555, %v2967, -inf
    %3004 = vmax.xlane.f32.xlu0 %v3003
    %v3005 = vpop.xlane.xlu0 %3004
    %v3006 = vsel %vm555, %v2968, -inf
    %3007 = vmax.xlane.f32.xlu0 %v3006
    %v3008 = vpop.xlane.xlu0 %3007
    %v3009 = vsel %vm555, %v2969, -inf
    %3010 = vmax.xlane.f32.xlu0 %v3009
    %v3011 = vpop.xlane.xlu0 %3010
    %v3012 = vsel %vm555, %v2970, -inf
    %3013 = vmax.xlane.f32.xlu0 %v3012
    %v3014 = vpop.xlane.xlu0 %3013
    %v3015 = vsel %vm555, %v2971, -inf
    %3016 = vmax.xlane.f32.xlu0 %v3015
    %v3017 = vpop.xlane.xlu0 %3016
    %v3018 = vsel %vm555, %v2972, -inf
    %3019 = vmax.xlane.f32.xlu0 %v3018
    %v3020 = vpop.xlane.xlu0 %3019
    %v3021 = vsub.f32 %v2957, %v2975
    %v3022 = vsub.f32 %v2958, %v2978
    %v3023 = vsub.f32 %v2959, %v2981
    %v3024 = vsub.f32 %v2960, %v2984
    %v3025 = vsub.f32 %v2961, %v2987
    %v3026 = vsub.f32 %v2962, %v2990
    %v3027 = vsub.f32 %v2963, %v2993
    %v3028 = vsub.f32 %v2964, %v2996
    %v3029 = vsub.f32 %v2965, %v2999
    %v3030 = vsub.f32 %v2966, %v3002
    %v3031 = vsub.f32 %v2967, %v3005
    %v3032 = vsub.f32 %v2968, %v3008
    %v3033 = vsub.f32 %v2969, %v3011
    %v3034 = vsub.f32 %v2970, %v3014
    %v3035 = vsub.f32 %v2971, %v3017
    %v3036 = vsub.f32 %v2972, %v3020
    %v3037 = vmul.f32 %v3021, 1.442695
    %v3038 = vpow.pop %v3037
    %v3039 = vmul.f32 %v3022, 1.442695
    %v3040 = vpow.pop %v3039
    %v3041 = vmul.f32 %v3023, 1.442695
    %v3042 = vpow.pop %v3041
    %v3043 = vmul.f32 %v3024, 1.442695
    %v3044 = vpow.pop %v3043
    %v3045 = vmul.f32 %v3025, 1.442695
    %v3046 = vpow.pop %v3045
    %v3047 = vmul.f32 %v3026, 1.442695
    %v3048 = vpow.pop %v3047
    %v3049 = vmul.f32 %v3027, 1.442695
    %v3050 = vpow.pop %v3049
    %v3051 = vmul.f32 %v3028, 1.442695
    %v3052 = vpow.pop %v3051
    %v3053 = vmul.f32 %v3029, 1.442695
    %v3054 = vpow.pop %v3053
    %v3055 = vmul.f32 %v3030, 1.442695
    %v3056 = vpow.pop %v3055
    %v3057 = vmul.f32 %v3031, 1.442695
    %v3058 = vpow.pop %v3057
    %v3059 = vmul.f32 %v3032, 1.442695
    %v3060 = vpow.pop %v3059
    %v3061 = vmul.f32 %v3033, 1.442695
    %v3062 = vpow.pop %v3061
    %v3063 = vmul.f32 %v3034, 1.442695
    %v3064 = vpow.pop %v3063
    %v3065 = vmul.f32 %v3035, 1.442695
    %v3066 = vpow.pop %v3065
    %v3067 = vmul.f32 %v3036, 1.442695
    %v3068 = vpow.pop %v3067
    %v3069 = vsel %vm555, %v3038, 0.0
    %3070 = vadd.xlane.f32.xlu0 %v3069
    %v3071 = vpop.xlane.xlu0 %3070
    %v3072 = vsel %vm555, %v3040, 0.0
    %3073 = vadd.xlane.f32.xlu0 %v3072
    %v3074 = vpop.xlane.xlu0 %3073
    %v3075 = vsel %vm555, %v3042, 0.0
    %3076 = vadd.xlane.f32.xlu0 %v3075
    %v3077 = vpop.xlane.xlu0 %3076
    %v3078 = vsel %vm555, %v3044, 0.0
    %3079 = vadd.xlane.f32.xlu0 %v3078
    %v3080 = vpop.xlane.xlu0 %3079
    %v3081 = vsel %vm555, %v3046, 0.0
    %3082 = vadd.xlane.f32.xlu0 %v3081
    %v3083 = vpop.xlane.xlu0 %3082
    %v3084 = vsel %vm555, %v3048, 0.0
    %3085 = vadd.xlane.f32.xlu0 %v3084
    %v3086 = vpop.xlane.xlu0 %3085
    %v3087 = vsel %vm555, %v3050, 0.0
    %3088 = vadd.xlane.f32.xlu0 %v3087
    %v3089 = vpop.xlane.xlu0 %3088
    %v3090 = vsel %vm555, %v3052, 0.0
    %3091 = vadd.xlane.f32.xlu0 %v3090
    %v3092 = vpop.xlane.xlu0 %3091
    %v3093 = vsel %vm555, %v3054, 0.0
    %3094 = vadd.xlane.f32.xlu0 %v3093
    %v3095 = vpop.xlane.xlu0 %3094
    %v3096 = vsel %vm555, %v3056, 0.0
    %3097 = vadd.xlane.f32.xlu0 %v3096
    %v3098 = vpop.xlane.xlu0 %3097
    %v3099 = vsel %vm555, %v3058, 0.0
    %3100 = vadd.xlane.f32.xlu0 %v3099
    %v3101 = vpop.xlane.xlu0 %3100
    %v3102 = vsel %vm555, %v3060, 0.0
    %3103 = vadd.xlane.f32.xlu0 %v3102
    %v3104 = vpop.xlane.xlu0 %3103
    %v3105 = vsel %vm555, %v3062, 0.0
    %3106 = vadd.xlane.f32.xlu0 %v3105
    %v3107 = vpop.xlane.xlu0 %3106
    %v3108 = vsel %vm555, %v3064, 0.0
    %3109 = vadd.xlane.f32.xlu0 %v3108
    %v3110 = vpop.xlane.xlu0 %3109
    %v3111 = vsel %vm555, %v3066, 0.0
    %3112 = vadd.xlane.f32.xlu0 %v3111
    %v3113 = vpop.xlane.xlu0 %3112
    %v3114 = vsel %vm555, %v3068, 0.0
    %3115 = vadd.xlane.f32.xlu0 %v3114
    %v3116 = vpop.xlane.xlu0 %3115
    %v3117 = vrcp.pop %v3071
    %v3118 = vrcp.pop %v3074
    %v3119 = vrcp.pop %v3077
    %v3120 = vrcp.pop %v3080
    %v3121 = vrcp.pop %v3083
    %v3122 = vrcp.pop %v3086
    %v3123 = vrcp.pop %v3089
    %v3124 = vrcp.pop %v3092
    %v3125 = vrcp.pop %v3095
    %v3126 = vrcp.pop %v3098
    %v3127 = vrcp.pop %v3101
    %v3128 = vrcp.pop %v3104
    %v3129 = vrcp.pop %v3107
    %v3130 = vrcp.pop %v3110
    %v3131 = vrcp.pop %v3113
    %v3132 = vrcp.pop %v3116
    %v3133 = vmul.f32 %v3038, %v3117
    %v3134 = vmul.f32 %v3040, %v3118
    %v3135 = vmul.f32 %v3042, %v3119
    %v3136 = vmul.f32 %v3044, %v3120
    %v3137 = vmul.f32 %v3046, %v3121
    %v3138 = vmul.f32 %v3048, %v3122
    %v3139 = vmul.f32 %v3050, %v3123
    %v3140 = vmul.f32 %v3052, %v3124
    %v3141 = vmul.f32 %v3054, %v3125
    %v3142 = vmul.f32 %v3056, %v3126
    %v3143 = vmul.f32 %v3058, %v3127
    %v3144 = vmul.f32 %v3060, %v3128
    %v3145 = vmul.f32 %v3062, %v3129
    %v3146 = vmul.f32 %v3064, %v3130
    %v3147 = vmul.f32 %v3066, %v3131
    %v3148 = vmul.f32 %v3068, %v3132
    %v3150 = vsel %vm555, %v3133, 0
    %v3153 = vsel %vm555, %v3134, 0
    %3155 = vmatprep.subr.mxu0 0.0
    %3156 = vmatpush1.msra.mxu0 %v2699
    %3157 = vmatprep.subr.mxu0 0.0
    %3158 = vmatpush1.msra.mxu0 %v2700
    %3159 = vmatprep.subr.mxu0 0.0
    %3160 = vmatpush1.msra.mxu0 0.0
    %3161 = vmatprep.subr.mxu0 0.0
    %3162 = vmatpush1.msra.mxu0 0.0
    %3163 = vmatprep.subr.mxu0 0.0
    %3164 = vmatpush1.msra.mxu0 0.0
    %3165 = vmatprep.subr.mxu0 0.0
    %3166 = vmatpush1.msra.mxu0 0.0
    %3167 = vmatprep.subr.mxu0 0.0
    %3168 = vmatpush1.msra.mxu0 0.0
    %3169 = vmatprep.subr.mxu0 0.0
    %3170 = vmatpush1.msra.mxu0 0.0
    %3171 = vmatprep.subr.mxu0 0.0
    %3172 = vmatpush1.msra.mxu0 0.0
    %3173 = vmatprep.subr.mxu0 0.0
    %3174 = vmatpush1.msra.mxu0 0.0
    %3175 = vmatprep.subr.mxu0 0.0
    %3176 = vmatpush1.msra.mxu0 0.0
    %3177 = vmatprep.subr.mxu0 0.0
    %3178 = vmatpush1.msra.mxu0 0.0
    %3179 = vmatprep.subr.mxu0 0.0
    %3180 = vmatpush1.msra.mxu0 0.0
    %3181 = vmatprep.subr.mxu0 0.0
    %3182 = vmatpush1.msra.mxu0 0.0
    %3183 = vmatprep.subr.mxu0 0.0
    %3184 = vmatpush1.msra.mxu0 0.0
    %3185 = vmatprep.subr.mxu0 0.0
    %3186 = vmatpush1.msra.mxu0 0.0
    %3187 = vmatprep.subr.mxu0 0.0
    %3188 = vmatpush1.msra.mxu0 0.0
    %3189 = vmatprep.subr.mxu0 0.0
    %3190 = vmatpush1.msra.mxu0 0.0
    %3191 = vmatprep.subr.mxu0 0.0
    %3192 = vmatpush1.msra.mxu0 0.0
    %3193 = vmatprep.subr.mxu0 0.0
    %3194 = vmatpush1.msra.mxu0 0.0
    %3195 = vmatprep.subr.mxu0 0.0
    %3196 = vmatpush1.msra.mxu0 0.0
    %3197 = vmatprep.subr.mxu0 0.0
    %3198 = vmatpush1.msra.mxu0 0.0
    %3199 = vmatprep.subr.mxu0 0.0
    %3200 = vmatpush1.msra.mxu0 0.0
    %3201 = vmatprep.subr.mxu0 0.0
    %3202 = vmatpush1.msra.mxu0 0.0
    %3203 = vmatprep.subr.mxu0 0.0
    %3204 = vmatpush1.msra.mxu0 0.0
    %3205 = vmatprep.subr.mxu0 0.0
    %3206 = vmatpush1.msra.mxu0 0.0
    %3207 = vmatprep.subr.mxu0 0.0
    %3208 = vmatpush1.msra.mxu0 0.0
    %3209 = vmatprep.subr.mxu0 0.0
    %3210 = vmatpush1.msra.mxu0 0.0
    %3211 = vmatprep.subr.mxu0 0.0
    %3212 = vmatpush1.msra.mxu0 0.0
    %3213 = vmatprep.subr.mxu0 0.0
    %3214 = vmatpush1.msra.mxu0 0.0
    %3215 = vmatprep.subr.mxu0 0.0
    %3216 = vmatpush1.msra.mxu0 0.0
    %3217 = vmatprep.subr.mxu0 0.0
    %3218 = vmatpush1.msra.mxu0 0.0
    %3219 = vmatprep.mubr.f32.mxu0 0.0
    %3220 = vmatmul.mubr.f32.gmra.mrb[0].mxu0 %v3150
    %v3221 = vpop.f32.mrb[0].mxu0
    %v3222 = vadd.f32 0.0, %v3221
    %v3223 = vpop.f32.mrb[0].mxu0
    %3224 = vmatprep.mubr.f32.mxu0 0.0
    %3225 = vmatmul.mubr.f32.gmra.mrb[0].mxu0 %v3153
    %v3226 = vpop.f32.mrb[0].mxu0
    %v3227 = vadd.f32 0.0, %v3226
    %v3228 = vpop.f32.mrb[0].mxu0
    %3229 = vdwg.mxu0
    %v3231 = vsel %vm555, %v3135, 0
    %v3234 = vsel %vm555, %v3136, 0
    %3236 = vmatprep.subr.mxu0 0.0
    %3237 = vmatpush1.msra.mxu0 %v2701
    %3238 = vmatprep.subr.mxu0 0.0
    %3239 = vmatpush1.msra.mxu0 %v2702
    %3240 = vmatprep.subr.mxu0 0.0
    %3241 = vmatpush1.msra.mxu0 0.0
    %3242 = vmatprep.subr.mxu0 0.0
    %3243 = vmatpush1.msra.mxu0 0.0
    %3244 = vmatprep.subr.mxu0 0.0
    %3245 = vmatpush1.msra.mxu0 0.0
    %3246 = vmatprep.subr.mxu0 0.0
    %3247 = vmatpush1.msra.mxu0 0.0
    %3248 = vmatprep.subr.mxu0 0.0
    %3249 = vmatpush1.msra.mxu0 0.0
    %3250 = vmatprep.subr.mxu0 0.0
    %3251 = vmatpush1.msra.mxu0 0.0
    %3252 = vmatprep.subr.mxu0 0.0
    %3253 = vmatpush1.msra.mxu0 0.0
    %3254 = vmatprep.subr.mxu0 0.0
    %3255 = vmatpush1.msra.mxu0 0.0
    %3256 = vmatprep.subr.mxu0 0.0
    %3257 = vmatpush1.msra.mxu0 0.0
    %3258 = vmatprep.subr.mxu0 0.0
    %3259 = vmatpush1.msra.mxu0 0.0
    %3260 = vmatprep.subr.mxu0 0.0
    %3261 = vmatpush1.msra.mxu0 0.0
    %3262 = vmatprep.subr.mxu0 0.0
    %3263 = vmatpush1.msra.mxu0 0.0
    %3264 = vmatprep.subr.mxu0 0.0
    %3265 = vmatpush1.msra.mxu0 0.0
    %3266 = vmatprep.subr.mxu0 0.0
    %3267 = vmatpush1.msra.mxu0 0.0
    %3268 = vmatprep.subr.mxu0 0.0
    %3269 = vmatpush1.msra.mxu0 0.0
    %3270 = vmatprep.subr.mxu0 0.0
    %3271 = vmatpush1.msra.mxu0 0.0
    %3272 = vmatprep.subr.mxu0 0.0
    %3273 = vmatpush1.msra.mxu0 0.0
    %3274 = vmatprep.subr.mxu0 0.0
    %3275 = vmatpush1.msra.mxu0 0.0
    %3276 = vmatprep.subr.mxu0 0.0
    %3277 = vmatpush1.msra.mxu0 0.0
    %3278 = vmatprep.subr.mxu0 0.0
    %3279 = vmatpush1.msra.mxu0 0.0
    %3280 = vmatprep.subr.mxu0 0.0
    %3281 = vmatpush1.msra.mxu0 0.0
    %3282 = vmatprep.subr.mxu0 0.0
    %3283 = vmatpush1.msra.mxu0 0.0
    %3284 = vmatprep.subr.mxu0 0.0
    %3285 = vmatpush1.msra.mxu0 0.0
    %3286 = vmatprep.subr.mxu0 0.0
    %3287 = vmatpush1.msra.mxu0 0.0
    %3288 = vmatprep.subr.mxu0 0.0
    %3289 = vmatpush1.msra.mxu0 0.0
    %3290 = vmatprep.subr.mxu0 0.0
    %3291 = vmatpush1.msra.mxu0 0.0
    %3292 = vmatprep.subr.mxu0 0.0
    %3293 = vmatpush1.msra.mxu0 0.0
    %3294 = vmatprep.subr.mxu0 0.0
    %3295 = vmatpush1.msra.mxu0 0.0
    %3296 = vmatprep.subr.mxu0 0.0
    %3297 = vmatpush1.msra.mxu0 0.0
    %3298 = vmatprep.subr.mxu0 0.0
    %3299 = vmatpush1.msra.mxu0 0.0
    %3300 = vmatprep.mubr.f32.mxu0 0.0
    %3301 = vmatmul.mubr.f32.gmra.mrb[0].mxu0 %v3231
    %v3302 = vpop.f32.mrb[0].mxu0
    %v3303 = vadd.f32 0.0, %v3302
    %v3304 = vpop.f32.mrb[0].mxu0
    %3305 = vmatprep.mubr.f32.mxu0 0.0
    %3306 = vmatmul.mubr.f32.gmra.mrb[0].mxu0 %v3234
    %v3307 = vpop.f32.mrb[0].mxu0
    %v3308 = vadd.f32 0.0, %v3307
    %v3309 = vpop.f32.mrb[0].mxu0
    %3310 = vdwg.mxu0
    %v3312 = vsel %vm555, %v3137, 0
    %v3315 = vsel %vm555, %v3138, 0
    %3317 = vmatprep.subr.mxu0 0.0
    %3318 = vmatpush1.msra.mxu0 %v2703
    %3319 = vmatprep.subr.mxu0 0.0
    %3320 = vmatpush1.msra.mxu0 %v2704
    %3321 = vmatprep.subr.mxu0 0.0
    %3322 = vmatpush1.msra.mxu0 0.0
    %3323 = vmatprep.subr.mxu0 0.0
    %3324 = vmatpush1.msra.mxu0 0.0
    %3325 = vmatprep.subr.mxu0 0.0
    %3326 = vmatpush1.msra.mxu0 0.0
    %3327 = vmatprep.subr.mxu0 0.0
    %3328 = vmatpush1.msra.mxu0 0.0
    %3329 = vmatprep.subr.mxu0 0.0
    %3330 = vmatpush1.msra.mxu0 0.0
    %3331 = vmatprep.subr.mxu0 0.0
    %3332 = vmatpush1.msra.mxu0 0.0
    %3333 = vmatprep.subr.mxu0 0.0
    %3334 = vmatpush1.msra.mxu0 0.0
    %3335 = vmatprep.subr.mxu0 0.0
    %3336 = vmatpush1.msra.mxu0 0.0
    %3337 = vmatprep.subr.mxu0 0.0
    %3338 = vmatpush1.msra.mxu0 0.0
    %3339 = vmatprep.subr.mxu0 0.0
    %3340 = vmatpush1.msra.mxu0 0.0
    %3341 = vmatprep.subr.mxu0 0.0
    %3342 = vmatpush1.msra.mxu0 0.0
    %3343 = vmatprep.subr.mxu0 0.0
    %3344 = vmatpush1.msra.mxu0 0.0
    %3345 = vmatprep.subr.mxu0 0.0
    %3346 = vmatpush1.msra.mxu0 0.0
    %3347 = vmatprep.subr.mxu0 0.0
    %3348 = vmatpush1.msra.mxu0 0.0
    %3349 = vmatprep.subr.mxu0 0.0
    %3350 = vmatpush1.msra.mxu0 0.0
    %3351 = vmatprep.subr.mxu0 0.0
    %3352 = vmatpush1.msra.mxu0 0.0
    %3353 = vmatprep.subr.mxu0 0.0
    %3354 = vmatpush1.msra.mxu0 0.0
    %3355 = vmatprep.subr.mxu0 0.0
    %3356 = vmatpush1.msra.mxu0 0.0
    %3357 = vmatprep.subr.mxu0 0.0
    %3358 = vmatpush1.msra.mxu0 0.0
    %3359 = vmatprep.subr.mxu0 0.0
    %3360 = vmatpush1.msra.mxu0 0.0
    %3361 = vmatprep.subr.mxu0 0.0
    %3362 = vmatpush1.msra.mxu0 0.0
    %3363 = vmatprep.subr.mxu0 0.0
    %3364 = vmatpush1.msra.mxu0 0.0
    %3365 = vmatprep.subr.mxu0 0.0
    %3366 = vmatpush1.msra.mxu0 0.0
    %3367 = vmatprep.subr.mxu0 0.0
    %3368 = vmatpush1.msra.mxu0 0.0
    %3369 = vmatprep.subr.mxu0 0.0
    %3370 = vmatpush1.msra.mxu0 0.0
    %3371 = vmatprep.subr.mxu0 0.0
    %3372 = vmatpush1.msra.mxu0 0.0
    %3373 = vmatprep.subr.mxu0 0.0
    %3374 = vmatpush1.msra.mxu0 0.0
    %3375 = vmatprep.subr.mxu0 0.0
    %3376 = vmatpush1.msra.mxu0 0.0
    %3377 = vmatprep.subr.mxu0 0.0
    %3378 = vmatpush1.msra.mxu0 0.0
    %3379 = vmatprep.subr.mxu0 0.0
    %3380 = vmatpush1.msra.mxu0 0.0
    %3381 = vmatprep.mubr.f32.mxu0 0.0
    %3382 = vmatmul.mubr.f32.gmra.mrb[0].mxu0 %v3312
    %v3383 = vpop.f32.mrb[0].mxu0
    %v3384 = vadd.f32 0.0, %v3383
    %v3385 = vpop.f32.mrb[0].mxu0
    %3386 = vmatprep.mubr.f32.mxu0 0.0
    %3387 = vmatmul.mubr.f32.gmra.mrb[0].mxu0 %v3315
    %v3388 = vpop.f32.mrb[0].mxu0
    %v3389 = vadd.f32 0.0, %v3388
    %v3390 = vpop.f32.mrb[0].mxu0
    %3391 = vdwg.mxu0
    %v3393 = vsel %vm555, %v3139, 0
    %v3396 = vsel %vm555, %v3140, 0
    %3398 = vmatprep.subr.mxu0 0.0
    %3399 = vmatpush1.msra.mxu0 %v2705
    %3400 = vmatprep.subr.mxu0 0.0
    %3401 = vmatpush1.msra.mxu0 %v2706
    %3402 = vmatprep.subr.mxu0 0.0
    %3403 = vmatpush1.msra.mxu0 0.0
    %3404 = vmatprep.subr.mxu0 0.0
    %3405 = vmatpush1.msra.mxu0 0.0
    %3406 = vmatprep.subr.mxu0 0.0
    %3407 = vmatpush1.msra.mxu0 0.0
    %3408 = vmatprep.subr.mxu0 0.0
    %3409 = vmatpush1.msra.mxu0 0.0
    %3410 = vmatprep.subr.mxu0 0.0
    %3411 = vmatpush1.msra.mxu0 0.0
    %3412 = vmatprep.subr.mxu0 0.0
    %3413 = vmatpush1.msra.mxu0 0.0
    %3414 = vmatprep.subr.mxu0 0.0
    %3415 = vmatpush1.msra.mxu0 0.0
    %3416 = vmatprep.subr.mxu0 0.0
    %3417 = vmatpush1.msra.mxu0 0.0
    %3418 = vmatprep.subr.mxu0 0.0
    %3419 = vmatpush1.msra.mxu0 0.0
    %3420 = vmatprep.subr.mxu0 0.0
    %3421 = vmatpush1.msra.mxu0 0.0
    %3422 = vmatprep.subr.mxu0 0.0
    %3423 = vmatpush1.msra.mxu0 0.0
    %3424 = vmatprep.subr.mxu0 0.0
    %3425 = vmatpush1.msra.mxu0 0.0
    %3426 = vmatprep.subr.mxu0 0.0
    %3427 = vmatpush1.msra.mxu0 0.0
    %3428 = vmatprep.subr.mxu0 0.0
    %3429 = vmatpush1.msra.mxu0 0.0
    %3430 = vmatprep.subr.mxu0 0.0
    %3431 = vmatpush1.msra.mxu0 0.0
    %3432 = vmatprep.subr.mxu0 0.0
    %3433 = vmatpush1.msra.mxu0 0.0
    %3434 = vmatprep.subr.mxu0 0.0
    %3435 = vmatpush1.msra.mxu0 0.0
    %3436 = vmatprep.subr.mxu0 0.0
    %3437 = vmatpush1.msra.mxu0 0.0
    %3438 = vmatprep.subr.mxu0 0.0
    %3439 = vmatpush1.msra.mxu0 0.0
    %3440 = vmatprep.subr.mxu0 0.0
    %3441 = vmatpush1.msra.mxu0 0.0
    %3442 = vmatprep.subr.mxu0 0.0
    %3443 = vmatpush1.msra.mxu0 0.0
    %3444 = vmatprep.subr.mxu0 0.0
    %3445 = vmatpush1.msra.mxu0 0.0
    %3446 = vmatprep.subr.mxu0 0.0
    %3447 = vmatpush1.msra.mxu0 0.0
    %3448 = vmatprep.subr.mxu0 0.0
    %3449 = vmatpush1.msra.mxu0 0.0
    %3450 = vmatprep.subr.mxu0 0.0
    %3451 = vmatpush1.msra.mxu0 0.0
    %3452 = vmatprep.subr.mxu0 0.0
    %3453 = vmatpush1.msra.mxu0 0.0
    %3454 = vmatprep.subr.mxu0 0.0
    %3455 = vmatpush1.msra.mxu0 0.0
    %3456 = vmatprep.subr.mxu0 0.0
    %3457 = vmatpush1.msra.mxu0 0.0
    %3458 = vmatprep.subr.mxu0 0.0
    %3459 = vmatpush1.msra.mxu0 0.0
    %3460 = vmatprep.subr.mxu0 0.0
    %3461 = vmatpush1.msra.mxu0 0.0
    %3462 = vmatprep.mubr.f32.mxu0 0.0
    %3463 = vmatmul.mubr.f32.gmra.mrb[0].mxu0 %v3393
    %v3464 = vpop.f32.mrb[0].mxu0
    %v3465 = vadd.f32 0.0, %v3464
    %v3466 = vpop.f32.mrb[0].mxu0
    %3467 = vmatprep.mubr.f32.mxu0 0.0
    %3468 = vmatmul.mubr.f32.gmra.mrb[0].mxu0 %v3396
    %v3469 = vpop.f32.mrb[0].mxu0
    %v3470 = vadd.f32 0.0, %v3469
    %v3471 = vpop.f32.mrb[0].mxu0
    %3472 = vdwg.mxu0
    %v3474 = vsel %vm555, %v3141, 0
    %v3477 = vsel %vm555, %v3142, 0
    %3479 = vmatprep.subr.mxu0 0.0
    %3480 = vmatpush1.msra.mxu0 %v2707
    %3481 = vmatprep.subr.mxu0 0.0
    %3482 = vmatpush1.msra.mxu0 %v2708
    %3483 = vmatprep.subr.mxu0 0.0
    %3484 = vmatpush1.msra.mxu0 0.0
    %3485 = vmatprep.subr.mxu0 0.0
    %3486 = vmatpush1.msra.mxu0 0.0
    %3487 = vmatprep.subr.mxu0 0.0
    %3488 = vmatpush1.msra.mxu0 0.0
    %3489 = vmatprep.subr.mxu0 0.0
    %3490 = vmatpush1.msra.mxu0 0.0
    %3491 = vmatprep.subr.mxu0 0.0
    %3492 = vmatpush1.msra.mxu0 0.0
    %3493 = vmatprep.subr.mxu0 0.0
    %3494 = vmatpush1.msra.mxu0 0.0
    %3495 = vmatprep.subr.mxu0 0.0
    %3496 = vmatpush1.msra.mxu0 0.0
    %3497 = vmatprep.subr.mxu0 0.0
    %3498 = vmatpush1.msra.mxu0 0.0
    %3499 = vmatprep.subr.mxu0 0.0
    %3500 = vmatpush1.msra.mxu0 0.0
    %3501 = vmatprep.subr.mxu0 0.0
    %3502 = vmatpush1.msra.mxu0 0.0
    %3503 = vmatprep.subr.mxu0 0.0
    %3504 = vmatpush1.msra.mxu0 0.0
    %3505 = vmatprep.subr.mxu0 0.0
    %3506 = vmatpush1.msra.mxu0 0.0
    %3507 = vmatprep.subr.mxu0 0.0
    %3508 = vmatpush1.msra.mxu0 0.0
    %3509 = vmatprep.subr.mxu0 0.0
    %3510 = vmatpush1.msra.mxu0 0.0
    %3511 = vmatprep.subr.mxu0 0.0
    %3512 = vmatpush1.msra.mxu0 0.0
    %3513 = vmatprep.subr.mxu0 0.0
    %3514 = vmatpush1.msra.mxu0 0.0
    %3515 = vmatprep.subr.mxu0 0.0
    %3516 = vmatpush1.msra.mxu0 0.0
    %3517 = vmatprep.subr.mxu0 0.0
    %3518 = vmatpush1.msra.mxu0 0.0
    %3519 = vmatprep.subr.mxu0 0.0
    %3520 = vmatpush1.msra.mxu0 0.0
    %3521 = vmatprep.subr.mxu0 0.0
    %3522 = vmatpush1.msra.mxu0 0.0
    %3523 = vmatprep.subr.mxu0 0.0
    %3524 = vmatpush1.msra.mxu0 0.0
    %3525 = vmatprep.subr.mxu0 0.0
    %3526 = vmatpush1.msra.mxu0 0.0
    %3527 = vmatprep.subr.mxu0 0.0
    %3528 = vmatpush1.msra.mxu0 0.0
    %3529 = vmatprep.subr.mxu0 0.0
    %3530 = vmatpush1.msra.mxu0 0.0
    %3531 = vmatprep.subr.mxu0 0.0
    %3532 = vmatpush1.msra.mxu0 0.0
    %3533 = vmatprep.subr.mxu0 0.0
    %3534 = vmatpush1.msra.mxu0 0.0
    %3535 = vmatprep.subr.mxu0 0.0
    %3536 = vmatpush1.msra.mxu0 0.0
    %3537 = vmatprep.subr.mxu0 0.0
    %3538 = vmatpush1.msra.mxu0 0.0
    %3539 = vmatprep.subr.mxu0 0.0
    %3540 = vmatpush1.msra.mxu0 0.0
    %3541 = vmatprep.subr.mxu0 0.0
    %3542 = vmatpush1.msra.mxu0 0.0
    %3543 = vmatprep.mubr.f32.mxu0 0.0
    %3544 = vmatmul.mubr.f32.gmra.mrb[0].mxu0 %v3474
    %v3545 = vpop.f32.mrb[0].mxu0
    %v3546 = vadd.f32 0.0, %v3545
    %v3547 = vpop.f32.mrb[0].mxu0
    %3548 = vmatprep.mubr.f32.mxu0 0.0
    %3549 = vmatmul.mubr.f32.gmra.mrb[0].mxu0 %v3477
    %v3550 = vpop.f32.mrb[0].mxu0
    %v3551 = vadd.f32 0.0, %v3550
    %v3552 = vpop.f32.mrb[0].mxu0
    %3553 = vdwg.mxu0
    %v3555 = vsel %vm555, %v3143, 0
    %v3558 = vsel %vm555, %v3144, 0
    %3560 = vmatprep.subr.mxu0 0.0
    %3561 = vmatpush1.msra.mxu0 %v2709
    %3562 = vmatprep.subr.mxu0 0.0
    %3563 = vmatpush1.msra.mxu0 %v2710
    %3564 = vmatprep.subr.mxu0 0.0
    %3565 = vmatpush1.msra.mxu0 0.0
    %3566 = vmatprep.subr.mxu0 0.0
    %3567 = vmatpush1.msra.mxu0 0.0
    %3568 = vmatprep.subr.mxu0 0.0
    %3569 = vmatpush1.msra.mxu0 0.0
    %3570 = vmatprep.subr.mxu0 0.0
    %3571 = vmatpush1.msra.mxu0 0.0
    %3572 = vmatprep.subr.mxu0 0.0
    %3573 = vmatpush1.msra.mxu0 0.0
    %3574 = vmatprep.subr.mxu0 0.0
    %3575 = vmatpush1.msra.mxu0 0.0
    %3576 = vmatprep.subr.mxu0 0.0
    %3577 = vmatpush1.msra.mxu0 0.0
    %3578 = vmatprep.subr.mxu0 0.0
    %3579 = vmatpush1.msra.mxu0 0.0
    %3580 = vmatprep.subr.mxu0 0.0
    %3581 = vmatpush1.msra.mxu0 0.0
    %3582 = vmatprep.subr.mxu0 0.0
    %3583 = vmatpush1.msra.mxu0 0.0
    %3584 = vmatprep.subr.mxu0 0.0
    %3585 = vmatpush1.msra.mxu0 0.0
    %3586 = vmatprep.subr.mxu0 0.0
    %3587 = vmatpush1.msra.mxu0 0.0
    %3588 = vmatprep.subr.mxu0 0.0
    %3589 = vmatpush1.msra.mxu0 0.0
    %3590 = vmatprep.subr.mxu0 0.0
    %3591 = vmatpush1.msra.mxu0 0.0
    %3592 = vmatprep.subr.mxu0 0.0
    %3593 = vmatpush1.msra.mxu0 0.0
    %3594 = vmatprep.subr.mxu0 0.0
    %3595 = vmatpush1.msra.mxu0 0.0
    %3596 = vmatprep.subr.mxu0 0.0
    %3597 = vmatpush1.msra.mxu0 0.0
    %3598 = vmatprep.subr.mxu0 0.0
    %3599 = vmatpush1.msra.mxu0 0.0
    %3600 = vmatprep.subr.mxu0 0.0
    %3601 = vmatpush1.msra.mxu0 0.0
    %3602 = vmatprep.subr.mxu0 0.0
    %3603 = vmatpush1.msra.mxu0 0.0
    %3604 = vmatprep.subr.mxu0 0.0
    %3605 = vmatpush1.msra.mxu0 0.0
    %3606 = vmatprep.subr.mxu0 0.0
    %3607 = vmatpush1.msra.mxu0 0.0
    %3608 = vmatprep.subr.mxu0 0.0
    %3609 = vmatpush1.msra.mxu0 0.0
    %3610 = vmatprep.subr.mxu0 0.0
    %3611 = vmatpush1.msra.mxu0 0.0
    %3612 = vmatprep.subr.mxu0 0.0
    %3613 = vmatpush1.msra.mxu0 0.0
    %3614 = vmatprep.subr.mxu0 0.0
    %3615 = vmatpush1.msra.mxu0 0.0
    %3616 = vmatprep.subr.mxu0 0.0
    %3617 = vmatpush1.msra.mxu0 0.0
    %3618 = vmatprep.subr.mxu0 0.0
    %3619 = vmatpush1.msra.mxu0 0.0
    %3620 = vmatprep.subr.mxu0 0.0
    %3621 = vmatpush1.msra.mxu0 0.0
    %3622 = vmatprep.subr.mxu0 0.0
    %3623 = vmatpush1.msra.mxu0 0.0
    %3624 = vmatprep.mubr.f32.mxu0 0.0
    %3625 = vmatmul.mubr.f32.gmra.mrb[0].mxu0 %v3555
    %v3626 = vpop.f32.mrb[0].mxu0
    %v3627 = vadd.f32 0.0, %v3626
    %v3628 = vpop.f32.mrb[0].mxu0
    %3629 = vmatprep.mubr.f32.mxu0 0.0
    %3630 = vmatmul.mubr.f32.gmra.mrb[0].mxu0 %v3558
    %v3631 = vpop.f32.mrb[0].mxu0
    %v3632 = vadd.f32 0.0, %v3631
    %v3633 = vpop.f32.mrb[0].mxu0
    %3634 = vdwg.mxu0
    %v3636 = vsel %vm555, %v3145, 0
    %v3639 = vsel %vm555, %v3146, 0
    %3641 = vmatprep.subr.mxu0 0.0
    %3642 = vmatpush1.msra.mxu0 %v2711
    %3643 = vmatprep.subr.mxu0 0.0
    %3644 = vmatpush1.msra.mxu0 %v2712
    %3645 = vmatprep.subr.mxu0 0.0
    %3646 = vmatpush1.msra.mxu0 0.0
    %3647 = vmatprep.subr.mxu0 0.0
    %3648 = vmatpush1.msra.mxu0 0.0
    %3649 = vmatprep.subr.mxu0 0.0
    %3650 = vmatpush1.msra.mxu0 0.0
    %3651 = vmatprep.subr.mxu0 0.0
    %3652 = vmatpush1.msra.mxu0 0.0
    %3653 = vmatprep.subr.mxu0 0.0
    %3654 = vmatpush1.msra.mxu0 0.0
    %3655 = vmatprep.subr.mxu0 0.0
    %3656 = vmatpush1.msra.mxu0 0.0
    %3657 = vmatprep.subr.mxu0 0.0
    %3658 = vmatpush1.msra.mxu0 0.0
    %3659 = vmatprep.subr.mxu0 0.0
    %3660 = vmatpush1.msra.mxu0 0.0
    %3661 = vmatprep.subr.mxu0 0.0
    %3662 = vmatpush1.msra.mxu0 0.0
    %3663 = vmatprep.subr.mxu0 0.0
    %3664 = vmatpush1.msra.mxu0 0.0
    %3665 = vmatprep.subr.mxu0 0.0
    %3666 = vmatpush1.msra.mxu0 0.0
    %3667 = vmatprep.subr.mxu0 0.0
    %3668 = vmatpush1.msra.mxu0 0.0
    %3669 = vmatprep.subr.mxu0 0.0
    %3670 = vmatpush1.msra.mxu0 0.0
    %3671 = vmatprep.subr.mxu0 0.0
    %3672 = vmatpush1.msra.mxu0 0.0
    %3673 = vmatprep.subr.mxu0 0.0
    %3674 = vmatpush1.msra.mxu0 0.0
    %3675 = vmatprep.subr.mxu0 0.0
    %3676 = vmatpush1.msra.mxu0 0.0
    %3677 = vmatprep.subr.mxu0 0.0
    %3678 = vmatpush1.msra.mxu0 0.0
    %3679 = vmatprep.subr.mxu0 0.0
    %3680 = vmatpush1.msra.mxu0 0.0
    %3681 = vmatprep.subr.mxu0 0.0
    %3682 = vmatpush1.msra.mxu0 0.0
    %3683 = vmatprep.subr.mxu0 0.0
    %3684 = vmatpush1.msra.mxu0 0.0
    %3685 = vmatprep.subr.mxu0 0.0
    %3686 = vmatpush1.msra.mxu0 0.0
    %3687 = vmatprep.subr.mxu0 0.0
    %3688 = vmatpush1.msra.mxu0 0.0
    %3689 = vmatprep.subr.mxu0 0.0
    %3690 = vmatpush1.msra.mxu0 0.0
    %3691 = vmatprep.subr.mxu0 0.0
    %3692 = vmatpush1.msra.mxu0 0.0
    %3693 = vmatprep.subr.mxu0 0.0
    %3694 = vmatpush1.msra.mxu0 0.0
    %3695 = vmatprep.subr.mxu0 0.0
    %3696 = vmatpush1.msra.mxu0 0.0
    %3697 = vmatprep.subr.mxu0 0.0
    %3698 = vmatpush1.msra.mxu0 0.0
    %3699 = vmatprep.subr.mxu0 0.0
    %3700 = vmatpush1.msra.mxu0 0.0
    %3701 = vmatprep.subr.mxu0 0.0
    %3702 = vmatpush1.msra.mxu0 0.0
    %3703 = vmatprep.subr.mxu0 0.0
    %3704 = vmatpush1.msra.mxu0 0.0
    %3705 = vmatprep.mubr.f32.mxu0 0.0
    %3706 = vmatmul.mubr.f32.gmra.mrb[0].mxu0 %v3636
    %v3707 = vpop.f32.mrb[0].mxu0
    %v3708 = vadd.f32 0.0, %v3707
    %v3709 = vpop.f32.mrb[0].mxu0
    %3710 = vmatprep.mubr.f32.mxu0 0.0
    %3711 = vmatmul.mubr.f32.gmra.mrb[0].mxu0 %v3639
    %v3712 = vpop.f32.mrb[0].mxu0
    %v3713 = vadd.f32 0.0, %v3712
    %v3714 = vpop.f32.mrb[0].mxu0
    %3715 = vdwg.mxu0
    %v3717 = vsel %vm555, %v3147, 0
    %v3720 = vsel %vm555, %v3148, 0
    %3722 = vmatprep.subr.mxu0 0.0
    %3723 = vmatpush1.msra.mxu0 %v2713
    %3724 = vmatprep.subr.mxu0 0.0
    %3725 = vmatpush1.msra.mxu0 %v2714
    %3726 = vmatprep.subr.mxu0 0.0
    %3727 = vmatpush1.msra.mxu0 0.0
    %3728 = vmatprep.subr.mxu0 0.0
    %3729 = vmatpush1.msra.mxu0 0.0
    %3730 = vmatprep.subr.mxu0 0.0
    %3731 = vmatpush1.msra.mxu0 0.0
    %3732 = vmatprep.subr.mxu0 0.0
    %3733 = vmatpush1.msra.mxu0 0.0
    %3734 = vmatprep.subr.mxu0 0.0
    %3735 = vmatpush1.msra.mxu0 0.0
    %3736 = vmatprep.subr.mxu0 0.0
    %3737 = vmatpush1.msra.mxu0 0.0
    %3738 = vmatprep.subr.mxu0 0.0
    %3739 = vmatpush1.msra.mxu0 0.0
    %3740 = vmatprep.subr.mxu0 0.0
    %3741 = vmatpush1.msra.mxu0 0.0
    %3742 = vmatprep.subr.mxu0 0.0
    %3743 = vmatpush1.msra.mxu0 0.0
    %3744 = vmatprep.subr.mxu0 0.0
    %3745 = vmatpush1.msra.mxu0 0.0
    %3746 = vmatprep.subr.mxu0 0.0
    %3747 = vmatpush1.msra.mxu0 0.0
    %3748 = vmatprep.subr.mxu0 0.0
    %3749 = vmatpush1.msra.mxu0 0.0
    %3750 = vmatprep.subr.mxu0 0.0
    %3751 = vmatpush1.msra.mxu0 0.0
    %3752 = vmatprep.subr.mxu0 0.0
    %3753 = vmatpush1.msra.mxu0 0.0
    %3754 = vmatprep.subr.mxu0 0.0
    %3755 = vmatpush1.msra.mxu0 0.0
    %3756 = vmatprep.subr.mxu0 0.0
    %3757 = vmatpush1.msra.mxu0 0.0
    %3758 = vmatprep.subr.mxu0 0.0
    %3759 = vmatpush1.msra.mxu0 0.0
    %3760 = vmatprep.subr.mxu0 0.0
    %3761 = vmatpush1.msra.mxu0 0.0
    %3762 = vmatprep.subr.mxu0 0.0
    %3763 = vmatpush1.msra.mxu0 0.0
    %3764 = vmatprep.subr.mxu0 0.0
    %3765 = vmatpush1.msra.mxu0 0.0
    %3766 = vmatprep.subr.mxu0 0.0
    %3767 = vmatpush1.msra.mxu0 0.0
    %3768 = vmatprep.subr.mxu0 0.0
    %3769 = vmatpush1.msra.mxu0 0.0
    %3770 = vmatprep.subr.mxu0 0.0
    %3771 = vmatpush1.msra.mxu0 0.0
    %3772 = vmatprep.subr.mxu0 0.0
    %3773 = vmatpush1.msra.mxu0 0.0
    %3774 = vmatprep.subr.mxu0 0.0
    %3775 = vmatpush1.msra.mxu0 0.0
    %3776 = vmatprep.subr.mxu0 0.0
    %3777 = vmatpush1.msra.mxu0 0.0
    %3778 = vmatprep.subr.mxu0 0.0
    %3779 = vmatpush1.msra.mxu0 0.0
    %3780 = vmatprep.subr.mxu0 0.0
    %3781 = vmatpush1.msra.mxu0 0.0
    %3782 = vmatprep.subr.mxu0 0.0
    %3783 = vmatpush1.msra.mxu0 0.0
    %3784 = vmatprep.subr.mxu0 0.0
    %3785 = vmatpush1.msra.mxu0 0.0
    %3786 = vmatprep.mubr.f32.mxu0 0.0
    %3787 = vmatmul.mubr.f32.gmra.mrb[0].mxu0 %v3717
    %v3788 = vpop.f32.mrb[0].mxu0
    %v3789 = vadd.f32 0.0, %v3788
    %v3790 = vpop.f32.mrb[0].mxu0
    %3791 = vmatprep.mubr.f32.mxu0 0.0
    %3792 = vmatmul.mubr.f32.gmra.mrb[0].mxu0 %v3720
    %v3793 = vpop.f32.mrb[0].mxu0
    %v3794 = vadd.f32 0.0, %v3793
    %v3795 = vpop.f32.mrb[0].mxu0
    %3796 = vdwg.mxu0
    %v3797 = vsel %vm87, %v3222, 0.0
    %v3798 = vsel %vm87, %v3303, 0.0
    %v3799 = vadd.f32 %v3797, %v3798
    %v3800 = vsel %vm87, %v3384, 0.0
    %v3801 = vadd.f32 %v3799, %v3800
    %v3802 = vsel %vm87, %v3465, 0.0
    %v3803 = vadd.f32 %v3801, %v3802
    %v3804 = vsel %vm87, %v3546, 0.0
    %v3805 = vadd.f32 %v3803, %v3804
    %v3806 = vsel %vm87, %v3627, 0.0
    %v3807 = vadd.f32 %v3805, %v3806
    %v3808 = vsel %vm87, %v3708, 0.0
    %v3809 = vadd.f32 %v3807, %v3808
    %v3810 = vsel %vm87, %v3789, 0.0
    %v3811 = vadd.f32 %v3809, %v3810
    %v3812 = vsel %vm87, %v3227, 0.0
    %v3813 = vsel %vm87, %v3308, 0.0
    %v3814 = vadd.f32 %v3812, %v3813
    %v3815 = vsel %vm87, %v3389, 0.0
    %v3816 = vadd.f32 %v3814, %v3815
    %v3817 = vsel %vm87, %v3470, 0.0
    %v3818 = vadd.f32 %v3816, %v3817
    %v3819 = vsel %vm87, %v3551, 0.0
    %v3820 = vadd.f32 %v3818, %v3819
    %v3821 = vsel %vm87, %v3632, 0.0
    %v3822 = vadd.f32 %v3820, %v3821
    %v3823 = vsel %vm87, %v3713, 0.0
    %v3824 = vadd.f32 %v3822, %v3823
    %v3825 = vsel %vm87, %v3794, 0.0
    %v3826 = vadd.f32 %v3824, %v3825
    %v3827 = vmul.f32 %v244, %v2643
    %v3828 = vmul.f32 %v244, %v2648
    %v3829 = vmul.f32 %v248, %v2643
    %v3830 = vmul.f32 %v248, %v2648
    %v3831 = vmul.f32 %v252, %v2643
    %v3832 = vmul.f32 %v252, %v2648
    %v3833 = vmul.f32 %v256, %v2643
    %v3834 = vmul.f32 %v256, %v2648
    %v3835 = vmul.f32 %v260, %v2643
    %v3836 = vmul.f32 %v260, %v2648
    %v3837 = vmul.f32 %v264, %v2643
    %v3838 = vmul.f32 %v264, %v2648
    %v3839 = vmul.f32 %v268, %v2643
    %v3840 = vmul.f32 %v268, %v2648
    %v3841 = vmul.f32 %v272, %v2643
    %v3842 = vmul.f32 %v272, %v2648
    %s3844 = sor.u32 256, 16
    %3845 = vbcast.lane.b32.xlu0 %v2718, %s3844
    %v3846 = vpop.permute.xlu0 %3845
    %s3848 = sor.u32 256, 24
    %3849 = vbcast.lane.b32.xlu0 %v2718, %s3848
    %v3850 = vpop.permute.xlu0 %3849
    %s3852 = sor.u32 256, 16
    %3853 = vbcast.lane.b32.xlu0 %v2729, %s3852
    %v3854 = vpop.permute.xlu0 %3853
    %s3856 = sor.u32 256, 24
    %3857 = vbcast.lane.b32.xlu0 %v2729, %s3856
    %v3858 = vpop.permute.xlu0 %3857
    %s3860 = sor.u32 256, 16
    %3861 = vbcast.lane.b32.xlu0 %v2740, %s3860
    %v3862 = vpop.permute.xlu0 %3861
    %s3864 = sor.u32 256, 24
    %3865 = vbcast.lane.b32.xlu0 %v2740, %s3864
    %v3866 = vpop.permute.xlu0 %3865
    %s3868 = sor.u32 256, 16
    %3869 = vbcast.lane.b32.xlu0 %v2751, %s3868
    %v3870 = vpop.permute.xlu0 %3869
    %s3872 = sor.u32 256, 24
    %3873 = vbcast.lane.b32.xlu0 %v2751, %s3872
    %v3874 = vpop.permute.xlu0 %3873
    %s3876 = sor.u32 256, 16
    %3877 = vbcast.lane.b32.xlu0 %v2762, %s3876
    %v3878 = vpop.permute.xlu0 %3877
    %s3880 = sor.u32 256, 24
    %3881 = vbcast.lane.b32.xlu0 %v2762, %s3880
    %v3882 = vpop.permute.xlu0 %3881
    %s3884 = sor.u32 256, 16
    %3885 = vbcast.lane.b32.xlu0 %v2773, %s3884
    %v3886 = vpop.permute.xlu0 %3885
    %s3888 = sor.u32 256, 24
    %3889 = vbcast.lane.b32.xlu0 %v2773, %s3888
    %v3890 = vpop.permute.xlu0 %3889
    %s3892 = sor.u32 256, 16
    %3893 = vbcast.lane.b32.xlu0 %v2784, %s3892
    %v3894 = vpop.permute.xlu0 %3893
    %s3896 = sor.u32 256, 24
    %3897 = vbcast.lane.b32.xlu0 %v2784, %s3896
    %v3898 = vpop.permute.xlu0 %3897
    %s3900 = sor.u32 256, 16
    %3901 = vbcast.lane.b32.xlu0 %v2795, %s3900
    %v3902 = vpop.permute.xlu0 %3901
    %s3904 = sor.u32 256, 24
    %3905 = vbcast.lane.b32.xlu0 %v2795, %s3904
    %v3906 = vpop.permute.xlu0 %3905
    %v3907 = vadd.f32 %v3846, %v2856
    %v3908 = vadd.f32 %v3850, %v2856
    %v3909 = vadd.f32 %v3854, %v2860
    %v3910 = vadd.f32 %v3858, %v2860
    %v3911 = vadd.f32 %v3862, %v2864
    %v3912 = vadd.f32 %v3866, %v2864
    %v3913 = vadd.f32 %v3870, %v2868
    %v3914 = vadd.f32 %v3874, %v2868
    %v3915 = vadd.f32 %v3878, %v2872
    %v3916 = vadd.f32 %v3882, %v2872
    %v3917 = vadd.f32 %v3886, %v2876
    %v3918 = vadd.f32 %v3890, %v2876
    %v3919 = vadd.f32 %v3894, %v2880
    %v3920 = vadd.f32 %v3898, %v2880
    %v3921 = vadd.f32 %v3902, %v2884
    %v3922 = vadd.f32 %v3906, %v2884
    %vm3923 = vcmp.gt.f32.partialorder %v3907, 0.0
    %vm3924 = vcmp.gt.f32.partialorder %v3908, 0.0
    %vm3925 = vcmp.gt.f32.partialorder %v3909, 0.0
    %vm3926 = vcmp.gt.f32.partialorder %v3910, 0.0
    %vm3927 = vcmp.gt.f32.partialorder %v3911, 0.0
    %vm3928 = vcmp.gt.f32.partialorder %v3912, 0.0
    %vm3929 = vcmp.gt.f32.partialorder %v3913, 0.0
    %vm3930 = vcmp.gt.f32.partialorder %v3914, 0.0
    %vm3931 = vcmp.gt.f32.partialorder %v3915, 0.0
    %vm3932 = vcmp.gt.f32.partialorder %v3916, 0.0
    %vm3933 = vcmp.gt.f32.partialorder %v3917, 0.0
    %vm3934 = vcmp.gt.f32.partialorder %v3918, 0.0
    %vm3935 = vcmp.gt.f32.partialorder %v3919, 0.0
    %vm3936 = vcmp.gt.f32.partialorder %v3920, 0.0
    %vm3937 = vcmp.gt.f32.partialorder %v3921, 0.0
    %vm3938 = vcmp.gt.f32.partialorder %v3922, 0.0
    %v3939 = vmul.f32 %v3907, 0.2
    %v3940 = vmul.f32 %v3908, 0.2
    %v3941 = vmul.f32 %v3909, 0.2
    %v3942 = vmul.f32 %v3910, 0.2
    %v3943 = vmul.f32 %v3911, 0.2
    %v3944 = vmul.f32 %v3912, 0.2
    %v3945 = vmul.f32 %v3913, 0.2
    %v3946 = vmul.f32 %v3914, 0.2
    %v3947 = vmul.f32 %v3915, 0.2
    %v3948 = vmul.f32 %v3916, 0.2
    %v3949 = vmul.f32 %v3917, 0.2
    %v3950 = vmul.f32 %v3918, 0.2
    %v3951 = vmul.f32 %v3919, 0.2
    %v3952 = vmul.f32 %v3920, 0.2
    %v3953 = vmul.f32 %v3921, 0.2
    %v3954 = vmul.f32 %v3922, 0.2
    %v3955 = vsel %vm3923, %v3907, %v3939
    %v3956 = vsel %vm3924, %v3908, %v3940
    %v3957 = vsel %vm3925, %v3909, %v3941
    %v3958 = vsel %vm3926, %v3910, %v3942
    %v3959 = vsel %vm3927, %v3911, %v3943
    %v3960 = vsel %vm3928, %v3912, %v3944
    %v3961 = vsel %vm3929, %v3913, %v3945
    %v3962 = vsel %vm3930, %v3914, %v3946
    %v3963 = vsel %vm3931, %v3915, %v3947
    %v3964 = vsel %vm3932, %v3916, %v3948
    %v3965 = vsel %vm3933, %v3917, %v3949
    %v3966 = vsel %vm3934, %v3918, %v3950
    %v3967 = vsel %vm3935, %v3919, %v3951
    %v3968 = vsel %vm3936, %v3920, %v3952
    %v3969 = vsel %vm3937, %v3921, %v3953
    %v3970 = vsel %vm3938, %v3922, %v3954
    %v3971 = vadd.f32 %v3955, %v1557
    %v3972 = vadd.f32 %v3956, %v1559
    %v3973 = vadd.f32 %v3957, %v1557
    %v3974 = vadd.f32 %v3958, %v1559
    %v3975 = vadd.f32 %v3959, %v1557
    %v3976 = vadd.f32 %v3960, %v1559
    %v3977 = vadd.f32 %v3961, %v1557
    %v3978 = vadd.f32 %v3962, %v1559
    %v3979 = vadd.f32 %v3963, %v1557
    %v3980 = vadd.f32 %v3964, %v1559
    %v3981 = vadd.f32 %v3965, %v1557
    %v3982 = vadd.f32 %v3966, %v1559
    %v3983 = vadd.f32 %v3967, %v1557
    %v3984 = vadd.f32 %v3968, %v1559
    %v3985 = vadd.f32 %v3969, %v1557
    %v3986 = vadd.f32 %v3970, %v1559
    %v3987 = vsel %vm1578, %v3971, -inf
    %3988 = vmax.xlane.f32.xlu0 %v3987
    %v3989 = vpop.xlane.xlu0 %3988
    %v3990 = vsel %vm1578, %v3972, -inf
    %3991 = vmax.xlane.f32.xlu0 %v3990
    %v3992 = vpop.xlane.xlu0 %3991
    %v3993 = vsel %vm1578, %v3973, -inf
    %3994 = vmax.xlane.f32.xlu0 %v3993
    %v3995 = vpop.xlane.xlu0 %3994
    %v3996 = vsel %vm1578, %v3974, -inf
    %3997 = vmax.xlane.f32.xlu0 %v3996
    %v3998 = vpop.xlane.xlu0 %3997
    %v3999 = vsel %vm1578, %v3975, -inf
    %4000 = vmax.xlane.f32.xlu0 %v3999
    %v4001 = vpop.xlane.xlu0 %4000
    %v4002 = vsel %vm1578, %v3976, -inf
    %4003 = vmax.xlane.f32.xlu0 %v4002
    %v4004 = vpop.xlane.xlu0 %4003
    %v4005 = vsel %vm1578, %v3977, -inf
    %4006 = vmax.xlane.f32.xlu0 %v4005
    %v4007 = vpop.xlane.xlu0 %4006
    %v4008 = vsel %vm1578, %v3978, -inf
    %4009 = vmax.xlane.f32.xlu0 %v4008
    %v4010 = vpop.xlane.xlu0 %4009
    %v4011 = vsel %vm1578, %v3979, -inf
    %4012 = vmax.xlane.f32.xlu0 %v4011
    %v4013 = vpop.xlane.xlu0 %4012
    %v4014 = vsel %vm1578, %v3980, -inf
    %4015 = vmax.xlane.f32.xlu0 %v4014
    %v4016 = vpop.xlane.xlu0 %4015
    %v4017 = vsel %vm1578, %v3981, -inf
    %4018 = vmax.xlane.f32.xlu0 %v4017
    %v4019 = vpop.xlane.xlu0 %4018
    %v4020 = vsel %vm1578, %v3982, -inf
    %4021 = vmax.xlane.f32.xlu0 %v4020
    %v4022 = vpop.xlane.xlu0 %4021
    %v4023 = vsel %vm1578, %v3983, -inf
    %4024 = vmax.xlane.f32.xlu0 %v4023
    %v4025 = vpop.xlane.xlu0 %4024
    %v4026 = vsel %vm1578, %v3984, -inf
    %4027 = vmax.xlane.f32.xlu0 %v4026
    %v4028 = vpop.xlane.xlu0 %4027
    %v4029 = vsel %vm1578, %v3985, -inf
    %4030 = vmax.xlane.f32.xlu0 %v4029
    %v4031 = vpop.xlane.xlu0 %4030
    %v4032 = vsel %vm1578, %v3986, -inf
    %4033 = vmax.xlane.f32.xlu0 %v4032
    %v4034 = vpop.xlane.xlu0 %4033
    %v4035 = vsub.f32 %v3971, %v3989
    %v4036 = vsub.f32 %v3972, %v3992
    %v4037 = vsub.f32 %v3973, %v3995
    %v4038 = vsub.f32 %v3974, %v3998
    %v4039 = vsub.f32 %v3975, %v4001
    %v4040 = vsub.f32 %v3976, %v4004
    %v4041 = vsub.f32 %v3977, %v4007
    %v4042 = vsub.f32 %v3978, %v4010
    %v4043 = vsub.f32 %v3979, %v4013
    %v4044 = vsub.f32 %v3980, %v4016
    %v4045 = vsub.f32 %v3981, %v4019
    %v4046 = vsub.f32 %v3982, %v4022
    %v4047 = vsub.f32 %v3983, %v4025
    %v4048 = vsub.f32 %v3984, %v4028
    %v4049 = vsub.f32 %v3985, %v4031
    %v4050 = vsub.f32 %v3986, %v4034
    %v4051 = vmul.f32 %v4035, 1.442695
    %v4052 = vpow.pop %v4051
    %v4053 = vmul.f32 %v4036, 1.442695
    %v4054 = vpow.pop %v4053
    %v4055 = vmul.f32 %v4037, 1.442695
    %v4056 = vpow.pop %v4055
    %v4057 = vmul.f32 %v4038, 1.442695
    %v4058 = vpow.pop %v4057
    %v4059 = vmul.f32 %v4039, 1.442695
    %v4060 = vpow.pop %v4059
    %v4061 = vmul.f32 %v4040, 1.442695
    %v4062 = vpow.pop %v4061
    %v4063 = vmul.f32 %v4041, 1.442695
    %v4064 = vpow.pop %v4063
    %v4065 = vmul.f32 %v4042, 1.442695
    %v4066 = vpow.pop %v4065
    %v4067 = vmul.f32 %v4043, 1.442695
    %v4068 = vpow.pop %v4067
    %v4069 = vmul.f32 %v4044, 1.442695
    %v4070 = vpow.pop %v4069
    %v4071 = vmul.f32 %v4045, 1.442695
    %v4072 = vpow.pop %v4071
    %v4073 = vmul.f32 %v4046, 1.442695
    %v4074 = vpow.pop %v4073
    %v4075 = vmul.f32 %v4047, 1.442695
    %v4076 = vpow.pop %v4075
    %v4077 = vmul.f32 %v4048, 1.442695
    %v4078 = vpow.pop %v4077
    %v4079 = vmul.f32 %v4049, 1.442695
    %v4080 = vpow.pop %v4079
    %v4081 = vmul.f32 %v4050, 1.442695
    %v4082 = vpow.pop %v4081
    %4099 = vrot.lane.b32.xlu0 %v4052, 112
    %v4100 = vpop.permute.xlu0 %4099
    %4101 = vrot.lane.b32.xlu0 %v4054, 112
    %v4102 = vpop.permute.xlu0 %4101
    %4103 = vrot.lane.b32.xlu0 %v4056, 112
    %v4104 = vpop.permute.xlu0 %4103
    %4105 = vrot.lane.b32.xlu0 %v4058, 112
    %v4106 = vpop.permute.xlu0 %4105
    %4107 = vrot.lane.b32.xlu0 %v4060, 112
    %v4108 = vpop.permute.xlu0 %4107
    %4109 = vrot.lane.b32.xlu0 %v4062, 112
    %v4110 = vpop.permute.xlu0 %4109
    %4111 = vrot.lane.b32.xlu0 %v4064, 112
    %v4112 = vpop.permute.xlu0 %4111
    %4113 = vrot.lane.b32.xlu0 %v4066, 112
    %v4114 = vpop.permute.xlu0 %4113
    %4115 = vrot.lane.b32.xlu0 %v4068, 112
    %v4116 = vpop.permute.xlu0 %4115
    %4117 = vrot.lane.b32.xlu0 %v4070, 112
    %v4118 = vpop.permute.xlu0 %4117
    %4119 = vrot.lane.b32.xlu0 %v4072, 112
    %v4120 = vpop.permute.xlu0 %4119
    %4121 = vrot.lane.b32.xlu0 %v4074, 112
    %v4122 = vpop.permute.xlu0 %4121
    %4123 = vrot.lane.b32.xlu0 %v4076, 112
    %v4124 = vpop.permute.xlu0 %4123
    %4125 = vrot.lane.b32.xlu0 %v4078, 112
    %v4126 = vpop.permute.xlu0 %4125
    %4127 = vrot.lane.b32.xlu0 %v4080, 112
    %v4128 = vpop.permute.xlu0 %4127
    %4129 = vrot.lane.b32.xlu0 %v4082, 112
    %v4130 = vpop.permute.xlu0 %4129
    %v4147 = vsel %vm555, %v4100, 0.0
    %4148 = vadd.xlane.f32.xlu0 %v4147
    %v4149 = vpop.xlane.xlu0 %4148
    %v4150 = vsel %vm555, %v4102, 0.0
    %4151 = vadd.xlane.f32.xlu0 %v4150
    %v4152 = vpop.xlane.xlu0 %4151
    %v4153 = vsel %vm555, %v4104, 0.0
    %4154 = vadd.xlane.f32.xlu0 %v4153
    %v4155 = vpop.xlane.xlu0 %4154
    %v4156 = vsel %vm555, %v4106, 0.0
    %4157 = vadd.xlane.f32.xlu0 %v4156
    %v4158 = vpop.xlane.xlu0 %4157
    %v4159 = vsel %vm555, %v4108, 0.0
    %4160 = vadd.xlane.f32.xlu0 %v4159
    %v4161 = vpop.xlane.xlu0 %4160
    %v4162 = vsel %vm555, %v4110, 0.0
    %4163 = vadd.xlane.f32.xlu0 %v4162
    %v4164 = vpop.xlane.xlu0 %4163
    %v4165 = vsel %vm555, %v4112, 0.0
    %4166 = vadd.xlane.f32.xlu0 %v4165
    %v4167 = vpop.xlane.xlu0 %4166
    %v4168 = vsel %vm555, %v4114, 0.0
    %4169 = vadd.xlane.f32.xlu0 %v4168
    %v4170 = vpop.xlane.xlu0 %4169
    %v4171 = vsel %vm555, %v4116, 0.0
    %4172 = vadd.xlane.f32.xlu0 %v4171
    %v4173 = vpop.xlane.xlu0 %4172
    %v4174 = vsel %vm555, %v4118, 0.0
    %4175 = vadd.xlane.f32.xlu0 %v4174
    %v4176 = vpop.xlane.xlu0 %4175
    %v4177 = vsel %vm555, %v4120, 0.0
    %4178 = vadd.xlane.f32.xlu0 %v4177
    %v4179 = vpop.xlane.xlu0 %4178
    %v4180 = vsel %vm555, %v4122, 0.0
    %4181 = vadd.xlane.f32.xlu0 %v4180
    %v4182 = vpop.xlane.xlu0 %4181
    %v4183 = vsel %vm555, %v4124, 0.0
    %4184 = vadd.xlane.f32.xlu0 %v4183
    %v4185 = vpop.xlane.xlu0 %4184
    %v4186 = vsel %vm555, %v4126, 0.0
    %4187 = vadd.xlane.f32.xlu0 %v4186
    %v4188 = vpop.xlane.xlu0 %4187
    %v4189 = vsel %vm555, %v4128, 0.0
    %4190 = vadd.xlane.f32.xlu0 %v4189
    %v4191 = vpop.xlane.xlu0 %4190
    %v4192 = vsel %vm555, %v4130, 0.0
    %4193 = vadd.xlane.f32.xlu0 %v4192
    %v4194 = vpop.xlane.xlu0 %4193
    %v4195 = vrcp.pop %v4149
    %v4196 = vrcp.pop %v4152
    %v4197 = vrcp.pop %v4155
    %v4198 = vrcp.pop %v4158
    %v4199 = vrcp.pop %v4161
    %v4200 = vrcp.pop %v4164
    %v4201 = vrcp.pop %v4167
    %v4202 = vrcp.pop %v4170
    %v4203 = vrcp.pop %v4173
    %v4204 = vrcp.pop %v4176
    %v4205 = vrcp.pop %v4179
    %v4206 = vrcp.pop %v4182
    %v4207 = vrcp.pop %v4185
    %v4208 = vrcp.pop %v4188
    %v4209 = vrcp.pop %v4191
    %v4210 = vrcp.pop %v4194
    %v4211 = vmul.f32 %v4052, %v4195
    %v4212 = vmul.f32 %v4054, %v4196
    %v4213 = vmul.f32 %v4056, %v4197
    %v4214 = vmul.f32 %v4058, %v4198
    %v4215 = vmul.f32 %v4060, %v4199
    %v4216 = vmul.f32 %v4062, %v4200
    %v4217 = vmul.f32 %v4064, %v4201
    %v4218 = vmul.f32 %v4066, %v4202
    %v4219 = vmul.f32 %v4068, %v4203
    %v4220 = vmul.f32 %v4070, %v4204
    %v4221 = vmul.f32 %v4072, %v4205
    %v4222 = vmul.f32 %v4074, %v4206
    %v4223 = vmul.f32 %v4076, %v4207
    %v4224 = vmul.f32 %v4078, %v4208
    %v4225 = vmul.f32 %v4080, %v4209
    %v4226 = vmul.f32 %v4082, %v4210
    %4229 = vrot.lane.b32.xlu0 %v4211, 112
    %v4230 = vpop.permute.xlu0 %4229
    %4231 = vrot.lane.b32.xlu0 %v4212, 112
    %v4232 = vpop.permute.xlu0 %4231
    %v4233 = vsel %vm555, %v4230, 0
    %v4235 = vsel %vm555, %v4232, 0
    %4237 = vmatprep.subr.mxu0 0.0
    %4238 = vmatpush1.msra.mxu0 %v3827
    %4239 = vmatprep.subr.mxu0 0.0
    %4240 = vmatpush1.msra.mxu0 %v3828
    %4241 = vmatprep.subr.mxu0 0.0
    %4242 = vmatpush1.msra.mxu0 0.0
    %4243 = vmatprep.subr.mxu0 0.0
    %4244 = vmatpush1.msra.mxu0 0.0
    %4245 = vmatprep.subr.mxu0 0.0
    %4246 = vmatpush1.msra.mxu0 0.0
    %4247 = vmatprep.subr.mxu0 0.0
    %4248 = vmatpush1.msra.mxu0 0.0
    %4249 = vmatprep.subr.mxu0 0.0
    %4250 = vmatpush1.msra.mxu0 0.0
    %4251 = vmatprep.subr.mxu0 0.0
    %4252 = vmatpush1.msra.mxu0 0.0
    %4253 = vmatprep.subr.mxu0 0.0
    %4254 = vmatpush1.msra.mxu0 0.0
    %4255 = vmatprep.subr.mxu0 0.0
    %4256 = vmatpush1.msra.mxu0 0.0
    %4257 = vmatprep.subr.mxu0 0.0
    %4258 = vmatpush1.msra.mxu0 0.0
    %4259 = vmatprep.subr.mxu0 0.0
    %4260 = vmatpush1.msra.mxu0 0.0
    %4261 = vmatprep.subr.mxu0 0.0
    %4262 = vmatpush1.msra.mxu0 0.0
    %4263 = vmatprep.subr.mxu0 0.0
    %4264 = vmatpush1.msra.mxu0 0.0
    %4265 = vmatprep.subr.mxu0 0.0
    %4266 = vmatpush1.msra.mxu0 0.0
    %4267 = vmatprep.subr.mxu0 0.0
    %4268 = vmatpush1.msra.mxu0 0.0
    %4269 = vmatprep.subr.mxu0 0.0
    %4270 = vmatpush1.msra.mxu0 0.0
    %4271 = vmatprep.subr.mxu0 0.0
    %4272 = vmatpush1.msra.mxu0 0.0
    %4273 = vmatprep.subr.mxu0 0.0
    %4274 = vmatpush1.msra.mxu0 0.0
    %4275 = vmatprep.subr.mxu0 0.0
    %4276 = vmatpush1.msra.mxu0 0.0
    %4277 = vmatprep.subr.mxu0 0.0
    %4278 = vmatpush1.msra.mxu0 0.0
    %4279 = vmatprep.subr.mxu0 0.0
    %4280 = vmatpush1.msra.mxu0 0.0
    %4281 = vmatprep.subr.mxu0 0.0
    %4282 = vmatpush1.msra.mxu0 0.0
    %4283 = vmatprep.subr.mxu0 0.0
    %4284 = vmatpush1.msra.mxu0 0.0
    %4285 = vmatprep.subr.mxu0 0.0
    %4286 = vmatpush1.msra.mxu0 0.0
    %4287 = vmatprep.subr.mxu0 0.0
    %4288 = vmatpush1.msra.mxu0 0.0
    %4289 = vmatprep.subr.mxu0 0.0
    %4290 = vmatpush1.msra.mxu0 0.0
    %4291 = vmatprep.subr.mxu0 0.0
    %4292 = vmatpush1.msra.mxu0 0.0
    %4293 = vmatprep.subr.mxu0 0.0
    %4294 = vmatpush1.msra.mxu0 0.0
    %4295 = vmatprep.subr.mxu0 0.0
    %4296 = vmatpush1.msra.mxu0 0.0
    %4297 = vmatprep.subr.mxu0 0.0
    %4298 = vmatpush1.msra.mxu0 0.0
    %4299 = vmatprep.subr.mxu0 0.0
    %4300 = vmatpush1.msra.mxu0 0.0
    %4301 = vmatprep.mubr.f32.mxu0 0.0
    %4302 = vmatmul.mubr.f32.gmra.mrb[0].mxu0 %v4233
    %v4303 = vpop.f32.mrb[0].mxu0
    %v4304 = vadd.f32 0.0, %v4303
    %v4305 = vpop.f32.mrb[0].mxu0
    %4306 = vmatprep.mubr.f32.mxu0 0.0
    %4307 = vmatmul.mubr.f32.gmra.mrb[0].mxu0 %v4235
    %v4308 = vpop.f32.mrb[0].mxu0
    %v4309 = vadd.f32 0.0, %v4308
    %v4310 = vpop.f32.mrb[0].mxu0
    %4311 = vdwg.mxu0
    %4314 = vrot.lane.b32.xlu0 %v4213, 112
    %v4315 = vpop.permute.xlu0 %4314
    %4316 = vrot.lane.b32.xlu0 %v4214, 112
    %v4317 = vpop.permute.xlu0 %4316
    %v4318 = vsel %vm555, %v4315, 0
    %v4320 = vsel %vm555, %v4317, 0
    %4322 = vmatprep.subr.mxu0 0.0
    %4323 = vmatpush1.msra.mxu0 %v3829
    %4324 = vmatprep.subr.mxu0 0.0
    %4325 = vmatpush1.msra.mxu0 %v3830
    %4326 = vmatprep.subr.mxu0 0.0
    %4327 = vmatpush1.msra.mxu0 0.0
    %4328 = vmatprep.subr.mxu0 0.0
    %4329 = vmatpush1.msra.mxu0 0.0
    %4330 = vmatprep.subr.mxu0 0.0
    %4331 = vmatpush1.msra.mxu0 0.0
    %4332 = vmatprep.subr.mxu0 0.0
    %4333 = vmatpush1.msra.mxu0 0.0
    %4334 = vmatprep.subr.mxu0 0.0
    %4335 = vmatpush1.msra.mxu0 0.0
    %4336 = vmatprep.subr.mxu0 0.0
    %4337 = vmatpush1.msra.mxu0 0.0
    %4338 = vmatprep.subr.mxu0 0.0
    %4339 = vmatpush1.msra.mxu0 0.0
    %4340 = vmatprep.subr.mxu0 0.0
    %4341 = vmatpush1.msra.mxu0 0.0
    %4342 = vmatprep.subr.mxu0 0.0
    %4343 = vmatpush1.msra.mxu0 0.0
    %4344 = vmatprep.subr.mxu0 0.0
    %4345 = vmatpush1.msra.mxu0 0.0
    %4346 = vmatprep.subr.mxu0 0.0
    %4347 = vmatpush1.msra.mxu0 0.0
    %4348 = vmatprep.subr.mxu0 0.0
    %4349 = vmatpush1.msra.mxu0 0.0
    %4350 = vmatprep.subr.mxu0 0.0
    %4351 = vmatpush1.msra.mxu0 0.0
    %4352 = vmatprep.subr.mxu0 0.0
    %4353 = vmatpush1.msra.mxu0 0.0
    %4354 = vmatprep.subr.mxu0 0.0
    %4355 = vmatpush1.msra.mxu0 0.0
    %4356 = vmatprep.subr.mxu0 0.0
    %4357 = vmatpush1.msra.mxu0 0.0
    %4358 = vmatprep.subr.mxu0 0.0
    %4359 = vmatpush1.msra.mxu0 0.0
    %4360 = vmatprep.subr.mxu0 0.0
    %4361 = vmatpush1.msra.mxu0 0.0
    %4362 = vmatprep.subr.mxu0 0.0
    %4363 = vmatpush1.msra.mxu0 0.0
    %4364 = vmatprep.subr.mxu0 0.0
    %4365 = vmatpush1.msra.mxu0 0.0
    %4366 = vmatprep.subr.mxu0 0.0
    %4367 = vmatpush1.msra.mxu0 0.0
    %4368 = vmatprep.subr.mxu0 0.0
    %4369 = vmatpush1.msra.mxu0 0.0
    %4370 = vmatprep.subr.mxu0 0.0
    %4371 = vmatpush1.msra.mxu0 0.0
    %4372 = vmatprep.subr.mxu0 0.0
    %4373 = vmatpush1.msra.mxu0 0.0
    %4374 = vmatprep.subr.mxu0 0.0
    %4375 = vmatpush1.msra.mxu0 0.0
    %4376 = vmatprep.subr.mxu0 0.0
    %4377 = vmatpush1.msra.mxu0 0.0
    %4378 = vmatprep.subr.mxu0 0.0
    %4379 = vmatpush1.msra.mxu0 0.0
    %4380 = vmatprep.subr.mxu0 0.0
    %4381 = vmatpush1.msra.mxu0 0.0
    %4382 = vmatprep.subr.mxu0 0.0
    %4383 = vmatpush1.msra.mxu0 0.0
    %4384 = vmatprep.subr.mxu0 0.0
    %4385 = vmatpush1.msra.mxu0 0.0
    %4386 = vmatprep.mubr.f32.mxu0 0.0
    %4387 = vmatmul.mubr.f32.gmra.mrb[0].mxu0 %v4318
    %v4388 = vpop.f32.mrb[0].mxu0
    %v4389 = vadd.f32 0.0, %v4388
    %v4390 = vpop.f32.mrb[0].mxu0
    %4391 = vmatprep.mubr.f32.mxu0 0.0
    %4392 = vmatmul.mubr.f32.gmra.mrb[0].mxu0 %v4320
    %v4393 = vpop.f32.mrb[0].mxu0
    %v4394 = vadd.f32 0.0, %v4393
    %v4395 = vpop.f32.mrb[0].mxu0
    %4396 = vdwg.mxu0
    %4399 = vrot.lane.b32.xlu0 %v4215, 112
    %v4400 = vpop.permute.xlu0 %4399
    %4401 = vrot.lane.b32.xlu0 %v4216, 112
    %v4402 = vpop.permute.xlu0 %4401
    %v4403 = vsel %vm555, %v4400, 0
    %v4405 = vsel %vm555, %v4402, 0
    %4407 = vmatprep.subr.mxu0 0.0
    %4408 = vmatpush1.msra.mxu0 %v3831
    %4409 = vmatprep.subr.mxu0 0.0
    %4410 = vmatpush1.msra.mxu0 %v3832
    %4411 = vmatprep.subr.mxu0 0.0
    %4412 = vmatpush1.msra.mxu0 0.0
    %4413 = vmatprep.subr.mxu0 0.0
    %4414 = vmatpush1.msra.mxu0 0.0
    %4415 = vmatprep.subr.mxu0 0.0
    %4416 = vmatpush1.msra.mxu0 0.0
    %4417 = vmatprep.subr.mxu0 0.0
    %4418 = vmatpush1.msra.mxu0 0.0
    %4419 = vmatprep.subr.mxu0 0.0
    %4420 = vmatpush1.msra.mxu0 0.0
    %4421 = vmatprep.subr.mxu0 0.0
    %4422 = vmatpush1.msra.mxu0 0.0
    %4423 = vmatprep.subr.mxu0 0.0
    %4424 = vmatpush1.msra.mxu0 0.0
    %4425 = vmatprep.subr.mxu0 0.0
    %4426 = vmatpush1.msra.mxu0 0.0
    %4427 = vmatprep.subr.mxu0 0.0
    %4428 = vmatpush1.msra.mxu0 0.0
    %4429 = vmatprep.subr.mxu0 0.0
    %4430 = vmatpush1.msra.mxu0 0.0
    %4431 = vmatprep.subr.mxu0 0.0
    %4432 = vmatpush1.msra.mxu0 0.0
    %4433 = vmatprep.subr.mxu0 0.0
    %4434 = vmatpush1.msra.mxu0 0.0
    %4435 = vmatprep.subr.mxu0 0.0
    %4436 = vmatpush1.msra.mxu0 0.0
    %4437 = vmatprep.subr.mxu0 0.0
    %4438 = vmatpush1.msra.mxu0 0.0
    %4439 = vmatprep.subr.mxu0 0.0
    %4440 = vmatpush1.msra.mxu0 0.0
    %4441 = vmatprep.subr.mxu0 0.0
    %4442 = vmatpush1.msra.mxu0 0.0
    %4443 = vmatprep.subr.mxu0 0.0
    %4444 = vmatpush1.msra.mxu0 0.0
    %4445 = vmatprep.subr.mxu0 0.0
    %4446 = vmatpush1.msra.mxu0 0.0
    %4447 = vmatprep.subr.mxu0 0.0
    %4448 = vmatpush1.msra.mxu0 0.0
    %4449 = vmatprep.subr.mxu0 0.0
    %4450 = vmatpush1.msra.mxu0 0.0
    %4451 = vmatprep.subr.mxu0 0.0
    %4452 = vmatpush1.msra.mxu0 0.0
    %4453 = vmatprep.subr.mxu0 0.0
    %4454 = vmatpush1.msra.mxu0 0.0
    %4455 = vmatprep.subr.mxu0 0.0
    %4456 = vmatpush1.msra.mxu0 0.0
    %4457 = vmatprep.subr.mxu0 0.0
    %4458 = vmatpush1.msra.mxu0 0.0
    %4459 = vmatprep.subr.mxu0 0.0
    %4460 = vmatpush1.msra.mxu0 0.0
    %4461 = vmatprep.subr.mxu0 0.0
    %4462 = vmatpush1.msra.mxu0 0.0
    %4463 = vmatprep.subr.mxu0 0.0
    %4464 = vmatpush1.msra.mxu0 0.0
    %4465 = vmatprep.subr.mxu0 0.0
    %4466 = vmatpush1.msra.mxu0 0.0
    %4467 = vmatprep.subr.mxu0 0.0
    %4468 = vmatpush1.msra.mxu0 0.0
    %4469 = vmatprep.subr.mxu0 0.0
    %4470 = vmatpush1.msra.mxu0 0.0
    %4471 = vmatprep.mubr.f32.mxu0 0.0
    %4472 = vmatmul.mubr.f32.gmra.mrb[0].mxu0 %v4403
    %v4473 = vpop.f32.mrb[0].mxu0
    %v4474 = vadd.f32 0.0, %v4473
    %v4475 = vpop.f32.mrb[0].mxu0
    %4476 = vmatprep.mubr.f32.mxu0 0.0
    %4477 = vmatmul.mubr.f32.gmra.mrb[0].mxu0 %v4405
    %v4478 = vpop.f32.mrb[0].mxu0
    %v4479 = vadd.f32 0.0, %v4478
    %v4480 = vpop.f32.mrb[0].mxu0
    %4481 = vdwg.mxu0
    %4484 = vrot.lane.b32.xlu0 %v4217, 112
    %v4485 = vpop.permute.xlu0 %4484
    %4486 = vrot.lane.b32.xlu0 %v4218, 112
    %v4487 = vpop.permute.xlu0 %4486
    %v4488 = vsel %vm555, %v4485, 0
    %v4490 = vsel %vm555, %v4487, 0
    %4492 = vmatprep.subr.mxu0 0.0
    %4493 = vmatpush1.msra.mxu0 %v3833
    %4494 = vmatprep.subr.mxu0 0.0
    %4495 = vmatpush1.msra.mxu0 %v3834
    %4496 = vmatprep.subr.mxu0 0.0
    %4497 = vmatpush1.msra.mxu0 0.0
    %4498 = vmatprep.subr.mxu0 0.0
    %4499 = vmatpush1.msra.mxu0 0.0
    %4500 = vmatprep.subr.mxu0 0.0
    %4501 = vmatpush1.msra.mxu0 0.0
    %4502 = vmatprep.subr.mxu0 0.0
    %4503 = vmatpush1.msra.mxu0 0.0
    %4504 = vmatprep.subr.mxu0 0.0
    %4505 = vmatpush1.msra.mxu0 0.0
    %4506 = vmatprep.subr.mxu0 0.0
    %4507 = vmatpush1.msra.mxu0 0.0
    %4508 = vmatprep.subr.mxu0 0.0
    %4509 = vmatpush1.msra.mxu0 0.0
    %4510 = vmatprep.subr.mxu0 0.0
    %4511 = vmatpush1.msra.mxu0 0.0
    %4512 = vmatprep.subr.mxu0 0.0
    %4513 = vmatpush1.msra.mxu0 0.0
    %4514 = vmatprep.subr.mxu0 0.0
    %4515 = vmatpush1.msra.mxu0 0.0
    %4516 = vmatprep.subr.mxu0 0.0
    %4517 = vmatpush1.msra.mxu0 0.0
    %4518 = vmatprep.subr.mxu0 0.0
    %4519 = vmatpush1.msra.mxu0 0.0
    %4520 = vmatprep.subr.mxu0 0.0
    %4521 = vmatpush1.msra.mxu0 0.0
    %4522 = vmatprep.subr.mxu0 0.0
    %4523 = vmatpush1.msra.mxu0 0.0
    %4524 = vmatprep.subr.mxu0 0.0
    %4525 = vmatpush1.msra.mxu0 0.0
    %4526 = vmatprep.subr.mxu0 0.0
    %4527 = vmatpush1.msra.mxu0 0.0
    %4528 = vmatprep.subr.mxu0 0.0
    %4529 = vmatpush1.msra.mxu0 0.0
    %4530 = vmatprep.subr.mxu0 0.0
    %4531 = vmatpush1.msra.mxu0 0.0
    %4532 = vmatprep.subr.mxu0 0.0
    %4533 = vmatpush1.msra.mxu0 0.0
    %4534 = vmatprep.subr.mxu0 0.0
    %4535 = vmatpush1.msra.mxu0 0.0
    %4536 = vmatprep.subr.mxu0 0.0
    %4537 = vmatpush1.msra.mxu0 0.0
    %4538 = vmatprep.subr.mxu0 0.0
    %4539 = vmatpush1.msra.mxu0 0.0
    %4540 = vmatprep.subr.mxu0 0.0
    %4541 = vmatpush1.msra.mxu0 0.0
    %4542 = vmatprep.subr.mxu0 0.0
    %4543 = vmatpush1.msra.mxu0 0.0
    %4544 = vmatprep.subr.mxu0 0.0
    %4545 = vmatpush1.msra.mxu0 0.0
    %4546 = vmatprep.subr.mxu0 0.0
    %4547 = vmatpush1.msra.mxu0 0.0
    %4548 = vmatprep.subr.mxu0 0.0
    %4549 = vmatpush1.msra.mxu0 0.0
    %4550 = vmatprep.subr.mxu0 0.0
    %4551 = vmatpush1.msra.mxu0 0.0
    %4552 = vmatprep.subr.mxu0 0.0
    %4553 = vmatpush1.msra.mxu0 0.0
    %4554 = vmatprep.subr.mxu0 0.0
    %4555 = vmatpush1.msra.mxu0 0.0
    %4556 = vmatprep.mubr.f32.mxu0 0.0
    %4557 = vmatmul.mubr.f32.gmra.mrb[0].mxu0 %v4488
    %v4558 = vpop.f32.mrb[0].mxu0
    %v4559 = vadd.f32 0.0, %v4558
    %v4560 = vpop.f32.mrb[0].mxu0
    %4561 = vmatprep.mubr.f32.mxu0 0.0
    %4562 = vmatmul.mubr.f32.gmra.mrb[0].mxu0 %v4490
    %v4563 = vpop.f32.mrb[0].mxu0
    %v4564 = vadd.f32 0.0, %v4563
    %v4565 = vpop.f32.mrb[0].mxu0
    %4566 = vdwg.mxu0
    %4569 = vrot.lane.b32.xlu0 %v4219, 112
    %v4570 = vpop.permute.xlu0 %4569
    %4571 = vrot.lane.b32.xlu0 %v4220, 112
    %v4572 = vpop.permute.xlu0 %4571
    %v4573 = vsel %vm555, %v4570, 0
    %v4575 = vsel %vm555, %v4572, 0
    %4577 = vmatprep.subr.mxu0 0.0
    %4578 = vmatpush1.msra.mxu0 %v3835
    %4579 = vmatprep.subr.mxu0 0.0
    %4580 = vmatpush1.msra.mxu0 %v3836
    %4581 = vmatprep.subr.mxu0 0.0
    %4582 = vmatpush1.msra.mxu0 0.0
    %4583 = vmatprep.subr.mxu0 0.0
    %4584 = vmatpush1.msra.mxu0 0.0
    %4585 = vmatprep.subr.mxu0 0.0
    %4586 = vmatpush1.msra.mxu0 0.0
    %4587 = vmatprep.subr.mxu0 0.0
    %4588 = vmatpush1.msra.mxu0 0.0
    %4589 = vmatprep.subr.mxu0 0.0
    %4590 = vmatpush1.msra.mxu0 0.0
    %4591 = vmatprep.subr.mxu0 0.0
    %4592 = vmatpush1.msra.mxu0 0.0
    %4593 = vmatprep.subr.mxu0 0.0
    %4594 = vmatpush1.msra.mxu0 0.0
    %4595 = vmatprep.subr.mxu0 0.0
    %4596 = vmatpush1.msra.mxu0 0.0
    %4597 = vmatprep.subr.mxu0 0.0
    %4598 = vmatpush1.msra.mxu0 0.0
    %4599 = vmatprep.subr.mxu0 0.0
    %4600 = vmatpush1.msra.mxu0 0.0
    %4601 = vmatprep.subr.mxu0 0.0
    %4602 = vmatpush1.msra.mxu0 0.0
    %4603 = vmatprep.subr.mxu0 0.0
    %4604 = vmatpush1.msra.mxu0 0.0
    %4605 = vmatprep.subr.mxu0 0.0
    %4606 = vmatpush1.msra.mxu0 0.0
    %4607 = vmatprep.subr.mxu0 0.0
    %4608 = vmatpush1.msra.mxu0 0.0
    %4609 = vmatprep.subr.mxu0 0.0
    %4610 = vmatpush1.msra.mxu0 0.0
    %4611 = vmatprep.subr.mxu0 0.0
    %4612 = vmatpush1.msra.mxu0 0.0
    %4613 = vmatprep.subr.mxu0 0.0
    %4614 = vmatpush1.msra.mxu0 0.0
    %4615 = vmatprep.subr.mxu0 0.0
    %4616 = vmatpush1.msra.mxu0 0.0
    %4617 = vmatprep.subr.mxu0 0.0
    %4618 = vmatpush1.msra.mxu0 0.0
    %4619 = vmatprep.subr.mxu0 0.0
    %4620 = vmatpush1.msra.mxu0 0.0
    %4621 = vmatprep.subr.mxu0 0.0
    %4622 = vmatpush1.msra.mxu0 0.0
    %4623 = vmatprep.subr.mxu0 0.0
    %4624 = vmatpush1.msra.mxu0 0.0
    %4625 = vmatprep.subr.mxu0 0.0
    %4626 = vmatpush1.msra.mxu0 0.0
    %4627 = vmatprep.subr.mxu0 0.0
    %4628 = vmatpush1.msra.mxu0 0.0
    %4629 = vmatprep.subr.mxu0 0.0
    %4630 = vmatpush1.msra.mxu0 0.0
    %4631 = vmatprep.subr.mxu0 0.0
    %4632 = vmatpush1.msra.mxu0 0.0
    %4633 = vmatprep.subr.mxu0 0.0
    %4634 = vmatpush1.msra.mxu0 0.0
    %4635 = vmatprep.subr.mxu0 0.0
    %4636 = vmatpush1.msra.mxu0 0.0
    %4637 = vmatprep.subr.mxu0 0.0
    %4638 = vmatpush1.msra.mxu0 0.0
    %4639 = vmatprep.subr.mxu0 0.0
    %4640 = vmatpush1.msra.mxu0 0.0
    %4641 = vmatprep.mubr.f32.mxu0 0.0
    %4642 = vmatmul.mubr.f32.gmra.mrb[0].mxu0 %v4573
    %v4643 = vpop.f32.mrb[0].mxu0
    %v4644 = vadd.f32 0.0, %v4643
    %v4645 = vpop.f32.mrb[0].mxu0
    %4646 = vmatprep.mubr.f32.mxu0 0.0
    %4647 = vmatmul.mubr.f32.gmra.mrb[0].mxu0 %v4575
    %v4648 = vpop.f32.mrb[0].mxu0
    %v4649 = vadd.f32 0.0, %v4648
    %v4650 = vpop.f32.mrb[0].mxu0
    %4651 = vdwg.mxu0
    %4654 = vrot.lane.b32.xlu0 %v4221, 112
    %v4655 = vpop.permute.xlu0 %4654
    %4656 = vrot.lane.b32.xlu0 %v4222, 112
    %v4657 = vpop.permute.xlu0 %4656
    %v4658 = vsel %vm555, %v4655, 0
    %v4660 = vsel %vm555, %v4657, 0
    %4662 = vmatprep.subr.mxu0 0.0
    %4663 = vmatpush1.msra.mxu0 %v3837
    %4664 = vmatprep.subr.mxu0 0.0
    %4665 = vmatpush1.msra.mxu0 %v3838
    %4666 = vmatprep.subr.mxu0 0.0
    %4667 = vmatpush1.msra.mxu0 0.0
    %4668 = vmatprep.subr.mxu0 0.0
    %4669 = vmatpush1.msra.mxu0 0.0
    %4670 = vmatprep.subr.mxu0 0.0
    %4671 = vmatpush1.msra.mxu0 0.0
    %4672 = vmatprep.subr.mxu0 0.0
    %4673 = vmatpush1.msra.mxu0 0.0
    %4674 = vmatprep.subr.mxu0 0.0
    %4675 = vmatpush1.msra.mxu0 0.0
    %4676 = vmatprep.subr.mxu0 0.0
    %4677 = vmatpush1.msra.mxu0 0.0
    %4678 = vmatprep.subr.mxu0 0.0
    %4679 = vmatpush1.msra.mxu0 0.0
    %4680 = vmatprep.subr.mxu0 0.0
    %4681 = vmatpush1.msra.mxu0 0.0
    %4682 = vmatprep.subr.mxu0 0.0
    %4683 = vmatpush1.msra.mxu0 0.0
    %4684 = vmatprep.subr.mxu0 0.0
    %4685 = vmatpush1.msra.mxu0 0.0
    %4686 = vmatprep.subr.mxu0 0.0
    %4687 = vmatpush1.msra.mxu0 0.0
    %4688 = vmatprep.subr.mxu0 0.0
    %4689 = vmatpush1.msra.mxu0 0.0
    %4690 = vmatprep.subr.mxu0 0.0
    %4691 = vmatpush1.msra.mxu0 0.0
    %4692 = vmatprep.subr.mxu0 0.0
    %4693 = vmatpush1.msra.mxu0 0.0
    %4694 = vmatprep.subr.mxu0 0.0
    %4695 = vmatpush1.msra.mxu0 0.0
    %4696 = vmatprep.subr.mxu0 0.0
    %4697 = vmatpush1.msra.mxu0 0.0
    %4698 = vmatprep.subr.mxu0 0.0
    %4699 = vmatpush1.msra.mxu0 0.0
    %4700 = vmatprep.subr.mxu0 0.0
    %4701 = vmatpush1.msra.mxu0 0.0
    %4702 = vmatprep.subr.mxu0 0.0
    %4703 = vmatpush1.msra.mxu0 0.0
    %4704 = vmatprep.subr.mxu0 0.0
    %4705 = vmatpush1.msra.mxu0 0.0
    %4706 = vmatprep.subr.mxu0 0.0
    %4707 = vmatpush1.msra.mxu0 0.0
    %4708 = vmatprep.subr.mxu0 0.0
    %4709 = vmatpush1.msra.mxu0 0.0
    %4710 = vmatprep.subr.mxu0 0.0
    %4711 = vmatpush1.msra.mxu0 0.0
    %4712 = vmatprep.subr.mxu0 0.0
    %4713 = vmatpush1.msra.mxu0 0.0
    %4714 = vmatprep.subr.mxu0 0.0
    %4715 = vmatpush1.msra.mxu0 0.0
    %4716 = vmatprep.subr.mxu0 0.0
    %4717 = vmatpush1.msra.mxu0 0.0
    %4718 = vmatprep.subr.mxu0 0.0
    %4719 = vmatpush1.msra.mxu0 0.0
    %4720 = vmatprep.subr.mxu0 0.0
    %4721 = vmatpush1.msra.mxu0 0.0
    %4722 = vmatprep.subr.mxu0 0.0
    %4723 = vmatpush1.msra.mxu0 0.0
    %4724 = vmatprep.subr.mxu0 0.0
    %4725 = vmatpush1.msra.mxu0 0.0
    %4726 = vmatprep.mubr.f32.mxu0 0.0
    %4727 = vmatmul.mubr.f32.gmra.mrb[0].mxu0 %v4658
    %v4728 = vpop.f32.mrb[0].mxu0
    %v4729 = vadd.f32 0.0, %v4728
    %v4730 = vpop.f32.mrb[0].mxu0
    %4731 = vmatprep.mubr.f32.mxu0 0.0
    %4732 = vmatmul.mubr.f32.gmra.mrb[0].mxu0 %v4660
    %v4733 = vpop.f32.mrb[0].mxu0
    %v4734 = vadd.f32 0.0, %v4733
    %v4735 = vpop.f32.mrb[0].mxu0
    %4736 = vdwg.mxu0
    %4739 = vrot.lane.b32.xlu0 %v4223, 112
    %v4740 = vpop.permute.xlu0 %4739
    %4741 = vrot.lane.b32.xlu0 %v4224, 112
    %v4742 = vpop.permute.xlu0 %4741
    %v4743 = vsel %vm555, %v4740, 0
    %v4745 = vsel %vm555, %v4742, 0
    %4747 = vmatprep.subr.mxu0 0.0
    %4748 = vmatpush1.msra.mxu0 %v3839
    %4749 = vmatprep.subr.mxu0 0.0
    %4750 = vmatpush1.msra.mxu0 %v3840
    %4751 = vmatprep.subr.mxu0 0.0
    %4752 = vmatpush1.msra.mxu0 0.0
    %4753 = vmatprep.subr.mxu0 0.0
    %4754 = vmatpush1.msra.mxu0 0.0
    %4755 = vmatprep.subr.mxu0 0.0
    %4756 = vmatpush1.msra.mxu0 0.0
    %4757 = vmatprep.subr.mxu0 0.0
    %4758 = vmatpush1.msra.mxu0 0.0
    %4759 = vmatprep.subr.mxu0 0.0
    %4760 = vmatpush1.msra.mxu0 0.0
    %4761 = vmatprep.subr.mxu0 0.0
    %4762 = vmatpush1.msra.mxu0 0.0
    %4763 = vmatprep.subr.mxu0 0.0
    %4764 = vmatpush1.msra.mxu0 0.0
    %4765 = vmatprep.subr.mxu0 0.0
    %4766 = vmatpush1.msra.mxu0 0.0
    %4767 = vmatprep.subr.mxu0 0.0
    %4768 = vmatpush1.msra.mxu0 0.0
    %4769 = vmatprep.subr.mxu0 0.0
    %4770 = vmatpush1.msra.mxu0 0.0
    %4771 = vmatprep.subr.mxu0 0.0
    %4772 = vmatpush1.msra.mxu0 0.0
    %4773 = vmatprep.subr.mxu0 0.0
    %4774 = vmatpush1.msra.mxu0 0.0
    %4775 = vmatprep.subr.mxu0 0.0
    %4776 = vmatpush1.msra.mxu0 0.0
    %4777 = vmatprep.subr.mxu0 0.0
    %4778 = vmatpush1.msra.mxu0 0.0
    %4779 = vmatprep.subr.mxu0 0.0
    %4780 = vmatpush1.msra.mxu0 0.0
    %4781 = vmatprep.subr.mxu0 0.0
    %4782 = vmatpush1.msra.mxu0 0.0
    %4783 = vmatprep.subr.mxu0 0.0
    %4784 = vmatpush1.msra.mxu0 0.0
    %4785 = vmatprep.subr.mxu0 0.0
    %4786 = vmatpush1.msra.mxu0 0.0
    %4787 = vmatprep.subr.mxu0 0.0
    %4788 = vmatpush1.msra.mxu0 0.0
    %4789 = vmatprep.subr.mxu0 0.0
    %4790 = vmatpush1.msra.mxu0 0.0
    %4791 = vmatprep.subr.mxu0 0.0
    %4792 = vmatpush1.msra.mxu0 0.0
    %4793 = vmatprep.subr.mxu0 0.0
    %4794 = vmatpush1.msra.mxu0 0.0
    %4795 = vmatprep.subr.mxu0 0.0
    %4796 = vmatpush1.msra.mxu0 0.0
    %4797 = vmatprep.subr.mxu0 0.0
    %4798 = vmatpush1.msra.mxu0 0.0
    %4799 = vmatprep.subr.mxu0 0.0
    %4800 = vmatpush1.msra.mxu0 0.0
    %4801 = vmatprep.subr.mxu0 0.0
    %4802 = vmatpush1.msra.mxu0 0.0
    %4803 = vmatprep.subr.mxu0 0.0
    %4804 = vmatpush1.msra.mxu0 0.0
    %4805 = vmatprep.subr.mxu0 0.0
    %4806 = vmatpush1.msra.mxu0 0.0
    %4807 = vmatprep.subr.mxu0 0.0
    %4808 = vmatpush1.msra.mxu0 0.0
    %4809 = vmatprep.subr.mxu0 0.0
    %4810 = vmatpush1.msra.mxu0 0.0
    %4811 = vmatprep.mubr.f32.mxu0 0.0
    %4812 = vmatmul.mubr.f32.gmra.mrb[0].mxu0 %v4743
    %v4813 = vpop.f32.mrb[0].mxu0
    %v4814 = vadd.f32 0.0, %v4813
    %v4815 = vpop.f32.mrb[0].mxu0
    %4816 = vmatprep.mubr.f32.mxu0 0.0
    %4817 = vmatmul.mubr.f32.gmra.mrb[0].mxu0 %v4745
    %v4818 = vpop.f32.mrb[0].mxu0
    %v4819 = vadd.f32 0.0, %v4818
    %v4820 = vpop.f32.mrb[0].mxu0
    %4821 = vdwg.mxu0
    %4824 = vrot.lane.b32.xlu0 %v4225, 112
    %v4825 = vpop.permute.xlu0 %4824
    %4826 = vrot.lane.b32.xlu0 %v4226, 112
    %v4827 = vpop.permute.xlu0 %4826
    %v4828 = vsel %vm555, %v4825, 0
    %v4830 = vsel %vm555, %v4827, 0
    %4832 = vmatprep.subr.mxu0 0.0
    %4833 = vmatpush1.msra.mxu0 %v3841
    %4834 = vmatprep.subr.mxu0 0.0
    %4835 = vmatpush1.msra.mxu0 %v3842
    %4836 = vmatprep.subr.mxu0 0.0
    %4837 = vmatpush1.msra.mxu0 0.0
    %4838 = vmatprep.subr.mxu0 0.0
    %4839 = vmatpush1.msra.mxu0 0.0
    %4840 = vmatprep.subr.mxu0 0.0
    %4841 = vmatpush1.msra.mxu0 0.0
    %4842 = vmatprep.subr.mxu0 0.0
    %4843 = vmatpush1.msra.mxu0 0.0
    %4844 = vmatprep.subr.mxu0 0.0
    %4845 = vmatpush1.msra.mxu0 0.0
    %4846 = vmatprep.subr.mxu0 0.0
    %4847 = vmatpush1.msra.mxu0 0.0
    %4848 = vmatprep.subr.mxu0 0.0
    %4849 = vmatpush1.msra.mxu0 0.0
    %4850 = vmatprep.subr.mxu0 0.0
    %4851 = vmatpush1.msra.mxu0 0.0
    %4852 = vmatprep.subr.mxu0 0.0
    %4853 = vmatpush1.msra.mxu0 0.0
    %4854 = vmatprep.subr.mxu0 0.0
    %4855 = vmatpush1.msra.mxu0 0.0
    %4856 = vmatprep.subr.mxu0 0.0
    %4857 = vmatpush1.msra.mxu0 0.0
    %4858 = vmatprep.subr.mxu0 0.0
    %4859 = vmatpush1.msra.mxu0 0.0
    %4860 = vmatprep.subr.mxu0 0.0
    %4861 = vmatpush1.msra.mxu0 0.0
    %4862 = vmatprep.subr.mxu0 0.0
    %4863 = vmatpush1.msra.mxu0 0.0
    %4864 = vmatprep.subr.mxu0 0.0
    %4865 = vmatpush1.msra.mxu0 0.0
    %4866 = vmatprep.subr.mxu0 0.0
    %4867 = vmatpush1.msra.mxu0 0.0
    %4868 = vmatprep.subr.mxu0 0.0
    %4869 = vmatpush1.msra.mxu0 0.0
    %4870 = vmatprep.subr.mxu0 0.0
    %4871 = vmatpush1.msra.mxu0 0.0
    %4872 = vmatprep.subr.mxu0 0.0
    %4873 = vmatpush1.msra.mxu0 0.0
    %4874 = vmatprep.subr.mxu0 0.0
    %4875 = vmatpush1.msra.mxu0 0.0
    %4876 = vmatprep.subr.mxu0 0.0
    %4877 = vmatpush1.msra.mxu0 0.0
    %4878 = vmatprep.subr.mxu0 0.0
    %4879 = vmatpush1.msra.mxu0 0.0
    %4880 = vmatprep.subr.mxu0 0.0
    %4881 = vmatpush1.msra.mxu0 0.0
    %4882 = vmatprep.subr.mxu0 0.0
    %4883 = vmatpush1.msra.mxu0 0.0
    %4884 = vmatprep.subr.mxu0 0.0
    %4885 = vmatpush1.msra.mxu0 0.0
    %4886 = vmatprep.subr.mxu0 0.0
    %4887 = vmatpush1.msra.mxu0 0.0
    %4888 = vmatprep.subr.mxu0 0.0
    %4889 = vmatpush1.msra.mxu0 0.0
    %4890 = vmatprep.subr.mxu0 0.0
    %4891 = vmatpush1.msra.mxu0 0.0
    %4892 = vmatprep.subr.mxu0 0.0
    %4893 = vmatpush1.msra.mxu0 0.0
    %4894 = vmatprep.subr.mxu0 0.0
    %4895 = vmatpush1.msra.mxu0 0.0
    %4896 = vmatprep.mubr.f32.mxu0 0.0
    %4897 = vmatmul.mubr.f32.gmra.mrb[0].mxu0 %v4828
    %v4898 = vpop.f32.mrb[0].mxu0
    %v4899 = vadd.f32 0.0, %v4898
    %v4900 = vpop.f32.mrb[0].mxu0
    %4901 = vmatprep.mubr.f32.mxu0 0.0
    %4902 = vmatmul.mubr.f32.gmra.mrb[0].mxu0 %v4830
    %v4903 = vpop.f32.mrb[0].mxu0
    %v4904 = vadd.f32 0.0, %v4903
    %v4905 = vpop.f32.mrb[0].mxu0
    %4906 = vdwg.mxu0
    %v4907 = vsel %vm87, %v4304, 0.0
    %v4908 = vsel %vm87, %v4389, 0.0
    %v4909 = vadd.f32 %v4907, %v4908
    %v4910 = vsel %vm87, %v4474, 0.0
    %v4911 = vadd.f32 %v4909, %v4910
    %v4912 = vsel %vm87, %v4559, 0.0
    %v4913 = vadd.f32 %v4911, %v4912
    %v4914 = vsel %vm87, %v4644, 0.0
    %v4915 = vadd.f32 %v4913, %v4914
    %v4916 = vsel %vm87, %v4729, 0.0
    %v4917 = vadd.f32 %v4915, %v4916
    %v4918 = vsel %vm87, %v4814, 0.0
    %v4919 = vadd.f32 %v4917, %v4918
    %v4920 = vsel %vm87, %v4899, 0.0
    %v4921 = vadd.f32 %v4919, %v4920
    %v4922 = vsel %vm87, %v4309, 0.0
    %v4923 = vsel %vm87, %v4394, 0.0
    %v4924 = vadd.f32 %v4922, %v4923
    %v4925 = vsel %vm87, %v4479, 0.0
    %v4926 = vadd.f32 %v4924, %v4925
    %v4927 = vsel %vm87, %v4564, 0.0
    %v4928 = vadd.f32 %v4926, %v4927
    %v4929 = vsel %vm87, %v4649, 0.0
    %v4930 = vadd.f32 %v4928, %v4929
    %v4931 = vsel %vm87, %v4734, 0.0
    %v4932 = vadd.f32 %v4930, %v4931
    %v4933 = vsel %vm87, %v4819, 0.0
    %v4934 = vadd.f32 %v4932, %v4933
    %v4935 = vsel %vm87, %v4904, 0.0
    %v4936 = vadd.f32 %v4934, %v4935
    %v4938 = vlaneseq
    %v4939 = vshrl.u32 %v4938, 7
    %v4940 = vsub.s32 0, %v4939
    %v4941 = vrot.slane %v2553, %v4940
    %v4943 = vadd.f32 %v3811, %v4941
    %v4944 = vadd.f32 %v3826, %v4941
    %v4945 = vadd.f32 %v4921, %v4941
    %v4946 = vadd.f32 %v4936, %v4941
    %v4947 = vmax.f32 %v4943, 0.0
    %v4948 = vmax.f32 %v4944, 0.0
    %v4949 = vmax.f32 %v4945, 0.0
    %v4950 = vmax.f32 %v4946, 0.0
    %4951 = vst.msk [vmem:[#allocation8] sm:$0xff] %vm87, %v4947
    %4952 = vst.msk [vmem:[#allocation8 + $0x8] sm:$0xff] %vm87, %v4948
    %4953 = vst.msk [vmem:[#allocation8 + $0x10] sm:$0xff] %vm87, %v4949
    %4954 = vst.msk [vmem:[#allocation8 + $0x18] sm:$0xff] %vm87, %v4950
    // Predicated region
    $region34: #{tpu_custom_call.1} parent=1 // pred_check
      _
    $region35: #{tpu_custom_call.1} parent=1 // pred_check_branch
      %4956 = sbr.rel (0) target = $region37
    $region36: #{tpu_custom_call.1} parent=1 // pred_region
      %s4958 = ssub.s32 512, 512
      %4959 = vsyncadd [#allocation4], %s4958
      %s4960 = sshll.u32 [#allocation8], 4
      %s4961 = int_to_ptr.vmem [resolvable:$true] %s4960
      %4966 = dma.vmem_to_hbm [thread:$0]  %s4961, 512, %s5, [#allocation4], 128, 128, 8
    $region37: #{tpu_custom_call.1} parent=1 // pred_fallthru
      _
    // Predicated region
    $region38: #{tpu_custom_call.1} parent=1 // pred_check
      _
    $region39: #{tpu_custom_call.1} parent=1 // pred_check_branch
      %4968 = sbr.rel (0) target = $region41
    $region40: #{tpu_custom_call.1} parent=1 // pred_region
      %4969 = dma.done [#allocation4], 512
    $region41: #{tpu_custom_call.1} parent=1 // pred_fallthru
      _
    %4970 = vsyncpa [#allocation3], 1
    %4971 = vsyncpa [#allocation6], 1
    %4972 = vsyncpa [#allocation4], 1

</llo_original>
